<compile_context>
chip_gen: v7x
topology: tpu7x:2x2x1
jax: 0.10.0
libtpu: 0.0.40
codegen_flags: <defaults>
</compile_context>

<pallas_src>
import functools

import jax
import jax.numpy as jnp
from jax.experimental import pallas as pl
from jax.experimental.pallas import tpu as pltpu


# ---------------------------------------------------------------------------
# Pallas kernel: point-MLP (+running max over points) and, on the last N-tile,
# the batched FC head. One B-tile of TB batch elements per grid step.
# ---------------------------------------------------------------------------
def stn_kernel(x_ref,
               w1, b1, w2, b2, w3, b3,          # conv1d(k=1) weights (BN folded)
               fw1, fb1, fw2, fb2, fw3, fb3,    # fc weights (BN folded, identity in fb3)
               o_ref,                           # (TB, 1, K) f32 output
               g_ref,                           # (TB, 1024) f32 running max scratch
               *, n_points):
    n = pl.program_id(1)
    n_last = pl.num_programs(1) - 1
    tb, c_in, tn = x_ref.shape

    @pl.when(n == 0)
    def _():
        g_ref[...] = jnp.full(g_ref.shape, -jnp.inf, dtype=jnp.float32)

    # ---- NCW block -> (rows, C_in): tiny in-kernel transpose (XLU) instead of a
    # full HBM transpose+cast pass in the wrapper. -----------------------------
    x = x_ref[...]                                              # (TB, C_in, TN) f32
    h = jnp.transpose(x, (0, 2, 1)).reshape(tb * tn, c_in)      # (M, C_in) f32

    # ---- point MLP: all TB*TN points share one MXU M dimension ---------------
    # layer 1: K = C_in is tiny -> keep f32 (negligible FLOPs, better accuracy)
    h = jnp.maximum(
        jnp.dot(h, w1[...], preferred_element_type=jnp.float32) + b1[...], 0.0)   # (M, 64)
    h = jnp.maximum(
        jnp.dot(h.astype(jnp.bfloat16), w2[...],
                preferred_element_type=jnp.float32) + b2[...], 0.0)                # (M, 128)
    # layer 3: bias + ReLU deferred past the max (exactly equivalent: a per-channel
    # constant add commutes with max, ReLU is monotone) -> far less VPU work here.
    s = jnp.dot(h.astype(jnp.bfloat16), w3[...],
                preferred_element_type=jnp.float32)                                # (M, 1024)
    s = s.reshape(tb, tn, 1024)

    # ---- mask the N tail of a partial last point-tile before the running max --
    if n_points % tn != 0:          # static: only emitted when N % TN != 0
        pt = n * tn + jax.lax.broadcasted_iota(jnp.int32, (1, tn, 1), 1)
        s = jnp.where(pt < n_points, s, -jnp.inf)

    # ---- running max over this tile's points, segmented per batch -------------
    g_ref[...] = jnp.maximum(g_ref[...], jnp.max(s, axis=1))                        # (TB, 1024)

    # ---- FC head: once per B-tile, all TB rows batched into the MXU -----------
    @pl.when(n == n_last)
    def _():
        g = jnp.maximum(g_ref[...] + b3[...], 0.0)              # deferred bias + ReLU
        g = g.astype(jnp.bfloat16)
        f = jnp.maximum(
            jnp.dot(g, fw1[...], preferred_element_type=jnp.float32) + fb1[...], 0.0)   # (TB, 512)
        f = jnp.maximum(
            jnp.dot(f.astype(jnp.bfloat16), fw2[...],
                    preferred_element_type=jnp.float32) + fb2[...], 0.0)                # (TB, 256)
        out = jnp.dot(f.astype(jnp.bfloat16), fw3[...],
                      preferred_element_type=jnp.float32) + fb3[...]                    # (TB, K)
        o_ref[...] = out.reshape(o_ref.shape)


# ---------------------------------------------------------------------------
# Wrapper
# ---------------------------------------------------------------------------
def stn_forward(x_ncw, params):
    x_ncw = x_ncw.astype(jnp.float32)
    B, c_in, N = x_ncw.shape
    out_dim = params["out_dim"]
    K = out_dim * out_dim

    # ----- generation-aware tile targets --------------------------------------
    try:
        vmem_cap = int(pltpu.get_tpu_info().vmem_capacity_bytes)
    except Exception:
        vmem_cap = 0
    big_vmem = vmem_cap >= (100 << 20)      # v5e/v6e: 128 MiB VMEM; v7x: 64 MiB
    m_target = 4096 if big_vmem else 2048   # MXU rows (TB*TN) per grid step

    # Point-axis tile: lane dim of the NCW x block must be == N or a multiple of 128.
    TN = N if N <= 512 else 512
    TB = min(B, max(1, m_target // TN))
    # v7x (or unknown): prefer >= 2 B-tiles so the "parallel" axis feeds both cores.
    if (not big_vmem) and TB == B and B >= 2:
        TB = (B + 1) // 2

    # Weights: bf16 for the big MXU matmuls (layer-1 w1 stays f32, K=C_in is tiny);
    # biases stay f32 for the VPU adds.
    w1 = params["w1"]
    w2, w3, fw1, fw2, fw3 = (params[k].astype(jnp.bfloat16)
                             for k in ("w2", "w3", "fw1", "fw2", "fw3"))
    b1, b2, b3, fb1, fb2, fb3 = (params[k]
                                 for k in ("b1", "b2", "b3", "fb1", "fb2", "fb3"))
    w_args = [w1, b1, w2, b2, w3, b3, fw1, fb1, fw2, fb2, fw3, fb3]

    def const_spec(a):
        nd = a.ndim
        return pl.BlockSpec(a.shape, lambda b, n, _nd=nd: (0,) * _nd)

    flops = int(2 * B * N * (c_in * 64 + 64 * 128 + 128 * 1024)
                + 2 * B * (1024 * 512 + 512 * 256 + 256 * K))
    bytes_accessed = int(x_ncw.size * 4
                         + sum(int(a.size) * a.dtype.itemsize for a in w_args)
                         + B * K * 4)

    grid = (pl.cdiv(B, TB), pl.cdiv(N, TN))

    out3 = pl.pallas_call(
        functools.partial(stn_kernel, n_points=N),
        out_shape=jax.ShapeDtypeStruct((B, 1, K), jnp.float32),
        grid=grid,
        in_specs=[pl.BlockSpec((TB, c_in, TN), lambda b, n: (b, 0, n))]
                 + [const_spec(a) for a in w_args],
        out_specs=pl.BlockSpec((TB, 1, K), lambda b, n: (b, 0, 0)),
        scratch_shapes=[pltpu.VMEM((TB, 1024), jnp.float32)],
        compiler_params=pltpu.CompilerParams(
            dimension_semantics=("parallel", "arbitrary"),
            vmem_limit_bytes=(64 if big_vmem else 48) << 20),
        cost_estimate=pl.CostEstimate(
            flops=flops, transcendentals=0, bytes_accessed=bytes_accessed),
    )(x_ncw, *w_args)

    return out3[:, 0, :].reshape(B, out_dim, out_dim)


# ---------------------------------------------------------------------------
# Deterministic parameter construction (torch-style init, BN folded)
# ---------------------------------------------------------------------------
def _fold_bn(w, b, gamma, beta, mean, var, eps=1e-5):
    scale = gamma / jnp.sqrt(var + eps)
    return w * scale[None, :], (b - mean) * scale + beta


def make_params(input_dim, output_dim, key):
    keys = iter(jax.random.split(key, 32))

    def linear(fan_in, fan_out):
        bound = 1.0 / jnp.sqrt(jnp.float32(fan_in))
        w = jax.random.uniform(next(keys), (fan_in, fan_out), jnp.float32, -bound, bound)
        b = jax.random.uniform(next(keys), (fan_out,), jnp.float32, -bound, bound)
        return w, b

    def bn(c):
        gamma = 1.0 + 0.1 * jax.random.normal(next(keys), (c,), jnp.float32)
        beta = 0.1 * jax.random.normal(next(keys), (c,), jnp.float32)
        mean = 0.05 * jax.random.normal(next(keys), (c,), jnp.float32)
        var = 0.5 + 0.1 * jnp.abs(jax.random.normal(next(keys), (c,), jnp.float32))
        return gamma, beta, mean, var

    p = {"out_dim": output_dim}
    # conv1d(k=1) layers (per-point linear) + BN folding
    w1, b1 = linear(input_dim, 64); w1, b1 = _fold_bn(w1, b1, *bn(64))
    w2, b2 = linear(64, 128);       w2, b2 = _fold_bn(w2, b2, *bn(128))
    w3, b3 = linear(128, 1024);     w3, b3 = _fold_bn(w3, b3, *bn(1024))
    # fc layers
    fw1, fb1 = linear(1024, 512);   fw1, fb1 = _fold_bn(fw1, fb1, *bn(512))
    fw2, fb2 = linear(512, 256);    fw2, fb2 = _fold_bn(fw2, fb2, *bn(256))
    fw3, fb3 = linear(256, output_dim * output_dim)
    # fold the "+ identity" into the last bias (exactly equivalent)
    fb3 = fb3 + jnp.eye(output_dim, dtype=jnp.float32).reshape(-1)

    for name, w, b in (("1", w1, b1), ("2", w2, b2), ("3", w3, b3)):
        p["w" + name], p["b" + name] = w, b[None, :]
    for name, w, b in (("1", fw1, fb1), ("2", fw2, fb2), ("3", fw3, fb3)):
        p["fw" + name], p["fb" + name] = w, b[None, :]
    return p


# ---------------------------------------------------------------------------
# Pure-JAX references for verification
# ---------------------------------------------------------------------------
def stn_reference(x_ncw, p):
    """Exact f32 reference of the module's forward (eval-mode BN folded)."""
    x = jnp.transpose(x_ncw, (0, 2, 1)).astype(jnp.float32)       # (B, N, C_in)
    h = jnp.maximum(x @ p["w1"] + p["b1"], 0.0)
    h = jnp.maximum(h @ p["w2"] + p["b2"], 0.0)
    h = jnp.maximum(h @ p["w3"] + p["b3"], 0.0)
    g = jnp.max(h, axis=1)                                        # (B, 1024)
    f = jnp.maximum(g @ p["fw1"] + p["fb1"], 0.0)
    f = jnp.maximum(f @ p["fw2"] + p["fb2"], 0.0)
    out = f @ p["fw3"] + p["fb3"]
    return out.reshape(x.shape[0], p["out_dim"], p["out_dim"])


def stn_reference_bf16(x_ncw, p):
    """Reference that mirrors the kernel's precision (f32 layer 1, bf16-in/f32-acc
    elsewhere) and the deferred layer-3 bias+ReLU."""
    bf = jnp.bfloat16

    def mm(a, w):
        return jnp.dot(a.astype(bf), w.astype(bf), preferred_element_type=jnp.float32)

    x = jnp.transpose(x_ncw, (0, 2, 1)).astype(jnp.float32)
    h = jnp.maximum(x @ p["w1"] + p["b1"], 0.0)
    h = jnp.maximum(mm(h, p["w2"]) + p["b2"], 0.0)
    s = mm(h, p["w3"])
    g = jnp.maximum(jnp.max(s, axis=1) + p["b3"][0], 0.0)         # deferred bias+ReLU
    f = jnp.maximum(mm(g, p["fw1"]) + p["fb1"], 0.0)
    f = jnp.maximum(mm(f, p["fw2"]) + p["fb2"], 0.0)
    out = mm(f, p["fw3"]) + p["fb3"]
    return out.reshape(x.shape[0], p["out_dim"], p["out_dim"])


if __name__ == "__main__":
    B, input_dim, N, output_dim = 2, 4, 16, 4

    key = jax.random.PRNGKey(0)
    k_x, k_p = jax.random.split(key)
    x = jax.random.normal(k_x, (B, input_dim, N), jnp.float32)    # PyTorch NCW input layout
    params = make_params(input_dim, output_dim, k_p)

    out = jax.block_until_ready(stn_forward(x, params))

    ref32 = stn_reference(x, params)
    refbf = stn_reference_bf16(x, params)
    assert out.shape == (B, output_dim, output_dim), out.shape
    # Tight check against a reference using the same precision recipe as the kernel.
    assert jnp.allclose(out, refbf, rtol=1e-2, atol=1e-2), \
        f"bf16-ref max abs err {jnp.max(jnp.abs(out - refbf))}"
    # Loose check against the exact f32 module semantics (bf16 MXU inputs).
    assert jnp.allclose(out, ref32, rtol=6e-2, atol=6e-2), \
        f"f32-ref max abs err {jnp.max(jnp.abs(out - ref32))}"

    print("KERNEL_OK")
</pallas_src>

<mosaic_0001>
module attributes {stable_mosaic.version = 11 : i64} {
  func.func @stn_kernel(%arg0: i32, %arg1: i32, %arg2: memref<1x4x16xf32, #tpu.memory_space<vmem>>, %arg3: memref<4x64xf32, #tpu.memory_space<vmem>>, %arg4: memref<1x64xf32, #tpu.memory_space<vmem>>, %arg5: memref<64x128xbf16, #tpu.memory_space<vmem>>, %arg6: memref<1x128xf32, #tpu.memory_space<vmem>>, %arg7: memref<128x1024xbf16, #tpu.memory_space<vmem>>, %arg8: memref<1x1024xf32, #tpu.memory_space<vmem>>, %arg9: memref<1024x512xbf16, #tpu.memory_space<vmem>>, %arg10: memref<1x512xf32, #tpu.memory_space<vmem>>, %arg11: memref<512x256xbf16, #tpu.memory_space<vmem>>, %arg12: memref<1x256xf32, #tpu.memory_space<vmem>>, %arg13: memref<256x16xbf16, #tpu.memory_space<vmem>>, %arg14: memref<1x16xf32, #tpu.memory_space<vmem>>, %arg15: memref<1x1x16xf32, #tpu.memory_space<vmem>>, %arg16: memref<1x1024xf32, #tpu.memory_space<vmem>>) attributes {dimension_semantics = [#tpu.dimension_semantics<parallel>, #tpu.dimension_semantics<arbitrary>], iteration_bounds = array<i64: 2, 1>, scalar_prefetch = 0 : i64, scratch_operands = 1 : i64, tpu.core_type = #tpu.core_type<tc>, window_params = [{transform_indices = @transform_0, window_bounds = array<i64: 1, 4, 16>}, {pipeline_mode = #tpu.pipeline_mode<synchronous>, transform_indices = @transform_1, window_bounds = array<i64: 4, 64>}, {pipeline_mode = #tpu.pipeline_mode<synchronous>, transform_indices = @transform_2, window_bounds = array<i64: 1, 64>}, {pipeline_mode = #tpu.pipeline_mode<synchronous>, transform_indices = @transform_3, window_bounds = array<i64: 64, 128>}, {pipeline_mode = #tpu.pipeline_mode<synchronous>, transform_indices = @transform_4, window_bounds = array<i64: 1, 128>}, {pipeline_mode = #tpu.pipeline_mode<synchronous>, transform_indices = @transform_5, window_bounds = array<i64: 128, 1024>}, {pipeline_mode = #tpu.pipeline_mode<synchronous>, transform_indices = @transform_6, window_bounds = array<i64: 1, 1024>}, {pipeline_mode = #tpu.pipeline_mode<synchronous>, transform_indices = @transform_7, window_bounds = array<i64: 1024, 512>}, {pipeline_mode = #tpu.pipeline_mode<synchronous>, transform_indices = @transform_8, window_bounds = array<i64: 1, 512>}, {pipeline_mode = #tpu.pipeline_mode<synchronous>, transform_indices = @transform_9, window_bounds = array<i64: 512, 256>}, {pipeline_mode = #tpu.pipeline_mode<synchronous>, transform_indices = @transform_10, window_bounds = array<i64: 1, 256>}, {pipeline_mode = #tpu.pipeline_mode<synchronous>, transform_indices = @transform_11, window_bounds = array<i64: 256, 16>}, {pipeline_mode = #tpu.pipeline_mode<synchronous>, transform_indices = @transform_12, window_bounds = array<i64: 1, 16>}, {transform_indices = @transform_13, window_bounds = array<i64: 1, 1, 16>}]} {
    %c0_i32 = arith.constant 0 : i32
    %0 = arith.cmpi eq, %arg1, %c0_i32 : i32
    %1 = arith.extui %0 : i1 to i32
    %c0_i32_0 = arith.constant 0 : i32
    %2 = arith.cmpi ne, %1, %c0_i32_0 : i32
    scf.if %2 {
      %cst_24 = arith.constant 0xFF800000 : f32
      %32 = vector.broadcast %cst_24 : f32 to vector<1x1024xf32>
      %c0_25 = arith.constant 0 : index
      %c0_26 = arith.constant 0 : index
      %33 = vector.load %arg16[%c0_25, %c0_26] : memref<1x1024xf32, #tpu.memory_space<vmem>>, vector<1x1024xf32>
      tpu.vector_store %arg16[%c0_25, %c0_26], %32 {strides = array<i32>} : memref<1x1024xf32, #tpu.memory_space<vmem>>, vector<1x1024xf32>,
    } else {
    }
    %c0 = arith.constant 0 : index
    %c0_1 = arith.constant 0 : index
    %c0_2 = arith.constant 0 : index
    %3 = vector.load %arg2[%c0, %c0_1, %c0_2] : memref<1x4x16xf32, #tpu.memory_space<vmem>>, vector<1x4x16xf32>
    %4 = tpu.transpose %3, [0, 2, 1] : vector<1x4x16xf32> -> vector<1x16x4xf32>
    %5 = vector.shape_cast %4 : vector<1x16x4xf32> to vector<16x4xf32>
    %c0_3 = arith.constant 0 : index
    %c0_4 = arith.constant 0 : index
    %6 = vector.load %arg3[%c0_3, %c0_4] : memref<4x64xf32, #tpu.memory_space<vmem>>, vector<4x64xf32>
    %cst = arith.constant dense<0.000000e+00> : vector<16x64xf32>
    %7 = tpu.matmul %5, %6, %cst {dimension_numbers = #tpu.dot_dimension_numbers<[1], [0], [0], [1], [0, 0, 1, 1], [], []>} : vector<16x4xf32>, vector<4x64xf32>, vector<16x64xf32> -> vector<16x64xf32>
    %c0_5 = arith.constant 0 : index
    %c0_6 = arith.constant 0 : index
    %8 = vector.load %arg4[%c0_5, %c0_6] : memref<1x64xf32, #tpu.memory_space<vmem>>, vector<1x64xf32>
    %9 = vector.broadcast %8 : vector<1x64xf32> to vector<16x64xf32>
    %10 = arith.addf %7, %9 : vector<16x64xf32>
    %cst_7 = arith.constant 0.000000e+00 : f32
    %11 = vector.broadcast %cst_7 : f32 to vector<16x64xf32>
    %12 = arith.maximumf %10, %11 : vector<16x64xf32>
    %13 = arith.truncf %12 : vector<16x64xf32> to vector<16x64xbf16>
    %c0_8 = arith.constant 0 : index
    %c0_9 = arith.constant 0 : index
    %14 = vector.load %arg5[%c0_8, %c0_9] : memref<64x128xbf16, #tpu.memory_space<vmem>>, vector<64x128xbf16>
    %cst_10 = arith.constant dense<0.000000e+00> : vector<16x128xf32>
    %15 = tpu.matmul %13, %14, %cst_10 {dimension_numbers = #tpu.dot_dimension_numbers<[1], [0], [0], [1], [0, 0, 1, 1], [], []>} : vector<16x64xbf16>, vector<64x128xbf16>, vector<16x128xf32> -> vector<16x128xf32>
    %c0_11 = arith.constant 0 : index
    %c0_12 = arith.constant 0 : index
    %16 = vector.load %arg6[%c0_11, %c0_12] : memref<1x128xf32, #tpu.memory_space<vmem>>, vector<1x128xf32>
    %17 = vector.broadcast %16 : vector<1x128xf32> to vector<16x128xf32>
    %18 = arith.addf %15, %17 : vector<16x128xf32>
    %cst_13 = arith.constant 0.000000e+00 : f32
    %19 = vector.broadcast %cst_13 : f32 to vector<16x128xf32>
    %20 = arith.maximumf %18, %19 : vector<16x128xf32>
    %21 = arith.truncf %20 : vector<16x128xf32> to vector<16x128xbf16>
    %c0_14 = arith.constant 0 : index
    %c0_15 = arith.constant 0 : index
    %22 = vector.load %arg7[%c0_14, %c0_15] : memref<128x1024xbf16, #tpu.memory_space<vmem>>, vector<128x1024xbf16>
    %cst_16 = arith.constant dense<0.000000e+00> : vector<16x1024xf32>
    %23 = tpu.matmul %21, %22, %cst_16 {dimension_numbers = #tpu.dot_dimension_numbers<[1], [0], [0], [1], [0, 0, 1, 1], [], []>} : vector<16x128xbf16>, vector<128x1024xbf16>, vector<16x1024xf32> -> vector<16x1024xf32>
    %24 = vector.shape_cast %23 : vector<16x1024xf32> to vector<1x16x1024xf32>
    %c0_17 = arith.constant 0 : index
    %c0_18 = arith.constant 0 : index
    %25 = vector.load %arg16[%c0_17, %c0_18] : memref<1x1024xf32, #tpu.memory_space<vmem>>, vector<1x1024xf32>
    %cst_19 = arith.constant dense<0xFF800000> : vector<1x1024xf32>
    %26 = vector.multi_reduction <maximumf>, %24, %cst_19 [1] : vector<1x16x1024xf32> to vector<1x1024xf32>
    %27 = arith.maximumf %25, %26 : vector<1x1024xf32>
    %c0_20 = arith.constant 0 : index
    %c0_21 = arith.constant 0 : index
    %28 = vector.load %arg16[%c0_20, %c0_21] : memref<1x1024xf32, #tpu.memory_space<vmem>>, vector<1x1024xf32>
    tpu.vector_store %arg16[%c0_20, %c0_21], %27 {strides = array<i32>} : memref<1x1024xf32, #tpu.memory_space<vmem>>, vector<1x1024xf32>,
    %c0_i32_22 = arith.constant 0 : i32
    %29 = arith.cmpi eq, %arg1, %c0_i32_22 : i32
    %30 = arith.extui %29 : i1 to i32
    %c0_i32_23 = arith.constant 0 : i32
    %31 = arith.cmpi ne, %30, %c0_i32_23 : i32
    scf.if %31 {
      %c0_24 = arith.constant 0 : index
      %c0_25 = arith.constant 0 : index
      %32 = vector.load %arg16[%c0_24, %c0_25] : memref<1x1024xf32, #tpu.memory_space<vmem>>, vector<1x1024xf32>
      %c0_26 = arith.constant 0 : index
      %c0_27 = arith.constant 0 : index
      %33 = vector.load %arg8[%c0_26, %c0_27] : memref<1x1024xf32, #tpu.memory_space<vmem>>, vector<1x1024xf32>
      %34 = arith.addf %32, %33 : vector<1x1024xf32>
      %cst_28 = arith.constant 0.000000e+00 : f32
      %35 = vector.broadcast %cst_28 : f32 to vector<1x1024xf32>
      %36 = arith.maximumf %34, %35 : vector<1x1024xf32>
      %37 = arith.truncf %36 : vector<1x1024xf32> to vector<1x1024xbf16>
      %c0_29 = arith.constant 0 : index
      %c0_30 = arith.constant 0 : index
      %38 = vector.load %arg9[%c0_29, %c0_30] : memref<1024x512xbf16, #tpu.memory_space<vmem>>, vector<1024x512xbf16>
      %cst_31 = arith.constant dense<0.000000e+00> : vector<1x512xf32>
      %39 = tpu.matmul %37, %38, %cst_31 {dimension_numbers = #tpu.dot_dimension_numbers<[1], [0], [0], [1], [0, 0, 1, 1], [], []>} : vector<1x1024xbf16>, vector<1024x512xbf16>, vector<1x512xf32> -> vector<1x512xf32>
      %c0_32 = arith.constant 0 : index
      %c0_33 = arith.constant 0 : index
      %40 = vector.load %arg10[%c0_32, %c0_33] : memref<1x512xf32, #tpu.memory_space<vmem>>, vector<1x512xf32>
      %41 = arith.addf %39, %40 : vector<1x512xf32>
      %cst_34 = arith.constant 0.000000e+00 : f32
      %42 = vector.broadcast %cst_34 : f32 to vector<1x512xf32>
      %43 = arith.maximumf %41, %42 : vector<1x512xf32>
      %44 = arith.truncf %43 : vector<1x512xf32> to vector<1x512xbf16>
      %c0_35 = arith.constant 0 : index
      %c0_36 = arith.constant 0 : index
      %45 = vector.load %arg11[%c0_35, %c0_36] : memref<512x256xbf16, #tpu.memory_space<vmem>>, vector<512x256xbf16>
      %cst_37 = arith.constant dense<0.000000e+00> : vector<1x256xf32>
      %46 = tpu.matmul %44, %45, %cst_37 {dimension_numbers = #tpu.dot_dimension_numbers<[1], [0], [0], [1], [0, 0, 1, 1], [], []>} : vector<1x512xbf16>, vector<512x256xbf16>, vector<1x256xf32> -> vector<1x256xf32>
      %c0_38 = arith.constant 0 : index
      %c0_39 = arith.constant 0 : index
      %47 = vector.load %arg12[%c0_38, %c0_39] : memref<1x256xf32, #tpu.memory_space<vmem>>, vector<1x256xf32>
      %48 = arith.addf %46, %47 : vector<1x256xf32>
      %cst_40 = arith.constant 0.000000e+00 : f32
      %49 = vector.broadcast %cst_40 : f32 to vector<1x256xf32>
      %50 = arith.maximumf %48, %49 : vector<1x256xf32>
      %51 = arith.truncf %50 : vector<1x256xf32> to vector<1x256xbf16>
      %c0_41 = arith.constant 0 : index
      %c0_42 = arith.constant 0 : index
      %52 = vector.load %arg13[%c0_41, %c0_42] : memref<256x16xbf16, #tpu.memory_space<vmem>>, vector<256x16xbf16>
      %cst_43 = arith.constant dense<0.000000e+00> : vector<1x16xf32>
      %53 = tpu.matmul %51, %52, %cst_43 {dimension_numbers = #tpu.dot_dimension_numbers<[1], [0], [0], [1], [0, 0, 1, 1], [], []>} : vector<1x256xbf16>, vector<256x16xbf16>, vector<1x16xf32> -> vector<1x16xf32>
      %c0_44 = arith.constant 0 : index
      %c0_45 = arith.constant 0 : index
      %54 = vector.load %arg14[%c0_44, %c0_45] : memref<1x16xf32, #tpu.memory_space<vmem>>, vector<1x16xf32>
      %55 = arith.addf %53, %54 : vector<1x16xf32>
      %56 = vector.shape_cast %55 : vector<1x16xf32> to vector<1x1x16xf32>
      %c0_46 = arith.constant 0 : index
      %c0_47 = arith.constant 0 : index
      %c0_48 = arith.constant 0 : index
      %57 = vector.load %arg15[%c0_46, %c0_47, %c0_48] : memref<1x1x16xf32, #tpu.memory_space<vmem>>, vector<1x1x16xf32>
      tpu.vector_store %arg15[%c0_46, %c0_47, %c0_48], %56 {strides = array<i32>} : memref<1x1x16xf32, #tpu.memory_space<vmem>>, vector<1x1x16xf32>,
    } else {
    }
    return
  }
  func.func @transform_0(%arg0: i32, %arg1: i32) -> (i32, i32, i32) {
    %c0_i32 = arith.constant 0 : i32
    %c0_i32_0 = arith.constant 0 : i32
    return %arg0, %c0_i32, %arg1 : i32, i32, i32
  }
  func.func @transform_1(%arg0: i32, %arg1: i32) -> (i32, i32) {
    %c0_i32 = arith.constant 0 : i32
    %c0_i32_0 = arith.constant 0 : i32
    %c0_i32_1 = arith.constant 0 : i32
    return %c0_i32, %c0_i32_0 : i32, i32
  }
  func.func @transform_2(%arg0: i32, %arg1: i32) -> (i32, i32) {
    %c0_i32 = arith.constant 0 : i32
    %c0_i32_0 = arith.constant 0 : i32
    %c0_i32_1 = arith.constant 0 : i32
    return %c0_i32, %c0_i32_0 : i32, i32
  }
  func.func @transform_3(%arg0: i32, %arg1: i32) -> (i32, i32) {
    %c0_i32 = arith.constant 0 : i32
    %c0_i32_0 = arith.constant 0 : i32
    %c0_i32_1 = arith.constant 0 : i32
    return %c0_i32, %c0_i32_0 : i32, i32
  }
  func.func @transform_4(%arg0: i32, %arg1: i32) -> (i32, i32) {
    %c0_i32 = arith.constant 0 : i32
    %c0_i32_0 = arith.constant 0 : i32
    %c0_i32_1 = arith.constant 0 : i32
    return %c0_i32, %c0_i32_0 : i32, i32
  }
  func.func @transform_5(%arg0: i32, %arg1: i32) -> (i32, i32) {
    %c0_i32 = arith.constant 0 : i32
    %c0_i32_0 = arith.constant 0 : i32
    %c0_i32_1 = arith.constant 0 : i32
    return %c0_i32, %c0_i32_0 : i32, i32
  }
  func.func @transform_6(%arg0: i32, %arg1: i32) -> (i32, i32) {
    %c0_i32 = arith.constant 0 : i32
    %c0_i32_0 = arith.constant 0 : i32
    %c0_i32_1 = arith.constant 0 : i32
    return %c0_i32, %c0_i32_0 : i32, i32
  }
  func.func @transform_7(%arg0: i32, %arg1: i32) -> (i32, i32) {
    %c0_i32 = arith.constant 0 : i32
    %c0_i32_0 = arith.constant 0 : i32
    %c0_i32_1 = arith.constant 0 : i32
    return %c0_i32, %c0_i32_0 : i32, i32
  }
  func.func @transform_8(%arg0: i32, %arg1: i32) -> (i32, i32) {
    %c0_i32 = arith.constant 0 : i32
    %c0_i32_0 = arith.constant 0 : i32
    %c0_i32_1 = arith.constant 0 : i32
    return %c0_i32, %c0_i32_0 : i32, i32
  }
  func.func @transform_9(%arg0: i32, %arg1: i32) -> (i32, i32) {
    %c0_i32 = arith.constant 0 : i32
    %c0_i32_0 = arith.constant 0 : i32
    %c0_i32_1 = arith.constant 0 : i32
    return %c0_i32, %c0_i32_0 : i32, i32
  }
  func.func @transform_10(%arg0: i32, %arg1: i32) -> (i32, i32) {
    %c0_i32 = arith.constant 0 : i32
    %c0_i32_0 = arith.constant 0 : i32
    %c0_i32_1 = arith.constant 0 : i32
    return %c0_i32, %c0_i32_0 : i32, i32
  }
  func.func @transform_11(%arg0: i32, %arg1: i32) -> (i32, i32) {
    %c0_i32 = arith.constant 0 : i32
    %c0_i32_0 = arith.constant 0 : i32
    %c0_i32_1 = arith.constant 0 : i32
    return %c0_i32, %c0_i32_0 : i32, i32
  }
  func.func @transform_12(%arg0: i32, %arg1: i32) -> (i32, i32) {
    %c0_i32 = arith.constant 0 : i32
    %c0_i32_0 = arith.constant 0 : i32
    %c0_i32_1 = arith.constant 0 : i32
    return %c0_i32, %c0_i32_0 : i32, i32
  }
  func.func @transform_13(%arg0: i32, %arg1: i32) -> (i32, i32, i32) {
    %c0_i32 = arith.constant 0 : i32
    %c0_i32_0 = arith.constant 0 : i32
    %c0_i32_1 = arith.constant 0 : i32
    return %arg0, %c0_i32, %c0_i32_0 : i32, i32, i32
  }
}

</mosaic_0001>

<llo_original>
// kernel: tpu_custom_call.1
$region0: #{tpu_custom_call.1}
  #allocation0 [shape = 'u32[]', space=smem, size = 0x4, offset = 0x4, fixed_abs, tag = 'smem constant byte address 0x4 - core index']
  #allocation1 [shape = 'u32[144,128]{1,0:T(1,128)}', space=vmem, size = 0x12000, scoped, tag = 'internal scratch']
  #allocation2 [shape = 'f32[1,1024]{1,0:T(1,128)}', space=vmem, size = 0x1000, scoped, tag = 'scratch operand']
  %s0 = inlined_call_operand.vmem [shape: f32[2,4,16], index: 0, kind: input, shape index: {}]
  %s1 = inlined_call_operand.vmem [shape: f32[4,64], index: 1, kind: input, shape index: {}]
  %s2 = inlined_call_operand.vmem [shape: f32[1,64], index: 2, kind: input, shape index: {}]
  %s3 = inlined_call_operand.vmem [shape: bf16[64,128], index: 3, kind: input, shape index: {}]
  %s4 = inlined_call_operand.vmem [shape: f32[1,128], index: 4, kind: input, shape index: {}]
  %s5 = inlined_call_operand.hbm [shape: bf16[128,1024], index: 5, kind: input, shape index: {}]
  %s6 = inlined_call_operand.vmem [shape: f32[1,1024], index: 6, kind: input, shape index: {}]
  %s7 = inlined_call_operand.hbm [shape: bf16[1024,512], index: 7, kind: input, shape index: {}]
  %s8 = inlined_call_operand.vmem [shape: f32[1,512], index: 8, kind: input, shape index: {}]
  %s9 = inlined_call_operand.hbm [shape: bf16[512,256], index: 9, kind: input, shape index: {}]
  %s10 = inlined_call_operand.vmem [shape: f32[1,256], index: 10, kind: input, shape index: {}]
  %s11 = inlined_call_operand.vmem [shape: bf16[256,16], index: 11, kind: input, shape index: {}]
  %s12 = inlined_call_operand.vmem [shape: f32[1,16], index: 12, kind: input, shape index: {}]
  %s13 = inlined_call_operand.hbm [shape: f32[2,1,16], index: 13, kind: output, shape index: {}]
  %s14 = sld [smem:[#allocation0]]
  $region105: #{tpu_custom_call.1} parent=0
    _
  %s16 = ssub.s32 1, %s14
  %s17 = scalar_select 0, %s16, %s14
  $region1: #{tpu_custom_call.1} parent=0
    #allocation3 [shape = 'u8[262144]{0}', space=vmem, size = 0x40000, scoped, tag = 'input window, operand 5, single buffered']
    #allocation4 [shape = 's32[2]{0}', space=sflag, size = 0x8, scoped, tag = 'scoped memory for tpu_custom_call.1']
    #allocation5 [shape = 's32[2]{0}', space=sflag, size = 0x8, scoped, tag = 'scoped memory for tpu_custom_call.1']
    #allocation6 [shape = 'u8[1048576]{0}', space=vmem, size = 0x100000, scoped, tag = 'input window, operand 7, single buffered']
    #allocation7 [shape = 's32[1]{0}', space=sflag, size = 0x4, scoped, tag = 'scoped memory for tpu_custom_call.1']
    #allocation8 [shape = 'u8[262144]{0}', space=vmem, size = 0x40000, scoped, tag = 'input window, operand 9, single buffered']
    #allocation9 [shape = 'u8[1024]{0}', space=vmem, size = 0x400, scoped, tag = 'output window, operand 0']
    %18 = vsyncpa [#allocation4], 0
    %19 = vsyncpa [#allocation7], 0
    %20 = vsyncpa [#allocation5], 0
    %s21 = scalar_lea.sflag [#allocation5], 1
    %22 = vsyncpa %s21, 0
    loop: start=0, step=1, limit=4
    $region2: #{tpu_custom_call.1} parent=1 // loop_pre_header
      _
    $region3: #{tpu_custom_call.1} parent=1 // loop_header
      %s24 = sphi 0, %s28
      %p25 = scmp.ge.s32.totalorder %s24, 4
      %s31 = sphi 0, %s43
      %s32 = sphi 0, %s39
      %s33 = sphi 0, %s31
      %s34 = sphi 0, %s32
      %s35 = sphi 0, %s33
      %s36 = sphi 0, %s34
      %s48 = sphi 0, %s50
      %s51 = sphi 0, %s48
      %s52 = sphi 0, %s51
      %s68 = sphi 0, %s52
      %s72 = sphi 0, %s72
      %s74 = sphi 0, %s72
      %s75 = sphi 0, %s74
      %s89 = sphi 0, %s75
      %s93 = sphi 0, %s93
      %s95 = sphi 0, %s93
      %s96 = sphi 0, %s95
      %s110 = sphi 0, %s96
      %s114 = sphi 0, %s114
      %s116 = sphi 0, %s114
      %s117 = sphi 0, %s116
      %s131 = sphi 0, %s117
      %s135 = sphi 0, %s135
      %s137 = sphi 0, %s135
      %s138 = sphi 0, %s137
      %s152 = sphi 0, %s138
      %s156 = sphi 0, %s156
      %s158 = sphi 0, %s156
      %s159 = sphi 0, %s158
      %s173 = sphi 0, %s159
      %s177 = sphi 0, %s177
      %s179 = sphi 0, %s177
      %s180 = sphi 0, %s179
      %s194 = sphi 0, %s180
      %s198 = sphi 0, %s198
      %s200 = sphi 0, %s198
      %s201 = sphi 0, %s200
      %s215 = sphi 0, %s201
      %s219 = sphi 0, %s219
      %s221 = sphi 0, %s219
      %s222 = sphi 0, %s221
      %s236 = sphi 0, %s222
      %s240 = sphi 0, %s240
      %s242 = sphi 0, %s240
      %s243 = sphi 0, %s242
      %s257 = sphi 0, %s243
      %s261 = sphi 0, %s261
      %s263 = sphi 0, %s261
      %s264 = sphi 0, %s263
      %s278 = sphi 0, %s264
      %s282 = sphi 0, %s282
      %s284 = sphi 0, %s282
      %s285 = sphi 0, %s284
      %s299 = sphi 0, %s285
      %s303 = sphi 0, %s303
      %s305 = sphi 0, %s303
      %s306 = sphi 0, %s305
      %s320 = sphi 0, %s306
      %s326 = sphi 0, %s328
      %s329 = sphi 0, %s326
      %s330 = sphi 0, %s329
      %s346 = sphi 0, %s330
    $region4: #{tpu_custom_call.1} parent=1 // loop_header_branch
      %27 = sbr.rel (%p25) target = $region8
    $region5: #{tpu_custom_call.1} parent=1 // loop_body
      %s29 = ssub.s32 %s24, 1
      %s30 = ssub.s32 %s24, 2
      %s37 = sadd.s32 1, %s32
      %p38 = scmp.ge.s32.totalorder %s37, 1
      %s39 = scalar_select %p38, 0, %s37
      %s40 = sadd.s32 1, %s31
      %s41 = scalar_select %p38, %s40, %s31
      %p42 = scmp.ge.s32.totalorder %s41, 2
      %s43 = scalar_select %p42, 0, %s41
      %s44 = ssub.s32 %s31, %s43
      %s45 = ssub.s32 %s32, %s39
      %s46 = sor.u32 %s44, %s45
      %p47 = scmp.eq.s32.totalorder %s46, 0
      %s49 = sadd.s32 %s48, 1
      %s50 = scalar_select %p47, %s48, %s49
      %p53 = pneg %p47
      %p54 = scmp.eq.s32.totalorder %s24, 1
      %p55 = por %p53, %p54
      %p56 = scmp.ne.s32.totalorder %s48, %s51
      %p57 = scmp.eq.s32.totalorder %s24, 0
      %p58 = por %p56, %p57
      %p59 = scmp.ne.s32.totalorder %s48, %s51
      %p60 = scmp.eq.s32.totalorder %s29, 1
      %p61 = por %p59, %p60
      %p62 = scmp.ne.s32.totalorder %s51, %s52
      %p63 = scmp.eq.s32.totalorder %s29, 0
      %p64 = por %p62, %p63
      %p65 = scmp.ne.s32.totalorder %s51, %s52
      %p66 = scmp.eq.s32.totalorder %s30, 1
      %p67 = por %p65, %p66
      %p69 = scmp.ne.s32.totalorder %s52, %s68
      %p70 = scmp.eq.s32.totalorder %s30, 0
      %p71 = por %p69, %p70
      %s73 = sadd.s32 %s72, 1
      %p76 = scmp.eq.s32.totalorder %s24, 1
      %p77 = scmp.ne.s32.totalorder %s72, %s74
      %p78 = scmp.eq.s32.totalorder %s24, 0
      %p79 = por %p77, %p78
      %p80 = scmp.ne.s32.totalorder %s72, %s74
      %p81 = scmp.eq.s32.totalorder %s29, 1
      %p82 = por %p80, %p81
      %p83 = scmp.ne.s32.totalorder %s74, %s75
      %p84 = scmp.eq.s32.totalorder %s29, 0
      %p85 = por %p83, %p84
      %p86 = scmp.ne.s32.totalorder %s74, %s75
      %p87 = scmp.eq.s32.totalorder %s30, 1
      %p88 = por %p86, %p87
      %p90 = scmp.ne.s32.totalorder %s75, %s89
      %p91 = scmp.eq.s32.totalorder %s30, 0
      %p92 = por %p90, %p91
      %s94 = sadd.s32 %s93, 1
      %p97 = scmp.eq.s32.totalorder %s24, 1
      %p98 = scmp.ne.s32.totalorder %s93, %s95
      %p99 = scmp.eq.s32.totalorder %s24, 0
      %p100 = por %p98, %p99
      %p101 = scmp.ne.s32.totalorder %s93, %s95
      %p102 = scmp.eq.s32.totalorder %s29, 1
      %p103 = por %p101, %p102
      %p104 = scmp.ne.s32.totalorder %s95, %s96
      %p105 = scmp.eq.s32.totalorder %s29, 0
      %p106 = por %p104, %p105
      %p107 = scmp.ne.s32.totalorder %s95, %s96
      %p108 = scmp.eq.s32.totalorder %s30, 1
      %p109 = por %p107, %p108
      %p111 = scmp.ne.s32.totalorder %s96, %s110
      %p112 = scmp.eq.s32.totalorder %s30, 0
      %p113 = por %p111, %p112
      %s115 = sadd.s32 %s114, 1
      %p118 = scmp.eq.s32.totalorder %s24, 1
      %p119 = scmp.ne.s32.totalorder %s114, %s116
      %p120 = scmp.eq.s32.totalorder %s24, 0
      %p121 = por %p119, %p120
      %p122 = scmp.ne.s32.totalorder %s114, %s116
      %p123 = scmp.eq.s32.totalorder %s29, 1
      %p124 = por %p122, %p123
      %p125 = scmp.ne.s32.totalorder %s116, %s117
      %p126 = scmp.eq.s32.totalorder %s29, 0
      %p127 = por %p125, %p126
      %p128 = scmp.ne.s32.totalorder %s116, %s117
      %p129 = scmp.eq.s32.totalorder %s30, 1
      %p130 = por %p128, %p129
      %p132 = scmp.ne.s32.totalorder %s117, %s131
      %p133 = scmp.eq.s32.totalorder %s30, 0
      %p134 = por %p132, %p133
      %s136 = sadd.s32 %s135, 1
      %p139 = scmp.eq.s32.totalorder %s24, 1
      %p140 = scmp.ne.s32.totalorder %s135, %s137
      %p141 = scmp.eq.s32.totalorder %s24, 0
      %p142 = por %p140, %p141
      %p143 = scmp.ne.s32.totalorder %s135, %s137
      %p144 = scmp.eq.s32.totalorder %s29, 1
      %p145 = por %p143, %p144
      %p146 = scmp.ne.s32.totalorder %s137, %s138
      %p147 = scmp.eq.s32.totalorder %s29, 0
      %p148 = por %p146, %p147
      %p149 = scmp.ne.s32.totalorder %s137, %s138
      %p150 = scmp.eq.s32.totalorder %s30, 1
      %p151 = por %p149, %p150
      %p153 = scmp.ne.s32.totalorder %s138, %s152
      %p154 = scmp.eq.s32.totalorder %s30, 0
      %p155 = por %p153, %p154
      %s157 = sadd.s32 %s156, 1
      %p160 = scmp.eq.s32.totalorder %s24, 1
      %p161 = scmp.ne.s32.totalorder %s156, %s158
      %p162 = scmp.eq.s32.totalorder %s24, 0
      %p163 = por %p161, %p162
      %p164 = scmp.ne.s32.totalorder %s156, %s158
      %p165 = scmp.eq.s32.totalorder %s29, 1
      %p166 = por %p164, %p165
      %p167 = scmp.ne.s32.totalorder %s158, %s159
      %p168 = scmp.eq.s32.totalorder %s29, 0
      %p169 = por %p167, %p168
      %p170 = scmp.ne.s32.totalorder %s158, %s159
      %p171 = scmp.eq.s32.totalorder %s30, 1
      %p172 = por %p170, %p171
      %p174 = scmp.ne.s32.totalorder %s159, %s173
      %p175 = scmp.eq.s32.totalorder %s30, 0
      %p176 = por %p174, %p175
      %s178 = sadd.s32 %s177, 1
      %p181 = scmp.eq.s32.totalorder %s24, 1
      %p182 = scmp.ne.s32.totalorder %s177, %s179
      %p183 = scmp.eq.s32.totalorder %s24, 0
      %p184 = por %p182, %p183
      %p185 = scmp.ne.s32.totalorder %s177, %s179
      %p186 = scmp.eq.s32.totalorder %s29, 1
      %p187 = por %p185, %p186
      %p188 = scmp.ne.s32.totalorder %s179, %s180
      %p189 = scmp.eq.s32.totalorder %s29, 0
      %p190 = por %p188, %p189
      %p191 = scmp.ne.s32.totalorder %s179, %s180
      %p192 = scmp.eq.s32.totalorder %s30, 1
      %p193 = por %p191, %p192
      %p195 = scmp.ne.s32.totalorder %s180, %s194
      %p196 = scmp.eq.s32.totalorder %s30, 0
      %p197 = por %p195, %p196
      %s199 = sadd.s32 %s198, 1
      %p202 = scmp.eq.s32.totalorder %s24, 1
      %p203 = scmp.ne.s32.totalorder %s198, %s200
      %p204 = scmp.eq.s32.totalorder %s24, 0
      %p205 = por %p203, %p204
      %p206 = scmp.ne.s32.totalorder %s198, %s200
      %p207 = scmp.eq.s32.totalorder %s29, 1
      %p208 = por %p206, %p207
      %p209 = scmp.ne.s32.totalorder %s200, %s201
      %p210 = scmp.eq.s32.totalorder %s29, 0
      %p211 = por %p209, %p210
      %p212 = scmp.ne.s32.totalorder %s200, %s201
      %p213 = scmp.eq.s32.totalorder %s30, 1
      %p214 = por %p212, %p213
      %p216 = scmp.ne.s32.totalorder %s201, %s215
      %p217 = scmp.eq.s32.totalorder %s30, 0
      %p218 = por %p216, %p217
      %s220 = sadd.s32 %s219, 1
      %p223 = scmp.eq.s32.totalorder %s24, 1
      %p224 = scmp.ne.s32.totalorder %s219, %s221
      %p225 = scmp.eq.s32.totalorder %s24, 0
      %p226 = por %p224, %p225
      %p227 = scmp.ne.s32.totalorder %s219, %s221
      %p228 = scmp.eq.s32.totalorder %s29, 1
      %p229 = por %p227, %p228
      %p230 = scmp.ne.s32.totalorder %s221, %s222
      %p231 = scmp.eq.s32.totalorder %s29, 0
      %p232 = por %p230, %p231
      %p233 = scmp.ne.s32.totalorder %s221, %s222
      %p234 = scmp.eq.s32.totalorder %s30, 1
      %p235 = por %p233, %p234
      %p237 = scmp.ne.s32.totalorder %s222, %s236
      %p238 = scmp.eq.s32.totalorder %s30, 0
      %p239 = por %p237, %p238
      %s241 = sadd.s32 %s240, 1
      %p244 = scmp.eq.s32.totalorder %s24, 1
      %p245 = scmp.ne.s32.totalorder %s240, %s242
      %p246 = scmp.eq.s32.totalorder %s24, 0
      %p247 = por %p245, %p246
      %p248 = scmp.ne.s32.totalorder %s240, %s242
      %p249 = scmp.eq.s32.totalorder %s29, 1
      %p250 = por %p248, %p249
      %p251 = scmp.ne.s32.totalorder %s242, %s243
      %p252 = scmp.eq.s32.totalorder %s29, 0
      %p253 = por %p251, %p252
      %p254 = scmp.ne.s32.totalorder %s242, %s243
      %p255 = scmp.eq.s32.totalorder %s30, 1
      %p256 = por %p254, %p255
      %p258 = scmp.ne.s32.totalorder %s243, %s257
      %p259 = scmp.eq.s32.totalorder %s30, 0
      %p260 = por %p258, %p259
      %s262 = sadd.s32 %s261, 1
      %p265 = scmp.eq.s32.totalorder %s24, 1
      %p266 = scmp.ne.s32.totalorder %s261, %s263
      %p267 = scmp.eq.s32.totalorder %s24, 0
      %p268 = por %p266, %p267
      %p269 = scmp.ne.s32.totalorder %s261, %s263
      %p270 = scmp.eq.s32.totalorder %s29, 1
      %p271 = por %p269, %p270
      %p272 = scmp.ne.s32.totalorder %s263, %s264
      %p273 = scmp.eq.s32.totalorder %s29, 0
      %p274 = por %p272, %p273
      %p275 = scmp.ne.s32.totalorder %s263, %s264
      %p276 = scmp.eq.s32.totalorder %s30, 1
      %p277 = por %p275, %p276
      %p279 = scmp.ne.s32.totalorder %s264, %s278
      %p280 = scmp.eq.s32.totalorder %s30, 0
      %p281 = por %p279, %p280
      %s283 = sadd.s32 %s282, 1
      %p286 = scmp.eq.s32.totalorder %s24, 1
      %p287 = scmp.ne.s32.totalorder %s282, %s284
      %p288 = scmp.eq.s32.totalorder %s24, 0
      %p289 = por %p287, %p288
      %p290 = scmp.ne.s32.totalorder %s282, %s284
      %p291 = scmp.eq.s32.totalorder %s29, 1
      %p292 = por %p290, %p291
      %p293 = scmp.ne.s32.totalorder %s284, %s285
      %p294 = scmp.eq.s32.totalorder %s29, 0
      %p295 = por %p293, %p294
      %p296 = scmp.ne.s32.totalorder %s284, %s285
      %p297 = scmp.eq.s32.totalorder %s30, 1
      %p298 = por %p296, %p297
      %p300 = scmp.ne.s32.totalorder %s285, %s299
      %p301 = scmp.eq.s32.totalorder %s30, 0
      %p302 = por %p300, %p301
      %s304 = sadd.s32 %s303, 1
      %p307 = scmp.eq.s32.totalorder %s24, 1
      %p308 = scmp.ne.s32.totalorder %s303, %s305
      %p309 = scmp.eq.s32.totalorder %s24, 0
      %p310 = por %p308, %p309
      %p311 = scmp.ne.s32.totalorder %s303, %s305
      %p312 = scmp.eq.s32.totalorder %s29, 1
      %p313 = por %p311, %p312
      %p314 = scmp.ne.s32.totalorder %s305, %s306
      %p315 = scmp.eq.s32.totalorder %s29, 0
      %p316 = por %p314, %p315
      %p317 = scmp.ne.s32.totalorder %s305, %s306
      %p318 = scmp.eq.s32.totalorder %s30, 1
      %p319 = por %p317, %p318
      %p321 = scmp.ne.s32.totalorder %s306, %s320
      %p322 = scmp.eq.s32.totalorder %s30, 0
      %p323 = por %p321, %p322
      %s324 = ssub.s32 %s31, %s43
      %p325 = scmp.eq.s32.totalorder %s324, 0
      %s327 = sadd.s32 %s326, 1
      %s328 = scalar_select %p325, %s326, %s327
      %p331 = pneg %p325
      %p332 = scmp.eq.s32.totalorder %s24, 1
      %p333 = por %p331, %p332
      %p334 = scmp.ne.s32.totalorder %s326, %s329
      %p335 = scmp.eq.s32.totalorder %s24, 0
      %p336 = por %p334, %p335
      %p337 = scmp.ne.s32.totalorder %s326, %s329
      %p338 = scmp.eq.s32.totalorder %s29, 1
      %p339 = por %p337, %p338
      %p340 = scmp.ne.s32.totalorder %s329, %s330
      %p341 = scmp.eq.s32.totalorder %s29, 0
      %p342 = por %p340, %p341
      %p343 = scmp.ne.s32.totalorder %s329, %s330
      %p344 = scmp.eq.s32.totalorder %s30, 1
      %p345 = por %p343, %p344
      %p347 = scmp.ne.s32.totalorder %s330, %s346
      %p348 = scmp.eq.s32.totalorder %s30, 0
      %p349 = por %p347, %p348
      %p350 = scmp.le.s32.totalorder 1, %s24
      %p351 = scmp.lt.s32.totalorder %s24, 3
      %p352 = pnand %p350, %p351
      %p353 = pneg %p352
      // Predicated region
      $region9: #{tpu_custom_call.1} parent=5 // pred_check
        _
      $region10: #{tpu_custom_call.1} parent=5 // pred_check_branch
        %355 = sbr.rel (%p352) target = $region12
      $region11: #{tpu_custom_call.1} parent=5 // pred_region
        %s356 = ssub.s32 %s24, 1
        // Predicated region
        $region13: #{tpu_custom_call.1} parent=11 // pred_check
          %p357 = pneg %p85
        $region14: #{tpu_custom_call.1} parent=11 // pred_check_branch
          %359 = sbr.rel (%p357) target = $region16
        $region15: #{tpu_custom_call.1} parent=11 // pred_region
          _
        $region16: #{tpu_custom_call.1} parent=11 // pred_fallthru
          _
        // Predicated region
        $region17: #{tpu_custom_call.1} parent=11 // pred_check
          %p360 = pneg %p106
        $region18: #{tpu_custom_call.1} parent=11 // pred_check_branch
          %362 = sbr.rel (%p360) target = $region20
        $region19: #{tpu_custom_call.1} parent=11 // pred_region
          _
        $region20: #{tpu_custom_call.1} parent=11 // pred_fallthru
          _
        // Predicated region
        $region21: #{tpu_custom_call.1} parent=11 // pred_check
          %p363 = pneg %p127
        $region22: #{tpu_custom_call.1} parent=11 // pred_check_branch
          %365 = sbr.rel (%p363) target = $region24
        $region23: #{tpu_custom_call.1} parent=11 // pred_region
          _
        $region24: #{tpu_custom_call.1} parent=11 // pred_fallthru
          _
        // Predicated region
        $region25: #{tpu_custom_call.1} parent=11 // pred_check
          %p366 = pneg %p148
        $region26: #{tpu_custom_call.1} parent=11 // pred_check_branch
          %368 = sbr.rel (%p366) target = $region28
        $region27: #{tpu_custom_call.1} parent=11 // pred_region
          _
        $region28: #{tpu_custom_call.1} parent=11 // pred_fallthru
          _
        // Predicated region
        $region29: #{tpu_custom_call.1} parent=11 // pred_check
          %p369 = pneg %p169
        $region30: #{tpu_custom_call.1} parent=11 // pred_check_branch
          %371 = sbr.rel (%p369) target = $region32
        $region31: #{tpu_custom_call.1} parent=11 // pred_region
          %s373 = ssub.s32 8192, 8192
          %374 = vsyncadd [#allocation4], %s373
          %s375 = sshll.u32 [#allocation3], 4
          %s376 = int_to_ptr.vmem [resolvable:$true] %s375
          %381 = dma.hbm_to_vmem [thread:$0]  %s5, 8192, %s376, [#allocation4], 512, 512, 32
        $region32: #{tpu_custom_call.1} parent=11 // pred_fallthru
          _
        // Predicated region
        $region33: #{tpu_custom_call.1} parent=11 // pred_check
          %p382 = pneg %p190
        $region34: #{tpu_custom_call.1} parent=11 // pred_check_branch
          %384 = sbr.rel (%p382) target = $region36
        $region35: #{tpu_custom_call.1} parent=11 // pred_region
          _
        $region36: #{tpu_custom_call.1} parent=11 // pred_fallthru
          _
        // Predicated region
        $region37: #{tpu_custom_call.1} parent=11 // pred_check
          %p385 = pneg %p211
        $region38: #{tpu_custom_call.1} parent=11 // pred_check_branch
          %387 = sbr.rel (%p385) target = $region40
        $region39: #{tpu_custom_call.1} parent=11 // pred_region
          %s389 = ssub.s32 32768, 32768
          %390 = vsyncadd [#allocation7], %s389
          %s391 = sshll.u32 [#allocation6], 4
          %s392 = int_to_ptr.vmem [resolvable:$true] %s391
          %397 = dma.hbm_to_vmem [thread:$0]  %s7, 32768, %s392, [#allocation7], 256, 256, 16
        $region40: #{tpu_custom_call.1} parent=11 // pred_fallthru
          _
        // Predicated region
        $region41: #{tpu_custom_call.1} parent=11 // pred_check
          %p398 = pneg %p232
        $region42: #{tpu_custom_call.1} parent=11 // pred_check_branch
          %400 = sbr.rel (%p398) target = $region44
        $region43: #{tpu_custom_call.1} parent=11 // pred_region
          _
        $region44: #{tpu_custom_call.1} parent=11 // pred_fallthru
          _
        // Predicated region
        $region45: #{tpu_custom_call.1} parent=11 // pred_check
          %p401 = pneg %p253
        $region46: #{tpu_custom_call.1} parent=11 // pred_check_branch
          %403 = sbr.rel (%p401) target = $region48
        $region47: #{tpu_custom_call.1} parent=11 // pred_region
          %s405 = ssub.s32 8192, 8192
          %406 = vsyncadd [#allocation7], %s405
          %s407 = sshll.u32 [#allocation8], 4
          %s408 = int_to_ptr.vmem [resolvable:$true] %s407
          %413 = dma.hbm_to_vmem [thread:$0]  %s9, 8192, %s408, [#allocation7], 128, 128, 8
        $region48: #{tpu_custom_call.1} parent=11 // pred_fallthru
          _
        // Predicated region
        $region49: #{tpu_custom_call.1} parent=11 // pred_check
          %p414 = pneg %p274
        $region50: #{tpu_custom_call.1} parent=11 // pred_check_branch
          %416 = sbr.rel (%p414) target = $region52
        $region51: #{tpu_custom_call.1} parent=11 // pred_region
          _
        $region52: #{tpu_custom_call.1} parent=11 // pred_fallthru
          _
        // Predicated region
        $region53: #{tpu_custom_call.1} parent=11 // pred_check
          %p417 = pneg %p295
        $region54: #{tpu_custom_call.1} parent=11 // pred_check_branch
          %419 = sbr.rel (%p417) target = $region56
        $region55: #{tpu_custom_call.1} parent=11 // pred_region
          _
        $region56: #{tpu_custom_call.1} parent=11 // pred_fallthru
          _
        // Predicated region
        $region57: #{tpu_custom_call.1} parent=11 // pred_check
          %p420 = pneg %p316
        $region58: #{tpu_custom_call.1} parent=11 // pred_check_branch
          %422 = sbr.rel (%p420) target = $region60
        $region59: #{tpu_custom_call.1} parent=11 // pred_region
          _
        $region60: #{tpu_custom_call.1} parent=11 // pred_fallthru
          _
      $region12: #{tpu_custom_call.1} parent=5 // pred_fallthru
        _
      %p423 = scmp.lt.s32.totalorder %s24, 2
      // Predicated region
      $region61: #{tpu_custom_call.1} parent=5 // pred_check
        %p424 = pneg %p423
      $region62: #{tpu_custom_call.1} parent=5 // pred_check_branch
        %426 = sbr.rel (%p424) target = $region64
      $region63: #{tpu_custom_call.1} parent=5 // pred_region
        // Predicated region
        $region65: #{tpu_custom_call.1} parent=63 // pred_check
          %p427 = pneg %p58
        $region66: #{tpu_custom_call.1} parent=63 // pred_check_branch
          %429 = sbr.rel (%p427) target = $region68
        $region67: #{tpu_custom_call.1} parent=63 // pred_region
          %p430 = scmp.lt.s32.totalorder %s31, 1
          %s431 = scalar_select %p430, %s31, 1
          %p432 = scmp.lt.s32.totalorder %s32, 0
          %s433 = scalar_select %p432, %s32, 0
          %s434 = sadd.s32 %s433, %s431
          %s435 = smul.addr %s434, 4
          %s436 = scalar_lea.vmem %s0, %s435
        $region68: #{tpu_custom_call.1} parent=63 // pred_fallthru
          _
      $region64: #{tpu_custom_call.1} parent=5 // pred_fallthru
        _
      %p437 = scmp.le.s32.totalorder 1, %s24
      %p438 = scmp.lt.s32.totalorder %s24, 3
      %p439 = pnand %p437, %p438
      %p440 = pneg %p439
      // Predicated region
      $region69: #{tpu_custom_call.1} parent=5 // pred_check
        _
      $region70: #{tpu_custom_call.1} parent=5 // pred_check_branch
        %442 = sbr.rel (%p439) target = $region72
      $region71: #{tpu_custom_call.1} parent=5 // pred_region
        %s443 = ssub.s32 %s24, 1
        // Predicated region
        $region73: #{tpu_custom_call.1} parent=71 // pred_check
          %p444 = pneg %p169
        $region74: #{tpu_custom_call.1} parent=71 // pred_check_branch
          %446 = sbr.rel (%p444) target = $region76
        $region75: #{tpu_custom_call.1} parent=71 // pred_region
          %447 = dma.done [#allocation4], 8192
        $region76: #{tpu_custom_call.1} parent=71 // pred_fallthru
          _
        // Predicated region
        $region77: #{tpu_custom_call.1} parent=71 // pred_check
          %p448 = pneg %p211
        $region78: #{tpu_custom_call.1} parent=71 // pred_check_branch
          %450 = sbr.rel (%p448) target = $region80
        $region79: #{tpu_custom_call.1} parent=71 // pred_region
          %451 = dma.done [#allocation7], 32768
        $region80: #{tpu_custom_call.1} parent=71 // pred_fallthru
          _
        // Predicated region
        $region81: #{tpu_custom_call.1} parent=71 // pred_check
          %p452 = pneg %p253
        $region82: #{tpu_custom_call.1} parent=71 // pred_check_branch
          %454 = sbr.rel (%p452) target = $region84
        $region83: #{tpu_custom_call.1} parent=71 // pred_region
          %455 = dma.done [#allocation7], 8192
        $region84: #{tpu_custom_call.1} parent=71 // pred_fallthru
          _
        %p456 = scmp.lt.s32.totalorder %s33, 1
        %s457 = scalar_select %p456, %s33, 1
        %p458 = scmp.lt.s32.totalorder %s34, 0
        %s459 = scalar_select %p458, %s34, 0
        %s460 = sadd.s32 %s459, %s457
        %s461 = smul.addr %s460, 4
        %s462 = scalar_lea.vmem %s0, %s461
        %p463 = pneg %p64
        %p464 = pneg %p61
        %p465 = pneg %p85
        %p466 = pneg %p82
        %p467 = pneg %p106
        %p468 = pneg %p103
        %p469 = pneg %p127
        %p470 = pneg %p124
        %p471 = pneg %p148
        %p472 = pneg %p145
        %p473 = pneg %p169
        %p474 = pneg %p166
        %p475 = pneg %p190
        %p476 = pneg %p187
        %p477 = pneg %p211
        %p478 = pneg %p208
        %p479 = pneg %p232
        %p480 = pneg %p229
        %p481 = pneg %p253
        %p482 = pneg %p250
        %p483 = pneg %p274
        %p484 = pneg %p271
        %p485 = pneg %p295
        %p486 = pneg %p292
        %p487 = pneg %p316
        %p488 = pneg %p313
        %p489 = pneg %p342
        %p490 = pneg %p339
        %s491 = sand.u32 %s329, 1
        %s492 = scalar_lea.sflag [#allocation5], %s491
        %s493 = sand.u32 %s329, 1
        %s494 = scalar_lea.vmem [#allocation9], %s493
        %p495 = scmp.lt.s32.totalorder %s33, 1
        %s496 = scalar_select %p495, %s33, 1
        %p497 = scmp.lt.s32.totalorder %s34, 0
        %s498 = scalar_select %p497, %s34, 0
        %s499 = sadd.s32 %s498, %s496
        %s500 = smul.addr %s499, 4
        %s501 = scalar_lea.vmem %s0, %s500
        %p503 = scmp.eq.s32.totalorder %s34, 0
        // Predicated region
        $region85: #{tpu_custom_call.1} parent=71 // pred_check
          %p504 = pneg %p503
        $region86: #{tpu_custom_call.1} parent=71 // pred_check_branch
          %506 = sbr.rel (%p504) target = $region88
        $region87: #{tpu_custom_call.1} parent=71 // pred_region
          %507 = vst [vmem:[#allocation2] sm:$0xff] -inf
        $region88: #{tpu_custom_call.1} parent=71 // pred_fallthru
          _
        %v508 = vld [vmem:[%s501] sm:$0xf]
        %509 = vxpose.xlu0.b32.start [1/16] %v508, 128
        %510 = vxpose.xlu0.b32.cont [2/16] 0.0, 128
        %511 = vxpose.xlu0.b32.cont [3/16] 0.0, 128
        %512 = vxpose.xlu0.b32.cont [4/16] 0.0, 128
        %513 = vxpose.xlu0.b32.cont [5/16] 0.0, 128
        %514 = vxpose.xlu0.b32.cont [6/16] 0.0, 128
        %515 = vxpose.xlu0.b32.cont [7/16] 0.0, 128
        %516 = vxpose.xlu0.b32.cont [8/16] 0.0, 128
        %517 = vxpose.xlu0.b32.cont [9/16] 0.0, 128
        %518 = vxpose.xlu0.b32.cont [10/16] 0.0, 128
        %519 = vxpose.xlu0.b32.cont [11/16] 0.0, 128
        %520 = vxpose.xlu0.b32.cont [12/16] 0.0, 128
        %521 = vxpose.xlu0.b32.cont [13/16] 0.0, 128
        %522 = vxpose.xlu0.b32.cont [14/16] 0.0, 128
        %523 = vxpose.xlu0.b32.cont [15/16] 0.0, 128
        %524 = vxpose.xlu0.b32.end [16/16] 0.0, 128
        %v525 = vpop.trf.xlu0
        %v526 = vpop.trf.xlu0
        %v527 = vpop.trf.xlu0
        %v528 = vpop.trf.xlu0
        %v529 = vpop.trf.xlu0
        %v530 = vpop.trf.xlu0
        %v531 = vpop.trf.xlu0
        %v532 = vpop.trf.xlu0
        %v533 = vpop.trf.xlu0
        %v534 = vpop.trf.xlu0
        %v535 = vpop.trf.xlu0
        %v536 = vpop.trf.xlu0
        %v537 = vpop.trf.xlu0
        %v538 = vpop.trf.xlu0
        %v539 = vpop.trf.xlu0
        %v540 = vpop.trf.xlu0
        %v541 = vld [vmem:[%s1] sm:$0xf]
        %v542 = vld [vmem:[%s2] sm:$0x1]
        %v544 = vlaneseq
        %v545 = vshrl.u32 %v544, 7
        %v546 = vsub.s32 0, %v545
        %v547 = vrot.slane %v542, %v546
        %vm549 = vcmask 31744
        %v551 = vsel %vm549, %v525, 0
        %v554 = vsel %vm549, %v526, 0
        %vm556 = vcmask 1043456
        %v558 = vsel %vm556, %v541, 0
        %560 = vmatprep.subr.mxu0 0.0
        %561 = vmatpush1.msra.mxu0 %v558
        %562 = vmatprep.subr.mxu0 0.0
        %563 = vmatpush1.msra.mxu0 0.0
        %564 = vmatprep.subr.mxu0 0.0
        %565 = vmatpush1.msra.mxu0 0.0
        %566 = vmatprep.subr.mxu0 0.0
        %567 = vmatpush1.msra.mxu0 0.0
        %568 = vmatprep.subr.mxu0 0.0
        %569 = vmatpush1.msra.mxu0 0.0
        %570 = vmatprep.subr.mxu0 0.0
        %571 = vmatpush1.msra.mxu0 0.0
        %572 = vmatprep.subr.mxu0 0.0
        %573 = vmatpush1.msra.mxu0 0.0
        %574 = vmatprep.subr.mxu0 0.0
        %575 = vmatpush1.msra.mxu0 0.0
        %576 = vmatprep.subr.mxu0 0.0
        %577 = vmatpush1.msra.mxu0 0.0
        %578 = vmatprep.subr.mxu0 0.0
        %579 = vmatpush1.msra.mxu0 0.0
        %580 = vmatprep.subr.mxu0 0.0
        %581 = vmatpush1.msra.mxu0 0.0
        %582 = vmatprep.subr.mxu0 0.0
        %583 = vmatpush1.msra.mxu0 0.0
        %584 = vmatprep.subr.mxu0 0.0
        %585 = vmatpush1.msra.mxu0 0.0
        %586 = vmatprep.subr.mxu0 0.0
        %587 = vmatpush1.msra.mxu0 0.0
        %588 = vmatprep.subr.mxu0 0.0
        %589 = vmatpush1.msra.mxu0 0.0
        %590 = vmatprep.subr.mxu0 0.0
        %591 = vmatpush1.msra.mxu0 0.0
        %592 = vmatprep.subr.mxu0 0.0
        %593 = vmatpush1.msra.mxu0 0.0
        %594 = vmatprep.subr.mxu0 0.0
        %595 = vmatpush1.msra.mxu0 0.0
        %596 = vmatprep.subr.mxu0 0.0
        %597 = vmatpush1.msra.mxu0 0.0
        %598 = vmatprep.subr.mxu0 0.0
        %599 = vmatpush1.msra.mxu0 0.0
        %600 = vmatprep.subr.mxu0 0.0
        %601 = vmatpush1.msra.mxu0 0.0
        %602 = vmatprep.subr.mxu0 0.0
        %603 = vmatpush1.msra.mxu0 0.0
        %604 = vmatprep.subr.mxu0 0.0
        %605 = vmatpush1.msra.mxu0 0.0
        %606 = vmatprep.subr.mxu0 0.0
        %607 = vmatpush1.msra.mxu0 0.0
        %608 = vmatprep.subr.mxu0 0.0
        %609 = vmatpush1.msra.mxu0 0.0
        %610 = vmatprep.subr.mxu0 0.0
        %611 = vmatpush1.msra.mxu0 0.0
        %612 = vmatprep.subr.mxu0 0.0
        %613 = vmatpush1.msra.mxu0 0.0
        %614 = vmatprep.subr.mxu0 0.0
        %615 = vmatpush1.msra.mxu0 0.0
        %616 = vmatprep.subr.mxu0 0.0
        %617 = vmatpush1.msra.mxu0 0.0
        %618 = vmatprep.subr.mxu0 0.0
        %619 = vmatpush1.msra.mxu0 0.0
        %620 = vmatprep.subr.mxu0 0.0
        %621 = vmatpush1.msra.mxu0 0.0
        %622 = vmatprep.subr.mxu0 0.0
        %623 = vmatpush1.msra.mxu0 0.0
        %624 = vmatprep.mubr.f32.mxu0 0.0
        %625 = vmatmul.mubr.f32.gmra.mrb[0].mxu0 %v551
        %v626 = vpop.f32.mrb[0].mxu0
        %v627 = vadd.f32 %v547, %v626
        %v628 = vpop.f32.mrb[0].mxu0
        %629 = vmatprep.mubr.f32.mxu0 0.0
        %630 = vmatmul.mubr.f32.gmra.mrb[0].mxu0 %v554
        %v631 = vpop.f32.mrb[0].mxu0
        %v632 = vadd.f32 %v547, %v631
        %v633 = vpop.f32.mrb[0].mxu0
        %634 = vdwg.mxu0
        %v635 = vmax.f32 %v627, 0.0
        %v636 = vmax.f32 %v632, 0.0
        %v637 = vpack.c.bf16 %v636, %v635
        %v638 = vld [vmem:[%s3] sm:$0xf]
        %v639 = vld [vmem:[%s3 + $0x4] sm:$0xf]
        %v640 = vld [vmem:[%s3 + $0x8] sm:$0xf]
        %v641 = vld [vmem:[%s3 + $0xc] sm:$0xf]
        %v642 = vld [vmem:[%s3 + $0x10] sm:$0xf]
        %v643 = vld [vmem:[%s3 + $0x14] sm:$0xf]
        %v644 = vld [vmem:[%s3 + $0x18] sm:$0xf]
        %v645 = vld [vmem:[%s3 + $0x1c] sm:$0xf]
        %v646 = vld [vmem:[%s4] sm:$0x1]
        %v648 = vlaneseq
        %v649 = vshrl.u32 %v648, 7
        %v650 = vsub.s32 0, %v649
        %v651 = vrot.slane %v646, %v650
        %v661 = vunpack.c.l.b16 %v638
        %v662 = vunpack.c.l.b16 %v639
        %v663 = vunpack.c.l.b16 %v640
        %v664 = vunpack.c.l.b16 %v641
        %v665 = vunpack.c.l.b16 %v642
        %v666 = vunpack.c.l.b16 %v643
        %v667 = vunpack.c.l.b16 %v644
        %v668 = vunpack.c.l.b16 %v645
        %v669 = vpack.c.b16 %v662, %v661
        %v670 = vpack.c.b16 %v664, %v663
        %v671 = vpack.c.b16 %v666, %v665
        %v672 = vpack.c.b16 %v668, %v667
        %vm677 = vcmask 523264
        %v679 = vsel %vm677, %v637, 0
        %681 = vmatprep.subr.bf16.mxu0 0
        %682 = vmatpush1.bf16.msra.mxu0 %v669
        %683 = vmatprep.subr.bf16.mxu0 0
        %684 = vmatpush1.bf16.msra.mxu0 %v670
        %685 = vmatprep.subr.bf16.mxu0 0
        %686 = vmatpush1.bf16.msra.mxu0 %v671
        %687 = vmatprep.subr.bf16.mxu0 0
        %688 = vmatpush1.bf16.msra.mxu0 %v672
        %689 = vmatprep.subr.bf16.mxu0 0
        %690 = vmatpush1.bf16.msra.mxu0 0
        %691 = vmatprep.subr.bf16.mxu0 0
        %692 = vmatpush1.bf16.msra.mxu0 0
        %693 = vmatprep.subr.bf16.mxu0 0
        %694 = vmatpush1.bf16.msra.mxu0 0
        %695 = vmatprep.subr.bf16.mxu0 0
        %696 = vmatpush1.bf16.msra.mxu0 0
        %697 = vmatprep.subr.bf16.mxu0 0
        %698 = vmatpush1.bf16.msra.mxu0 0
        %699 = vmatprep.subr.bf16.mxu0 0
        %700 = vmatpush1.bf16.msra.mxu0 0
        %701 = vmatprep.subr.bf16.mxu0 0
        %702 = vmatpush1.bf16.msra.mxu0 0
        %703 = vmatprep.subr.bf16.mxu0 0
        %704 = vmatpush1.bf16.msra.mxu0 0
        %705 = vmatprep.subr.bf16.mxu0 0
        %706 = vmatpush1.bf16.msra.mxu0 0
        %707 = vmatprep.subr.bf16.mxu0 0
        %708 = vmatpush1.bf16.msra.mxu0 0
        %709 = vmatprep.subr.bf16.mxu0 0
        %710 = vmatpush1.bf16.msra.mxu0 0
        %711 = vmatprep.subr.bf16.mxu0 0
        %712 = vmatpush1.bf16.msra.mxu0 0
        %713 = vmatprep.mubr.bf16.mxu0 0
        %714 = vmatmul.mubr.bf16.gmra.mrb[0].mxu0 %v679
        %v715 = vpop.f32.mrb[0].mxu0
        %v716 = vadd.f32 %v651, %v715
        %v717 = vpop.f32.mrb[0].mxu0
        %v718 = vpop.f32.mrb[0].mxu0
        %v719 = vadd.f32 %v651, %v718
        %v720 = vpop.f32.mrb[0].mxu0
        %721 = vdwg.mxu0
        %v722 = vmax.f32 %v716, 0.0
        %v723 = vmax.f32 %v719, 0.0
        %v724 = vpack.c.bf16 %v723, %v722
        %v725 = vld [vmem:[#allocation3] sm:$0xff]
        %v726 = vld [vmem:[#allocation3 + $0x8] sm:$0xff]
        %v727 = vld [vmem:[#allocation3 + $0x10] sm:$0xff]
        %v728 = vld [vmem:[#allocation3 + $0x18] sm:$0xff]
        %v729 = vld [vmem:[#allocation3 + $0x20] sm:$0xff]
        %v730 = vld [vmem:[#allocation3 + $0x28] sm:$0xff]
        %v731 = vld [vmem:[#allocation3 + $0x30] sm:$0xff]
        %v732 = vld [vmem:[#allocation3 + $0x38] sm:$0xff]
        %v733 = vld [vmem:[#allocation3 + $0x40] sm:$0xff]
        %v734 = vld [vmem:[#allocation3 + $0x48] sm:$0xff]
        %v735 = vld [vmem:[#allocation3 + $0x50] sm:$0xff]
        %v736 = vld [vmem:[#allocation3 + $0x58] sm:$0xff]
        %v737 = vld [vmem:[#allocation3 + $0x60] sm:$0xff]
        %v738 = vld [vmem:[#allocation3 + $0x68] sm:$0xff]
        %v739 = vld [vmem:[#allocation3 + $0x70] sm:$0xff]
        %v740 = vld [vmem:[#allocation3 + $0x78] sm:$0xff]
        %v741 = vld [vmem:[#allocation3 + $0x80] sm:$0xff]
        %v742 = vld [vmem:[#allocation3 + $0x88] sm:$0xff]
        %v743 = vld [vmem:[#allocation3 + $0x90] sm:$0xff]
        %v744 = vld [vmem:[#allocation3 + $0x98] sm:$0xff]
        %v745 = vld [vmem:[#allocation3 + $0xa0] sm:$0xff]
        %v746 = vld [vmem:[#allocation3 + $0xa8] sm:$0xff]
        %v747 = vld [vmem:[#allocation3 + $0xb0] sm:$0xff]
        %v748 = vld [vmem:[#allocation3 + $0xb8] sm:$0xff]
        %v749 = vld [vmem:[#allocation3 + $0xc0] sm:$0xff]
        %v750 = vld [vmem:[#allocation3 + $0xc8] sm:$0xff]
        %v751 = vld [vmem:[#allocation3 + $0xd0] sm:$0xff]
        %v752 = vld [vmem:[#allocation3 + $0xd8] sm:$0xff]
        %v753 = vld [vmem:[#allocation3 + $0xe0] sm:$0xff]
        %v754 = vld [vmem:[#allocation3 + $0xe8] sm:$0xff]
        %v755 = vld [vmem:[#allocation3 + $0xf0] sm:$0xff]
        %v756 = vld [vmem:[#allocation3 + $0xf8] sm:$0xff]
        %v757 = vld [vmem:[#allocation3 + $0x100] sm:$0xff]
        %v758 = vld [vmem:[#allocation3 + $0x108] sm:$0xff]
        %v759 = vld [vmem:[#allocation3 + $0x110] sm:$0xff]
        %v760 = vld [vmem:[#allocation3 + $0x118] sm:$0xff]
        %v761 = vld [vmem:[#allocation3 + $0x120] sm:$0xff]
        %v762 = vld [vmem:[#allocation3 + $0x128] sm:$0xff]
        %v763 = vld [vmem:[#allocation3 + $0x130] sm:$0xff]
        %v764 = vld [vmem:[#allocation3 + $0x138] sm:$0xff]
        %v765 = vld [vmem:[#allocation3 + $0x140] sm:$0xff]
        %v766 = vld [vmem:[#allocation3 + $0x148] sm:$0xff]
        %v767 = vld [vmem:[#allocation3 + $0x150] sm:$0xff]
        %v768 = vld [vmem:[#allocation3 + $0x158] sm:$0xff]
        %v769 = vld [vmem:[#allocation3 + $0x160] sm:$0xff]
        %v770 = vld [vmem:[#allocation3 + $0x168] sm:$0xff]
        %v771 = vld [vmem:[#allocation3 + $0x170] sm:$0xff]
        %v772 = vld [vmem:[#allocation3 + $0x178] sm:$0xff]
        %v773 = vld [vmem:[#allocation3 + $0x180] sm:$0xff]
        %v774 = vld [vmem:[#allocation3 + $0x188] sm:$0xff]
        %v775 = vld [vmem:[#allocation3 + $0x190] sm:$0xff]
        %v776 = vld [vmem:[#allocation3 + $0x198] sm:$0xff]
        %v777 = vld [vmem:[#allocation3 + $0x1a0] sm:$0xff]
        %v778 = vld [vmem:[#allocation3 + $0x1a8] sm:$0xff]
        %v779 = vld [vmem:[#allocation3 + $0x1b0] sm:$0xff]
        %v780 = vld [vmem:[#allocation3 + $0x1b8] sm:$0xff]
        %v781 = vld [vmem:[#allocation3 + $0x1c0] sm:$0xff]
        %v782 = vld [vmem:[#allocation3 + $0x1c8] sm:$0xff]
        %v783 = vld [vmem:[#allocation3 + $0x1d0] sm:$0xff]
        %v784 = vld [vmem:[#allocation3 + $0x1d8] sm:$0xff]
        %v785 = vld [vmem:[#allocation3 + $0x1e0] sm:$0xff]
        %v786 = vld [vmem:[#allocation3 + $0x1e8] sm:$0xff]
        %v787 = vld [vmem:[#allocation3 + $0x1f0] sm:$0xff]
        %v788 = vld [vmem:[#allocation3 + $0x1f8] sm:$0xff]
        %v853 = vunpack.c.l.b16 %v725
        %v854 = vunpack.c.h.b16 %v725
        %v855 = vunpack.c.l.b16 %v726
        %v856 = vunpack.c.h.b16 %v726
        %v857 = vunpack.c.l.b16 %v727
        %v858 = vunpack.c.h.b16 %v727
        %v859 = vunpack.c.l.b16 %v728
        %v860 = vunpack.c.h.b16 %v728
        %v861 = vunpack.c.l.b16 %v729
        %v862 = vunpack.c.h.b16 %v729
        %v863 = vunpack.c.l.b16 %v730
        %v864 = vunpack.c.h.b16 %v730
        %v865 = vunpack.c.l.b16 %v731
        %v866 = vunpack.c.h.b16 %v731
        %v867 = vunpack.c.l.b16 %v732
        %v868 = vunpack.c.h.b16 %v732
        %v869 = vunpack.c.l.b16 %v733
        %v870 = vunpack.c.h.b16 %v733
        %v871 = vunpack.c.l.b16 %v734
        %v872 = vunpack.c.h.b16 %v734
        %v873 = vunpack.c.l.b16 %v735
        %v874 = vunpack.c.h.b16 %v735
        %v875 = vunpack.c.l.b16 %v736
        %v876 = vunpack.c.h.b16 %v736
        %v877 = vunpack.c.l.b16 %v737
        %v878 = vunpack.c.h.b16 %v737
        %v879 = vunpack.c.l.b16 %v738
        %v880 = vunpack.c.h.b16 %v738
        %v881 = vunpack.c.l.b16 %v739
        %v882 = vunpack.c.h.b16 %v739
        %v883 = vunpack.c.l.b16 %v740
        %v884 = vunpack.c.h.b16 %v740
        %v885 = vunpack.c.l.b16 %v741
        %v886 = vunpack.c.h.b16 %v741
        %v887 = vunpack.c.l.b16 %v742
        %v888 = vunpack.c.h.b16 %v742
        %v889 = vunpack.c.l.b16 %v743
        %v890 = vunpack.c.h.b16 %v743
        %v891 = vunpack.c.l.b16 %v744
        %v892 = vunpack.c.h.b16 %v744
        %v893 = vunpack.c.l.b16 %v745
        %v894 = vunpack.c.h.b16 %v745
        %v895 = vunpack.c.l.b16 %v746
        %v896 = vunpack.c.h.b16 %v746
        %v897 = vunpack.c.l.b16 %v747
        %v898 = vunpack.c.h.b16 %v747
        %v899 = vunpack.c.l.b16 %v748
        %v900 = vunpack.c.h.b16 %v748
        %v901 = vunpack.c.l.b16 %v749
        %v902 = vunpack.c.h.b16 %v749
        %v903 = vunpack.c.l.b16 %v750
        %v904 = vunpack.c.h.b16 %v750
        %v905 = vunpack.c.l.b16 %v751
        %v906 = vunpack.c.h.b16 %v751
        %v907 = vunpack.c.l.b16 %v752
        %v908 = vunpack.c.h.b16 %v752
        %v909 = vunpack.c.l.b16 %v753
        %v910 = vunpack.c.h.b16 %v753
        %v911 = vunpack.c.l.b16 %v754
        %v912 = vunpack.c.h.b16 %v754
        %v913 = vunpack.c.l.b16 %v755
        %v914 = vunpack.c.h.b16 %v755
        %v915 = vunpack.c.l.b16 %v756
        %v916 = vunpack.c.h.b16 %v756
        %v917 = vunpack.c.l.b16 %v757
        %v918 = vunpack.c.h.b16 %v757
        %v919 = vunpack.c.l.b16 %v758
        %v920 = vunpack.c.h.b16 %v758
        %v921 = vunpack.c.l.b16 %v759
        %v922 = vunpack.c.h.b16 %v759
        %v923 = vunpack.c.l.b16 %v760
        %v924 = vunpack.c.h.b16 %v760
        %v925 = vunpack.c.l.b16 %v761
        %v926 = vunpack.c.h.b16 %v761
        %v927 = vunpack.c.l.b16 %v762
        %v928 = vunpack.c.h.b16 %v762
        %v929 = vunpack.c.l.b16 %v763
        %v930 = vunpack.c.h.b16 %v763
        %v931 = vunpack.c.l.b16 %v764
        %v932 = vunpack.c.h.b16 %v764
        %v933 = vunpack.c.l.b16 %v765
        %v934 = vunpack.c.h.b16 %v765
        %v935 = vunpack.c.l.b16 %v766
        %v936 = vunpack.c.h.b16 %v766
        %v937 = vunpack.c.l.b16 %v767
        %v938 = vunpack.c.h.b16 %v767
        %v939 = vunpack.c.l.b16 %v768
        %v940 = vunpack.c.h.b16 %v768
        %v941 = vunpack.c.l.b16 %v769
        %v942 = vunpack.c.h.b16 %v769
        %v943 = vunpack.c.l.b16 %v770
        %v944 = vunpack.c.h.b16 %v770
        %v945 = vunpack.c.l.b16 %v771
        %v946 = vunpack.c.h.b16 %v771
        %v947 = vunpack.c.l.b16 %v772
        %v948 = vunpack.c.h.b16 %v772
        %v949 = vunpack.c.l.b16 %v773
        %v950 = vunpack.c.h.b16 %v773
        %v951 = vunpack.c.l.b16 %v774
        %v952 = vunpack.c.h.b16 %v774
        %v953 = vunpack.c.l.b16 %v775
        %v954 = vunpack.c.h.b16 %v775
        %v955 = vunpack.c.l.b16 %v776
        %v956 = vunpack.c.h.b16 %v776
        %v957 = vunpack.c.l.b16 %v777
        %v958 = vunpack.c.h.b16 %v777
        %v959 = vunpack.c.l.b16 %v778
        %v960 = vunpack.c.h.b16 %v778
        %v961 = vunpack.c.l.b16 %v779
        %v962 = vunpack.c.h.b16 %v779
        %v963 = vunpack.c.l.b16 %v780
        %v964 = vunpack.c.h.b16 %v780
        %v965 = vunpack.c.l.b16 %v781
        %v966 = vunpack.c.h.b16 %v781
        %v967 = vunpack.c.l.b16 %v782
        %v968 = vunpack.c.h.b16 %v782
        %v969 = vunpack.c.l.b16 %v783
        %v970 = vunpack.c.h.b16 %v783
        %v971 = vunpack.c.l.b16 %v784
        %v972 = vunpack.c.h.b16 %v784
        %v973 = vunpack.c.l.b16 %v785
        %v974 = vunpack.c.h.b16 %v785
        %v975 = vunpack.c.l.b16 %v786
        %v976 = vunpack.c.h.b16 %v786
        %v977 = vunpack.c.l.b16 %v787
        %v978 = vunpack.c.h.b16 %v787
        %v979 = vunpack.c.l.b16 %v788
        %v980 = vunpack.c.h.b16 %v788
        %v981 = vpack.c.b16 %v861, %v853
        %v982 = vpack.c.b16 %v862, %v854
        %v983 = vpack.c.b16 %v863, %v855
        %v984 = vpack.c.b16 %v864, %v856
        %v985 = vpack.c.b16 %v865, %v857
        %v986 = vpack.c.b16 %v866, %v858
        %v987 = vpack.c.b16 %v867, %v859
        %v988 = vpack.c.b16 %v868, %v860
        %v989 = vpack.c.b16 %v877, %v869
        %v990 = vpack.c.b16 %v878, %v870
        %v991 = vpack.c.b16 %v879, %v871
        %v992 = vpack.c.b16 %v880, %v872
        %v993 = vpack.c.b16 %v881, %v873
        %v994 = vpack.c.b16 %v882, %v874
        %v995 = vpack.c.b16 %v883, %v875
        %v996 = vpack.c.b16 %v884, %v876
        %v997 = vpack.c.b16 %v893, %v885
        %v998 = vpack.c.b16 %v894, %v886
        %v999 = vpack.c.b16 %v895, %v887
        %v1000 = vpack.c.b16 %v896, %v888
        %v1001 = vpack.c.b16 %v897, %v889
        %v1002 = vpack.c.b16 %v898, %v890
        %v1003 = vpack.c.b16 %v899, %v891
        %v1004 = vpack.c.b16 %v900, %v892
        %v1005 = vpack.c.b16 %v909, %v901
        %v1006 = vpack.c.b16 %v910, %v902
        %v1007 = vpack.c.b16 %v911, %v903
        %v1008 = vpack.c.b16 %v912, %v904
        %v1009 = vpack.c.b16 %v913, %v905
        %v1010 = vpack.c.b16 %v914, %v906
        %v1011 = vpack.c.b16 %v915, %v907
        %v1012 = vpack.c.b16 %v916, %v908
        %v1013 = vpack.c.b16 %v925, %v917
        %v1014 = vpack.c.b16 %v926, %v918
        %v1015 = vpack.c.b16 %v927, %v919
        %v1016 = vpack.c.b16 %v928, %v920
        %v1017 = vpack.c.b16 %v929, %v921
        %v1018 = vpack.c.b16 %v930, %v922
        %v1019 = vpack.c.b16 %v931, %v923
        %v1020 = vpack.c.b16 %v932, %v924
        %v1021 = vpack.c.b16 %v941, %v933
        %v1022 = vpack.c.b16 %v942, %v934
        %v1023 = vpack.c.b16 %v943, %v935
        %v1024 = vpack.c.b16 %v944, %v936
        %v1025 = vpack.c.b16 %v945, %v937
        %v1026 = vpack.c.b16 %v946, %v938
        %v1027 = vpack.c.b16 %v947, %v939
        %v1028 = vpack.c.b16 %v948, %v940
        %v1029 = vpack.c.b16 %v957, %v949
        %v1030 = vpack.c.b16 %v958, %v950
        %v1031 = vpack.c.b16 %v959, %v951
        %v1032 = vpack.c.b16 %v960, %v952
        %v1033 = vpack.c.b16 %v961, %v953
        %v1034 = vpack.c.b16 %v962, %v954
        %v1035 = vpack.c.b16 %v963, %v955
        %v1036 = vpack.c.b16 %v964, %v956
        %v1037 = vpack.c.b16 %v973, %v965
        %v1038 = vpack.c.b16 %v974, %v966
        %v1039 = vpack.c.b16 %v975, %v967
        %v1040 = vpack.c.b16 %v976, %v968
        %v1041 = vpack.c.b16 %v977, %v969
        %v1042 = vpack.c.b16 %v978, %v970
        %v1043 = vpack.c.b16 %v979, %v971
        %v1044 = vpack.c.b16 %v980, %v972
        %1109 = vmatprep.subr.bf16.mxu0 %v982
        %1110 = vmatpush1.bf16.msra.mxu0 %v981
        %1111 = vmatprep.subr.bf16.mxu0 %v990
        %1112 = vmatpush1.bf16.msra.mxu0 %v989
        %1113 = vmatprep.subr.bf16.mxu0 %v998
        %1114 = vmatpush1.bf16.msra.mxu0 %v997
        %1115 = vmatprep.subr.bf16.mxu0 %v1006
        %1116 = vmatpush1.bf16.msra.mxu0 %v1005
        %1117 = vmatprep.subr.bf16.mxu0 %v1014
        %1118 = vmatpush1.bf16.msra.mxu0 %v1013
        %1119 = vmatprep.subr.bf16.mxu0 %v1022
        %1120 = vmatpush1.bf16.msra.mxu0 %v1021
        %1121 = vmatprep.subr.bf16.mxu0 %v1030
        %1122 = vmatpush1.bf16.msra.mxu0 %v1029
        %1123 = vmatprep.subr.bf16.mxu0 %v1038
        %1124 = vmatpush1.bf16.msra.mxu0 %v1037
        %1125 = vmatprep.subr.bf16.mxu0 0
        %1126 = vmatpush1.bf16.msra.mxu0 0
        %1127 = vmatprep.subr.bf16.mxu0 0
        %1128 = vmatpush1.bf16.msra.mxu0 0
        %1129 = vmatprep.subr.bf16.mxu0 0
        %1130 = vmatpush1.bf16.msra.mxu0 0
        %1131 = vmatprep.subr.bf16.mxu0 0
        %1132 = vmatpush1.bf16.msra.mxu0 0
        %1133 = vmatprep.subr.bf16.mxu0 0
        %1134 = vmatpush1.bf16.msra.mxu0 0
        %1135 = vmatprep.subr.bf16.mxu0 0
        %1136 = vmatpush1.bf16.msra.mxu0 0
        %1137 = vmatprep.subr.bf16.mxu0 0
        %1138 = vmatpush1.bf16.msra.mxu0 0
        %1139 = vmatprep.subr.bf16.mxu0 0
        %1140 = vmatpush1.bf16.msra.mxu0 0
        %1141 = vmatprep.mubr.bf16.mxu0 0
        %1142 = vmatmul.mubr.bf16.gmra.mrb[0].mxu0 %v724
        %v1143 = vpop.f32.mrb[0].mxu0
        %v1144 = vadd.f32 0.0, %v1143
        %v1145 = vpop.f32.mrb[0].mxu0
        %v1146 = vadd.f32 0.0, %v1145
        %v1147 = vpop.f32.mrb[0].mxu0
        %v1148 = vadd.f32 0.0, %v1147
        %v1149 = vpop.f32.mrb[0].mxu0
        %v1150 = vadd.f32 0.0, %v1149
        %1151 = vdwg.mxu0
        %1152 = vmatprep.subr.bf16.mxu0 %v984
        %1153 = vmatpush1.bf16.msra.mxu0 %v983
        %1154 = vmatprep.subr.bf16.mxu0 %v992
        %1155 = vmatpush1.bf16.msra.mxu0 %v991
        %1156 = vmatprep.subr.bf16.mxu0 %v1000
        %1157 = vmatpush1.bf16.msra.mxu0 %v999
        %1158 = vmatprep.subr.bf16.mxu0 %v1008
        %1159 = vmatpush1.bf16.msra.mxu0 %v1007
        %1160 = vmatprep.subr.bf16.mxu0 %v1016
        %1161 = vmatpush1.bf16.msra.mxu0 %v1015
        %1162 = vmatprep.subr.bf16.mxu0 %v1024
        %1163 = vmatpush1.bf16.msra.mxu0 %v1023
        %1164 = vmatprep.subr.bf16.mxu0 %v1032
        %1165 = vmatpush1.bf16.msra.mxu0 %v1031
        %1166 = vmatprep.subr.bf16.mxu0 %v1040
        %1167 = vmatpush1.bf16.msra.mxu0 %v1039
        %1168 = vmatprep.subr.bf16.mxu0 0
        %1169 = vmatpush1.bf16.msra.mxu0 0
        %1170 = vmatprep.subr.bf16.mxu0 0
        %1171 = vmatpush1.bf16.msra.mxu0 0
        %1172 = vmatprep.subr.bf16.mxu0 0
        %1173 = vmatpush1.bf16.msra.mxu0 0
        %1174 = vmatprep.subr.bf16.mxu0 0
        %1175 = vmatpush1.bf16.msra.mxu0 0
        %1176 = vmatprep.subr.bf16.mxu0 0
        %1177 = vmatpush1.bf16.msra.mxu0 0
        %1178 = vmatprep.subr.bf16.mxu0 0
        %1179 = vmatpush1.bf16.msra.mxu0 0
        %1180 = vmatprep.subr.bf16.mxu0 0
        %1181 = vmatpush1.bf16.msra.mxu0 0
        %1182 = vmatprep.subr.bf16.mxu0 0
        %1183 = vmatpush1.bf16.msra.mxu0 0
        %1184 = vmatprep.mubr.bf16.mxu0 0
        %1185 = vmatmul.mubr.bf16.gmra.mrb[0].mxu0 %v724
        %v1186 = vpop.f32.mrb[0].mxu0
        %v1187 = vadd.f32 0.0, %v1186
        %v1188 = vpop.f32.mrb[0].mxu0
        %v1189 = vadd.f32 0.0, %v1188
        %v1190 = vpop.f32.mrb[0].mxu0
        %v1191 = vadd.f32 0.0, %v1190
        %v1192 = vpop.f32.mrb[0].mxu0
        %v1193 = vadd.f32 0.0, %v1192
        %1194 = vdwg.mxu0
        %1195 = vmatprep.subr.bf16.mxu0 %v986
        %1196 = vmatpush1.bf16.msra.mxu0 %v985
        %1197 = vmatprep.subr.bf16.mxu0 %v994
        %1198 = vmatpush1.bf16.msra.mxu0 %v993
        %1199 = vmatprep.subr.bf16.mxu0 %v1002
        %1200 = vmatpush1.bf16.msra.mxu0 %v1001
        %1201 = vmatprep.subr.bf16.mxu0 %v1010
        %1202 = vmatpush1.bf16.msra.mxu0 %v1009
        %1203 = vmatprep.subr.bf16.mxu0 %v1018
        %1204 = vmatpush1.bf16.msra.mxu0 %v1017
        %1205 = vmatprep.subr.bf16.mxu0 %v1026
        %1206 = vmatpush1.bf16.msra.mxu0 %v1025
        %1207 = vmatprep.subr.bf16.mxu0 %v1034
        %1208 = vmatpush1.bf16.msra.mxu0 %v1033
        %1209 = vmatprep.subr.bf16.mxu0 %v1042
        %1210 = vmatpush1.bf16.msra.mxu0 %v1041
        %1211 = vmatprep.subr.bf16.mxu0 0
        %1212 = vmatpush1.bf16.msra.mxu0 0
        %1213 = vmatprep.subr.bf16.mxu0 0
        %1214 = vmatpush1.bf16.msra.mxu0 0
        %1215 = vmatprep.subr.bf16.mxu0 0
        %1216 = vmatpush1.bf16.msra.mxu0 0
        %1217 = vmatprep.subr.bf16.mxu0 0
        %1218 = vmatpush1.bf16.msra.mxu0 0
        %1219 = vmatprep.subr.bf16.mxu0 0
        %1220 = vmatpush1.bf16.msra.mxu0 0
        %1221 = vmatprep.subr.bf16.mxu0 0
        %1222 = vmatpush1.bf16.msra.mxu0 0
        %1223 = vmatprep.subr.bf16.mxu0 0
        %1224 = vmatpush1.bf16.msra.mxu0 0
        %1225 = vmatprep.subr.bf16.mxu0 0
        %1226 = vmatpush1.bf16.msra.mxu0 0
        %1227 = vmatprep.mubr.bf16.mxu0 0
        %1228 = vmatmul.mubr.bf16.gmra.mrb[0].mxu0 %v724
        %v1229 = vpop.f32.mrb[0].mxu0
        %v1230 = vadd.f32 0.0, %v1229
        %v1231 = vpop.f32.mrb[0].mxu0
        %v1232 = vadd.f32 0.0, %v1231
        %v1233 = vpop.f32.mrb[0].mxu0
        %v1234 = vadd.f32 0.0, %v1233
        %v1235 = vpop.f32.mrb[0].mxu0
        %v1236 = vadd.f32 0.0, %v1235
        %1237 = vdwg.mxu0
        %1238 = vmatprep.subr.bf16.mxu0 %v988
        %1239 = vmatpush1.bf16.msra.mxu0 %v987
        %1240 = vmatprep.subr.bf16.mxu0 %v996
        %1241 = vmatpush1.bf16.msra.mxu0 %v995
        %1242 = vmatprep.subr.bf16.mxu0 %v1004
        %1243 = vmatpush1.bf16.msra.mxu0 %v1003
        %1244 = vmatprep.subr.bf16.mxu0 %v1012
        %1245 = vmatpush1.bf16.msra.mxu0 %v1011
        %1246 = vmatprep.subr.bf16.mxu0 %v1020
        %1247 = vmatpush1.bf16.msra.mxu0 %v1019
        %1248 = vmatprep.subr.bf16.mxu0 %v1028
        %1249 = vmatpush1.bf16.msra.mxu0 %v1027
        %1250 = vmatprep.subr.bf16.mxu0 %v1036
        %1251 = vmatpush1.bf16.msra.mxu0 %v1035
        %1252 = vmatprep.subr.bf16.mxu0 %v1044
        %1253 = vmatpush1.bf16.msra.mxu0 %v1043
        %1254 = vmatprep.subr.bf16.mxu0 0
        %1255 = vmatpush1.bf16.msra.mxu0 0
        %1256 = vmatprep.subr.bf16.mxu0 0
        %1257 = vmatpush1.bf16.msra.mxu0 0
        %1258 = vmatprep.subr.bf16.mxu0 0
        %1259 = vmatpush1.bf16.msra.mxu0 0
        %1260 = vmatprep.subr.bf16.mxu0 0
        %1261 = vmatpush1.bf16.msra.mxu0 0
        %1262 = vmatprep.subr.bf16.mxu0 0
        %1263 = vmatpush1.bf16.msra.mxu0 0
        %1264 = vmatprep.subr.bf16.mxu0 0
        %1265 = vmatpush1.bf16.msra.mxu0 0
        %1266 = vmatprep.subr.bf16.mxu0 0
        %1267 = vmatpush1.bf16.msra.mxu0 0
        %1268 = vmatprep.subr.bf16.mxu0 0
        %1269 = vmatpush1.bf16.msra.mxu0 0
        %1270 = vmatprep.mubr.bf16.mxu0 0
        %1271 = vmatmul.mubr.bf16.gmra.mrb[0].mxu0 %v724
        %v1272 = vpop.f32.mrb[0].mxu0
        %v1273 = vadd.f32 0.0, %v1272
        %v1274 = vpop.f32.mrb[0].mxu0
        %v1275 = vadd.f32 0.0, %v1274
        %v1276 = vpop.f32.mrb[0].mxu0
        %v1277 = vadd.f32 0.0, %v1276
        %v1278 = vpop.f32.mrb[0].mxu0
        %v1279 = vadd.f32 0.0, %v1278
        %1280 = vdwg.mxu0
        %v1281 = vld [vmem:[#allocation2] sm:$0xff]
        %v1282 = vmax.f32 %v1144, %v1148
        %v1283 = vrot.slane %v1282, 4
        %v1284 = vmax.f32 %v1282, %v1283
        %v1285 = vrot.slane %v1284, 2
        %v1286 = vmax.f32 %v1284, %v1285
        %v1287 = vrot.slane %v1286, 1
        %v1288 = vmax.f32 %v1286, %v1287
        %v1289 = vmax.f32 %v1146, %v1150
        %v1290 = vrot.slane %v1289, 4
        %v1291 = vmax.f32 %v1289, %v1290
        %v1292 = vrot.slane %v1291, 2
        %v1293 = vmax.f32 %v1291, %v1292
        %v1294 = vrot.slane %v1293, 1
        %v1295 = vmax.f32 %v1293, %v1294
        %v1296 = vmax.f32 %v1187, %v1191
        %v1297 = vrot.slane %v1296, 4
        %v1298 = vmax.f32 %v1296, %v1297
        %v1299 = vrot.slane %v1298, 2
        %v1300 = vmax.f32 %v1298, %v1299
        %v1301 = vrot.slane %v1300, 1
        %v1302 = vmax.f32 %v1300, %v1301
        %v1303 = vmax.f32 %v1189, %v1193
        %v1304 = vrot.slane %v1303, 4
        %v1305 = vmax.f32 %v1303, %v1304
        %v1306 = vrot.slane %v1305, 2
        %v1307 = vmax.f32 %v1305, %v1306
        %v1308 = vrot.slane %v1307, 1
        %v1309 = vmax.f32 %v1307, %v1308
        %v1310 = vmax.f32 %v1230, %v1234
        %v1311 = vrot.slane %v1310, 4
        %v1312 = vmax.f32 %v1310, %v1311
        %v1313 = vrot.slane %v1312, 2
        %v1314 = vmax.f32 %v1312, %v1313
        %v1315 = vrot.slane %v1314, 1
        %v1316 = vmax.f32 %v1314, %v1315
        %v1317 = vmax.f32 %v1232, %v1236
        %v1318 = vrot.slane %v1317, 4
        %v1319 = vmax.f32 %v1317, %v1318
        %v1320 = vrot.slane %v1319, 2
        %v1321 = vmax.f32 %v1319, %v1320
        %v1322 = vrot.slane %v1321, 1
        %v1323 = vmax.f32 %v1321, %v1322
        %v1324 = vmax.f32 %v1273, %v1277
        %v1325 = vrot.slane %v1324, 4
        %v1326 = vmax.f32 %v1324, %v1325
        %v1327 = vrot.slane %v1326, 2
        %v1328 = vmax.f32 %v1326, %v1327
        %v1329 = vrot.slane %v1328, 1
        %v1330 = vmax.f32 %v1328, %v1329
        %v1331 = vmax.f32 %v1275, %v1279
        %v1332 = vrot.slane %v1331, 4
        %v1333 = vmax.f32 %v1331, %v1332
        %v1334 = vrot.slane %v1333, 2
        %v1335 = vmax.f32 %v1333, %v1334
        %v1336 = vrot.slane %v1335, 1
        %v1337 = vmax.f32 %v1335, %v1336
        %v1346 = vcombine.low %v1288, %v1295
        %v1347 = vcombine.low %v1302, %v1309
        %v1348 = vcombine.low %v1316, %v1323
        %v1349 = vcombine.low %v1330, %v1337
        %v1351 = vunpack.c.l.s4 1966171168
        %v1352 = vunpack.c.0.s8 %v1351
        %v1353 = vlaneseq
        %v1354 = vshrl.u32 %v1353, 7
        %v1355 = vsub.s32 %v1352, %v1354
        %v1356 = vrot.slane %v1346, %v1355
        %v1358 = vunpack.c.l.s4 1966171168
        %v1359 = vunpack.c.0.s8 %v1358
        %v1360 = vlaneseq
        %v1361 = vshrl.u32 %v1360, 7
        %v1362 = vsub.s32 %v1359, %v1361
        %v1363 = vrot.slane %v1347, %v1362
        %v1365 = vunpack.c.l.s4 1966171168
        %v1366 = vunpack.c.0.s8 %v1365
        %v1367 = vlaneseq
        %v1368 = vshrl.u32 %v1367, 7
        %v1369 = vsub.s32 %v1366, %v1368
        %v1370 = vrot.slane %v1348, %v1369
        %v1372 = vunpack.c.l.s4 1966171168
        %v1373 = vunpack.c.0.s8 %v1372
        %v1374 = vlaneseq
        %v1375 = vshrl.u32 %v1374, 7
        %v1376 = vsub.s32 %v1373, %v1375
        %v1377 = vrot.slane %v1349, %v1376
        %v1378 = vcombine.low %v1356, %v1363
        %v1379 = vcombine.low %v1370, %v1377
        %v1381 = vunpack.c.l.s4 1966171168
        %v1382 = vunpack.c.0.s8 %v1381
        %v1383 = vlaneseq
        %v1384 = vshrl.u32 %v1383, 7
        %v1385 = vsub.s32 %v1382, %v1384
        %v1386 = vrot.slane %v1378, %v1385
        %v1388 = vunpack.c.l.s4 1966171168
        %v1389 = vunpack.c.0.s8 %v1388
        %v1390 = vlaneseq
        %v1391 = vshrl.u32 %v1390, 7
        %v1392 = vsub.s32 %v1389, %v1391
        %v1393 = vrot.slane %v1379, %v1392
        %v1394 = vcombine.low %v1386, %v1393
        %v1396 = vmax.f32 %v1281, %v1394
        %1397 = vst [vmem:[#allocation2] sm:$0xff] %v1396
        // Predicated region
        $region89: #{tpu_custom_call.1} parent=71 // pred_check
          %p1398 = pneg %p503
        $region90: #{tpu_custom_call.1} parent=71 // pred_check_branch
          %1400 = sbr.rel (%p1398) target = $region92
        $region91: #{tpu_custom_call.1} parent=71 // pred_region
          %v1401 = vld [vmem:[#allocation2] sm:$0xff]
          %v1402 = vld [vmem:[%s6] sm:$0xff]
          %v1403 = vadd.f32 %v1401, %v1402
          %v1404 = vmax.f32 %v1403, 0.0
          %v1406 = vlaneseq
          %v1407 = vshrl.u32 %v1406, 7
          %v1408 = vsub.s32 0, %v1407
          %v1409 = vrot.slane %v1404, %v1408
          %v1410 = vlaneseq
          %v1411 = vshrl.u32 %v1410, 7
          %v1412 = vsub.s32 1, %v1411
          %v1413 = vrot.slane %v1404, %v1412
          %v1414 = vlaneseq
          %v1415 = vshrl.u32 %v1414, 7
          %v1416 = vsub.s32 2, %v1415
          %v1417 = vrot.slane %v1404, %v1416
          %v1418 = vlaneseq
          %v1419 = vshrl.u32 %v1418, 7
          %v1420 = vsub.s32 3, %v1419
          %v1421 = vrot.slane %v1404, %v1420
          %v1422 = vlaneseq
          %v1423 = vshrl.u32 %v1422, 7
          %v1424 = vsub.s32 4, %v1423
          %v1425 = vrot.slane %v1404, %v1424
          %v1426 = vlaneseq
          %v1427 = vshrl.u32 %v1426, 7
          %v1428 = vsub.s32 5, %v1427
          %v1429 = vrot.slane %v1404, %v1428
          %v1430 = vlaneseq
          %v1431 = vshrl.u32 %v1430, 7
          %v1432 = vsub.s32 6, %v1431
          %v1433 = vrot.slane %v1404, %v1432
          %v1434 = vlaneseq
          %v1435 = vshrl.u32 %v1434, 7
          %v1436 = vsub.s32 7, %v1435
          %v1437 = vrot.slane %v1404, %v1436
          %v1446 = vpack.c.bf16 %v1409, %v1409
          %v1447 = vpack.c.bf16 %v1413, %v1413
          %v1448 = vpack.c.bf16 %v1417, %v1417
          %v1449 = vpack.c.bf16 %v1421, %v1421
          %v1450 = vpack.c.bf16 %v1425, %v1425
          %v1451 = vpack.c.bf16 %v1429, %v1429
          %v1452 = vpack.c.bf16 %v1433, %v1433
          %v1453 = vpack.c.bf16 %v1437, %v1437
          %v1454 = vld [vmem:[#allocation6] sm:$0xff]
          %v1455 = vld [vmem:[#allocation6 + $0x8] sm:$0xff]
          %v1456 = vld [vmem:[#allocation6 + $0x10] sm:$0xff]
          %v1457 = vld [vmem:[#allocation6 + $0x18] sm:$0xff]
          %v1458 = vld [vmem:[#allocation6 + $0x20] sm:$0xff]
          %v1459 = vld [vmem:[#allocation6 + $0x28] sm:$0xff]
          %v1460 = vld [vmem:[#allocation6 + $0x30] sm:$0xff]
          %v1461 = vld [vmem:[#allocation6 + $0x38] sm:$0xff]
          %v1462 = vld [vmem:[#allocation6 + $0x40] sm:$0xff]
          %v1463 = vld [vmem:[#allocation6 + $0x48] sm:$0xff]
          %v1464 = vld [vmem:[#allocation6 + $0x50] sm:$0xff]
          %v1465 = vld [vmem:[#allocation6 + $0x58] sm:$0xff]
          %v1466 = vld [vmem:[#allocation6 + $0x60] sm:$0xff]
          %v1467 = vld [vmem:[#allocation6 + $0x68] sm:$0xff]
          %v1468 = vld [vmem:[#allocation6 + $0x70] sm:$0xff]
          %v1469 = vld [vmem:[#allocation6 + $0x78] sm:$0xff]
          %v1470 = vld [vmem:[#allocation6 + $0x80] sm:$0xff]
          %v1471 = vld [vmem:[#allocation6 + $0x88] sm:$0xff]
          %v1472 = vld [vmem:[#allocation6 + $0x90] sm:$0xff]
          %v1473 = vld [vmem:[#allocation6 + $0x98] sm:$0xff]
          %v1474 = vld [vmem:[#allocation6 + $0xa0] sm:$0xff]
          %v1475 = vld [vmem:[#allocation6 + $0xa8] sm:$0xff]
          %v1476 = vld [vmem:[#allocation6 + $0xb0] sm:$0xff]
          %v1477 = vld [vmem:[#allocation6 + $0xb8] sm:$0xff]
          %v1478 = vld [vmem:[#allocation6 + $0xc0] sm:$0xff]
          %v1479 = vld [vmem:[#allocation6 + $0xc8] sm:$0xff]
          %v1480 = vld [vmem:[#allocation6 + $0xd0] sm:$0xff]
          %v1481 = vld [vmem:[#allocation6 + $0xd8] sm:$0xff]
          %v1482 = vld [vmem:[#allocation6 + $0xe0] sm:$0xff]
          %v1483 = vld [vmem:[#allocation6 + $0xe8] sm:$0xff]
          %v1484 = vld [vmem:[#allocation6 + $0xf0] sm:$0xff]
          %v1485 = vld [vmem:[#allocation6 + $0xf8] sm:$0xff]
          %v1486 = vld [vmem:[#allocation6 + $0x100] sm:$0xff]
          %v1487 = vld [vmem:[#allocation6 + $0x108] sm:$0xff]
          %v1488 = vld [vmem:[#allocation6 + $0x110] sm:$0xff]
          %v1489 = vld [vmem:[#allocation6 + $0x118] sm:$0xff]
          %v1490 = vld [vmem:[#allocation6 + $0x120] sm:$0xff]
          %v1491 = vld [vmem:[#allocation6 + $0x128] sm:$0xff]
          %v1492 = vld [vmem:[#allocation6 + $0x130] sm:$0xff]
          %v1493 = vld [vmem:[#allocation6 + $0x138] sm:$0xff]
          %v1494 = vld [vmem:[#allocation6 + $0x140] sm:$0xff]
          %v1495 = vld [vmem:[#allocation6 + $0x148] sm:$0xff]
          %v1496 = vld [vmem:[#allocation6 + $0x150] sm:$0xff]
          %v1497 = vld [vmem:[#allocation6 + $0x158] sm:$0xff]
          %v1498 = vld [vmem:[#allocation6 + $0x160] sm:$0xff]
          %v1499 = vld [vmem:[#allocation6 + $0x168] sm:$0xff]
          %v1500 = vld [vmem:[#allocation6 + $0x170] sm:$0xff]
          %v1501 = vld [vmem:[#allocation6 + $0x178] sm:$0xff]
          %v1502 = vld [vmem:[#allocation6 + $0x180] sm:$0xff]
          %v1503 = vld [vmem:[#allocation6 + $0x188] sm:$0xff]
          %v1504 = vld [vmem:[#allocation6 + $0x190] sm:$0xff]
          %v1505 = vld [vmem:[#allocation6 + $0x198] sm:$0xff]
          %v1506 = vld [vmem:[#allocation6 + $0x1a0] sm:$0xff]
          %v1507 = vld [vmem:[#allocation6 + $0x1a8] sm:$0xff]
          %v1508 = vld [vmem:[#allocation6 + $0x1b0] sm:$0xff]
          %v1509 = vld [vmem:[#allocation6 + $0x1b8] sm:$0xff]
          %v1510 = vld [vmem:[#allocation6 + $0x1c0] sm:$0xff]
          %v1511 = vld [vmem:[#allocation6 + $0x1c8] sm:$0xff]
          %v1512 = vld [vmem:[#allocation6 + $0x1d0] sm:$0xff]
          %v1513 = vld [vmem:[#allocation6 + $0x1d8] sm:$0xff]
          %v1514 = vld [vmem:[#allocation6 + $0x1e0] sm:$0xff]
          %v1515 = vld [vmem:[#allocation6 + $0x1e8] sm:$0xff]
          %v1516 = vld [vmem:[#allocation6 + $0x1f0] sm:$0xff]
          %v1517 = vld [vmem:[#allocation6 + $0x1f8] sm:$0xff]
          %v1518 = vld [vmem:[#allocation6 + $0x200] sm:$0xff]
          %v1519 = vld [vmem:[#allocation6 + $0x208] sm:$0xff]
          %v1520 = vld [vmem:[#allocation6 + $0x210] sm:$0xff]
          %v1521 = vld [vmem:[#allocation6 + $0x218] sm:$0xff]
          %v1522 = vld [vmem:[#allocation6 + $0x220] sm:$0xff]
          %v1523 = vld [vmem:[#allocation6 + $0x228] sm:$0xff]
          %v1524 = vld [vmem:[#allocation6 + $0x230] sm:$0xff]
          %v1525 = vld [vmem:[#allocation6 + $0x238] sm:$0xff]
          %v1526 = vld [vmem:[#allocation6 + $0x240] sm:$0xff]
          %v1527 = vld [vmem:[#allocation6 + $0x248] sm:$0xff]
          %v1528 = vld [vmem:[#allocation6 + $0x250] sm:$0xff]
          %v1529 = vld [vmem:[#allocation6 + $0x258] sm:$0xff]
          %v1530 = vld [vmem:[#allocation6 + $0x260] sm:$0xff]
          %v1531 = vld [vmem:[#allocation6 + $0x268] sm:$0xff]
          %v1532 = vld [vmem:[#allocation6 + $0x270] sm:$0xff]
          %v1533 = vld [vmem:[#allocation6 + $0x278] sm:$0xff]
          %v1534 = vld [vmem:[#allocation6 + $0x280] sm:$0xff]
          %v1535 = vld [vmem:[#allocation6 + $0x288] sm:$0xff]
          %v1536 = vld [vmem:[#allocation6 + $0x290] sm:$0xff]
          %v1537 = vld [vmem:[#allocation6 + $0x298] sm:$0xff]
          %v1538 = vld [vmem:[#allocation6 + $0x2a0] sm:$0xff]
          %v1539 = vld [vmem:[#allocation6 + $0x2a8] sm:$0xff]
          %v1540 = vld [vmem:[#allocation6 + $0x2b0] sm:$0xff]
          %v1541 = vld [vmem:[#allocation6 + $0x2b8] sm:$0xff]
          %v1542 = vld [vmem:[#allocation6 + $0x2c0] sm:$0xff]
          %v1543 = vld [vmem:[#allocation6 + $0x2c8] sm:$0xff]
          %v1544 = vld [vmem:[#allocation6 + $0x2d0] sm:$0xff]
          %v1545 = vld [vmem:[#allocation6 + $0x2d8] sm:$0xff]
          %v1546 = vld [vmem:[#allocation6 + $0x2e0] sm:$0xff]
          %v1547 = vld [vmem:[#allocation6 + $0x2e8] sm:$0xff]
          %v1548 = vld [vmem:[#allocation6 + $0x2f0] sm:$0xff]
          %v1549 = vld [vmem:[#allocation6 + $0x2f8] sm:$0xff]
          %v1550 = vld [vmem:[#allocation6 + $0x300] sm:$0xff]
          %v1551 = vld [vmem:[#allocation6 + $0x308] sm:$0xff]
          %v1552 = vld [vmem:[#allocation6 + $0x310] sm:$0xff]
          %v1553 = vld [vmem:[#allocation6 + $0x318] sm:$0xff]
          %v1554 = vld [vmem:[#allocation6 + $0x320] sm:$0xff]
          %v1555 = vld [vmem:[#allocation6 + $0x328] sm:$0xff]
          %v1556 = vld [vmem:[#allocation6 + $0x330] sm:$0xff]
          %v1557 = vld [vmem:[#allocation6 + $0x338] sm:$0xff]
          %v1558 = vld [vmem:[#allocation6 + $0x340] sm:$0xff]
          %v1559 = vld [vmem:[#allocation6 + $0x348] sm:$0xff]
          %v1560 = vld [vmem:[#allocation6 + $0x350] sm:$0xff]
          %v1561 = vld [vmem:[#allocation6 + $0x358] sm:$0xff]
          %v1562 = vld [vmem:[#allocation6 + $0x360] sm:$0xff]
          %v1563 = vld [vmem:[#allocation6 + $0x368] sm:$0xff]
          %v1564 = vld [vmem:[#allocation6 + $0x370] sm:$0xff]
          %v1565 = vld [vmem:[#allocation6 + $0x378] sm:$0xff]
          %v1566 = vld [vmem:[#allocation6 + $0x380] sm:$0xff]
          %v1567 = vld [vmem:[#allocation6 + $0x388] sm:$0xff]
          %v1568 = vld [vmem:[#allocation6 + $0x390] sm:$0xff]
          %v1569 = vld [vmem:[#allocation6 + $0x398] sm:$0xff]
          %v1570 = vld [vmem:[#allocation6 + $0x3a0] sm:$0xff]
          %v1571 = vld [vmem:[#allocation6 + $0x3a8] sm:$0xff]
          %v1572 = vld [vmem:[#allocation6 + $0x3b0] sm:$0xff]
          %v1573 = vld [vmem:[#allocation6 + $0x3b8] sm:$0xff]
          %v1574 = vld [vmem:[#allocation6 + $0x3c0] sm:$0xff]
          %v1575 = vld [vmem:[#allocation6 + $0x3c8] sm:$0xff]
          %v1576 = vld [vmem:[#allocation6 + $0x3d0] sm:$0xff]
          %v1577 = vld [vmem:[#allocation6 + $0x3d8] sm:$0xff]
          %v1578 = vld [vmem:[#allocation6 + $0x3e0] sm:$0xff]
          %v1579 = vld [vmem:[#allocation6 + $0x3e8] sm:$0xff]
          %v1580 = vld [vmem:[#allocation6 + $0x3f0] sm:$0xff]
          %v1581 = vld [vmem:[#allocation6 + $0x3f8] sm:$0xff]
          %v1582 = vld [vmem:[#allocation6 + $0x400] sm:$0xff]
          %v1583 = vld [vmem:[#allocation6 + $0x408] sm:$0xff]
          %v1584 = vld [vmem:[#allocation6 + $0x410] sm:$0xff]
          %v1585 = vld [vmem:[#allocation6 + $0x418] sm:$0xff]
          %v1586 = vld [vmem:[#allocation6 + $0x420] sm:$0xff]
          %v1587 = vld [vmem:[#allocation6 + $0x428] sm:$0xff]
          %v1588 = vld [vmem:[#allocation6 + $0x430] sm:$0xff]
          %v1589 = vld [vmem:[#allocation6 + $0x438] sm:$0xff]
          %v1590 = vld [vmem:[#allocation6 + $0x440] sm:$0xff]
          %v1591 = vld [vmem:[#allocation6 + $0x448] sm:$0xff]
          %v1592 = vld [vmem:[#allocation6 + $0x450] sm:$0xff]
          %v1593 = vld [vmem:[#allocation6 + $0x458] sm:$0xff]
          %v1594 = vld [vmem:[#allocation6 + $0x460] sm:$0xff]
          %v1595 = vld [vmem:[#allocation6 + $0x468] sm:$0xff]
          %v1596 = vld [vmem:[#allocation6 + $0x470] sm:$0xff]
          %v1597 = vld [vmem:[#allocation6 + $0x478] sm:$0xff]
          %v1598 = vld [vmem:[#allocation6 + $0x480] sm:$0xff]
          %v1599 = vld [vmem:[#allocation6 + $0x488] sm:$0xff]
          %v1600 = vld [vmem:[#allocation6 + $0x490] sm:$0xff]
          %v1601 = vld [vmem:[#allocation6 + $0x498] sm:$0xff]
          %v1602 = vld [vmem:[#allocation6 + $0x4a0] sm:$0xff]
          %v1603 = vld [vmem:[#allocation6 + $0x4a8] sm:$0xff]
          %v1604 = vld [vmem:[#allocation6 + $0x4b0] sm:$0xff]
          %v1605 = vld [vmem:[#allocation6 + $0x4b8] sm:$0xff]
          %v1606 = vld [vmem:[#allocation6 + $0x4c0] sm:$0xff]
          %v1607 = vld [vmem:[#allocation6 + $0x4c8] sm:$0xff]
          %v1608 = vld [vmem:[#allocation6 + $0x4d0] sm:$0xff]
          %v1609 = vld [vmem:[#allocation6 + $0x4d8] sm:$0xff]
          %v1610 = vld [vmem:[#allocation6 + $0x4e0] sm:$0xff]
          %v1611 = vld [vmem:[#allocation6 + $0x4e8] sm:$0xff]
          %v1612 = vld [vmem:[#allocation6 + $0x4f0] sm:$0xff]
          %v1613 = vld [vmem:[#allocation6 + $0x4f8] sm:$0xff]
          %v1614 = vld [vmem:[#allocation6 + $0x500] sm:$0xff]
          %v1615 = vld [vmem:[#allocation6 + $0x508] sm:$0xff]
          %v1616 = vld [vmem:[#allocation6 + $0x510] sm:$0xff]
          %v1617 = vld [vmem:[#allocation6 + $0x518] sm:$0xff]
          %v1618 = vld [vmem:[#allocation6 + $0x520] sm:$0xff]
          %v1619 = vld [vmem:[#allocation6 + $0x528] sm:$0xff]
          %v1620 = vld [vmem:[#allocation6 + $0x530] sm:$0xff]
          %v1621 = vld [vmem:[#allocation6 + $0x538] sm:$0xff]
          %v1622 = vld [vmem:[#allocation6 + $0x540] sm:$0xff]
          %v1623 = vld [vmem:[#allocation6 + $0x548] sm:$0xff]
          %v1624 = vld [vmem:[#allocation6 + $0x550] sm:$0xff]
          %v1625 = vld [vmem:[#allocation6 + $0x558] sm:$0xff]
          %v1626 = vld [vmem:[#allocation6 + $0x560] sm:$0xff]
          %v1627 = vld [vmem:[#allocation6 + $0x568] sm:$0xff]
          %v1628 = vld [vmem:[#allocation6 + $0x570] sm:$0xff]
          %v1629 = vld [vmem:[#allocation6 + $0x578] sm:$0xff]
          %v1630 = vld [vmem:[#allocation6 + $0x580] sm:$0xff]
          %v1631 = vld [vmem:[#allocation6 + $0x588] sm:$0xff]
          %v1632 = vld [vmem:[#allocation6 + $0x590] sm:$0xff]
          %v1633 = vld [vmem:[#allocation6 + $0x598] sm:$0xff]
          %v1634 = vld [vmem:[#allocation6 + $0x5a0] sm:$0xff]
          %v1635 = vld [vmem:[#allocation6 + $0x5a8] sm:$0xff]
          %v1636 = vld [vmem:[#allocation6 + $0x5b0] sm:$0xff]
          %v1637 = vld [vmem:[#allocation6 + $0x5b8] sm:$0xff]
          %v1638 = vld [vmem:[#allocation6 + $0x5c0] sm:$0xff]
          %v1639 = vld [vmem:[#allocation6 + $0x5c8] sm:$0xff]
          %v1640 = vld [vmem:[#allocation6 + $0x5d0] sm:$0xff]
          %v1641 = vld [vmem:[#allocation6 + $0x5d8] sm:$0xff]
          %v1642 = vld [vmem:[#allocation6 + $0x5e0] sm:$0xff]
          %v1643 = vld [vmem:[#allocation6 + $0x5e8] sm:$0xff]
          %v1644 = vld [vmem:[#allocation6 + $0x5f0] sm:$0xff]
          %v1645 = vld [vmem:[#allocation6 + $0x5f8] sm:$0xff]
          %v1646 = vld [vmem:[#allocation6 + $0x600] sm:$0xff]
          %v1647 = vld [vmem:[#allocation6 + $0x608] sm:$0xff]
          %v1648 = vld [vmem:[#allocation6 + $0x610] sm:$0xff]
          %v1649 = vld [vmem:[#allocation6 + $0x618] sm:$0xff]
          %v1650 = vld [vmem:[#allocation6 + $0x620] sm:$0xff]
          %v1651 = vld [vmem:[#allocation6 + $0x628] sm:$0xff]
          %v1652 = vld [vmem:[#allocation6 + $0x630] sm:$0xff]
          %v1653 = vld [vmem:[#allocation6 + $0x638] sm:$0xff]
          %v1654 = vld [vmem:[#allocation6 + $0x640] sm:$0xff]
          %v1655 = vld [vmem:[#allocation6 + $0x648] sm:$0xff]
          %v1656 = vld [vmem:[#allocation6 + $0x650] sm:$0xff]
          %v1657 = vld [vmem:[#allocation6 + $0x658] sm:$0xff]
          %v1658 = vld [vmem:[#allocation6 + $0x660] sm:$0xff]
          %v1659 = vld [vmem:[#allocation6 + $0x668] sm:$0xff]
          %v1660 = vld [vmem:[#allocation6 + $0x670] sm:$0xff]
          %v1661 = vld [vmem:[#allocation6 + $0x678] sm:$0xff]
          %v1662 = vld [vmem:[#allocation6 + $0x680] sm:$0xff]
          %v1663 = vld [vmem:[#allocation6 + $0x688] sm:$0xff]
          %v1664 = vld [vmem:[#allocation6 + $0x690] sm:$0xff]
          %v1665 = vld [vmem:[#allocation6 + $0x698] sm:$0xff]
          %v1666 = vld [vmem:[#allocation6 + $0x6a0] sm:$0xff]
          %v1667 = vld [vmem:[#allocation6 + $0x6a8] sm:$0xff]
          %v1668 = vld [vmem:[#allocation6 + $0x6b0] sm:$0xff]
          %v1669 = vld [vmem:[#allocation6 + $0x6b8] sm:$0xff]
          %v1670 = vld [vmem:[#allocation6 + $0x6c0] sm:$0xff]
          %v1671 = vld [vmem:[#allocation6 + $0x6c8] sm:$0xff]
          %v1672 = vld [vmem:[#allocation6 + $0x6d0] sm:$0xff]
          %v1673 = vld [vmem:[#allocation6 + $0x6d8] sm:$0xff]
          %v1674 = vld [vmem:[#allocation6 + $0x6e0] sm:$0xff]
          %v1675 = vld [vmem:[#allocation6 + $0x6e8] sm:$0xff]
          %v1676 = vld [vmem:[#allocation6 + $0x6f0] sm:$0xff]
          %v1677 = vld [vmem:[#allocation6 + $0x6f8] sm:$0xff]
          %v1678 = vld [vmem:[#allocation6 + $0x700] sm:$0xff]
          %v1679 = vld [vmem:[#allocation6 + $0x708] sm:$0xff]
          %v1680 = vld [vmem:[#allocation6 + $0x710] sm:$0xff]
          %v1681 = vld [vmem:[#allocation6 + $0x718] sm:$0xff]
          %v1682 = vld [vmem:[#allocation6 + $0x720] sm:$0xff]
          %v1683 = vld [vmem:[#allocation6 + $0x728] sm:$0xff]
          %v1684 = vld [vmem:[#allocation6 + $0x730] sm:$0xff]
          %v1685 = vld [vmem:[#allocation6 + $0x738] sm:$0xff]
          %v1686 = vld [vmem:[#allocation6 + $0x740] sm:$0xff]
          %v1687 = vld [vmem:[#allocation6 + $0x748] sm:$0xff]
          %v1688 = vld [vmem:[#allocation6 + $0x750] sm:$0xff]
          %v1689 = vld [vmem:[#allocation6 + $0x758] sm:$0xff]
          %v1690 = vld [vmem:[#allocation6 + $0x760] sm:$0xff]
          %v1691 = vld [vmem:[#allocation6 + $0x768] sm:$0xff]
          %v1692 = vld [vmem:[#allocation6 + $0x770] sm:$0xff]
          %v1693 = vld [vmem:[#allocation6 + $0x778] sm:$0xff]
          %v1694 = vld [vmem:[#allocation6 + $0x780] sm:$0xff]
          %v1695 = vld [vmem:[#allocation6 + $0x788] sm:$0xff]
          %v1696 = vld [vmem:[#allocation6 + $0x790] sm:$0xff]
          %v1697 = vld [vmem:[#allocation6 + $0x798] sm:$0xff]
          %v1698 = vld [vmem:[#allocation6 + $0x7a0] sm:$0xff]
          %v1699 = vld [vmem:[#allocation6 + $0x7a8] sm:$0xff]
          %v1700 = vld [vmem:[#allocation6 + $0x7b0] sm:$0xff]
          %v1701 = vld [vmem:[#allocation6 + $0x7b8] sm:$0xff]
          %v1702 = vld [vmem:[#allocation6 + $0x7c0] sm:$0xff]
          %v1703 = vld [vmem:[#allocation6 + $0x7c8] sm:$0xff]
          %v1704 = vld [vmem:[#allocation6 + $0x7d0] sm:$0xff]
          %v1705 = vld [vmem:[#allocation6 + $0x7d8] sm:$0xff]
          %v1706 = vld [vmem:[#allocation6 + $0x7e0] sm:$0xff]
          %v1707 = vld [vmem:[#allocation6 + $0x7e8] sm:$0xff]
          %v1708 = vld [vmem:[#allocation6 + $0x7f0] sm:$0xff]
          %v1709 = vld [vmem:[#allocation6 + $0x7f8] sm:$0xff]
          %v1710 = vld [vmem:[%s8] sm:$0xf]
          %v1967 = vunpack.c.l.b16 %v1454
          %v1968 = vunpack.c.h.b16 %v1454
          %v1969 = vunpack.c.l.b16 %v1455
          %v1970 = vunpack.c.h.b16 %v1455
          %v1971 = vunpack.c.l.b16 %v1456
          %v1972 = vunpack.c.h.b16 %v1456
          %v1973 = vunpack.c.l.b16 %v1457
          %v1974 = vunpack.c.h.b16 %v1457
          %v1975 = vunpack.c.l.b16 %v1458
          %v1976 = vunpack.c.h.b16 %v1458
          %v1977 = vunpack.c.l.b16 %v1459
          %v1978 = vunpack.c.h.b16 %v1459
          %v1979 = vunpack.c.l.b16 %v1460
          %v1980 = vunpack.c.h.b16 %v1460
          %v1981 = vunpack.c.l.b16 %v1461
          %v1982 = vunpack.c.h.b16 %v1461
          %v1983 = vunpack.c.l.b16 %v1462
          %v1984 = vunpack.c.h.b16 %v1462
          %v1985 = vunpack.c.l.b16 %v1463
          %v1986 = vunpack.c.h.b16 %v1463
          %v1987 = vunpack.c.l.b16 %v1464
          %v1988 = vunpack.c.h.b16 %v1464
          %v1989 = vunpack.c.l.b16 %v1465
          %v1990 = vunpack.c.h.b16 %v1465
          %v1991 = vunpack.c.l.b16 %v1466
          %v1992 = vunpack.c.h.b16 %v1466
          %v1993 = vunpack.c.l.b16 %v1467
          %v1994 = vunpack.c.h.b16 %v1467
          %v1995 = vunpack.c.l.b16 %v1468
          %v1996 = vunpack.c.h.b16 %v1468
          %v1997 = vunpack.c.l.b16 %v1469
          %v1998 = vunpack.c.h.b16 %v1469
          %v1999 = vunpack.c.l.b16 %v1470
          %v2000 = vunpack.c.h.b16 %v1470
          %v2001 = vunpack.c.l.b16 %v1471
          %v2002 = vunpack.c.h.b16 %v1471
          %v2003 = vunpack.c.l.b16 %v1472
          %v2004 = vunpack.c.h.b16 %v1472
          %v2005 = vunpack.c.l.b16 %v1473
          %v2006 = vunpack.c.h.b16 %v1473
          %v2007 = vunpack.c.l.b16 %v1474
          %v2008 = vunpack.c.h.b16 %v1474
          %v2009 = vunpack.c.l.b16 %v1475
          %v2010 = vunpack.c.h.b16 %v1475
          %v2011 = vunpack.c.l.b16 %v1476
          %v2012 = vunpack.c.h.b16 %v1476
          %v2013 = vunpack.c.l.b16 %v1477
          %v2014 = vunpack.c.h.b16 %v1477
          %v2015 = vunpack.c.l.b16 %v1478
          %v2016 = vunpack.c.h.b16 %v1478
          %v2017 = vunpack.c.l.b16 %v1479
          %v2018 = vunpack.c.h.b16 %v1479
          %v2019 = vunpack.c.l.b16 %v1480
          %v2020 = vunpack.c.h.b16 %v1480
          %v2021 = vunpack.c.l.b16 %v1481
          %v2022 = vunpack.c.h.b16 %v1481
          %v2023 = vunpack.c.l.b16 %v1482
          %v2024 = vunpack.c.h.b16 %v1482
          %v2025 = vunpack.c.l.b16 %v1483
          %v2026 = vunpack.c.h.b16 %v1483
          %v2027 = vunpack.c.l.b16 %v1484
          %v2028 = vunpack.c.h.b16 %v1484
          %v2029 = vunpack.c.l.b16 %v1485
          %v2030 = vunpack.c.h.b16 %v1485
          %v2031 = vunpack.c.l.b16 %v1486
          %v2032 = vunpack.c.h.b16 %v1486
          %v2033 = vunpack.c.l.b16 %v1487
          %v2034 = vunpack.c.h.b16 %v1487
          %v2035 = vunpack.c.l.b16 %v1488
          %v2036 = vunpack.c.h.b16 %v1488
          %v2037 = vunpack.c.l.b16 %v1489
          %v2038 = vunpack.c.h.b16 %v1489
          %v2039 = vunpack.c.l.b16 %v1490
          %v2040 = vunpack.c.h.b16 %v1490
          %v2041 = vunpack.c.l.b16 %v1491
          %v2042 = vunpack.c.h.b16 %v1491
          %v2043 = vunpack.c.l.b16 %v1492
          %v2044 = vunpack.c.h.b16 %v1492
          %v2045 = vunpack.c.l.b16 %v1493
          %v2046 = vunpack.c.h.b16 %v1493
          %v2047 = vunpack.c.l.b16 %v1494
          %v2048 = vunpack.c.h.b16 %v1494
          %v2049 = vunpack.c.l.b16 %v1495
          %v2050 = vunpack.c.h.b16 %v1495
          %v2051 = vunpack.c.l.b16 %v1496
          %v2052 = vunpack.c.h.b16 %v1496
          %v2053 = vunpack.c.l.b16 %v1497
          %v2054 = vunpack.c.h.b16 %v1497
          %v2055 = vunpack.c.l.b16 %v1498
          %v2056 = vunpack.c.h.b16 %v1498
          %v2057 = vunpack.c.l.b16 %v1499
          %v2058 = vunpack.c.h.b16 %v1499
          %v2059 = vunpack.c.l.b16 %v1500
          %v2060 = vunpack.c.h.b16 %v1500
          %v2061 = vunpack.c.l.b16 %v1501
          %v2062 = vunpack.c.h.b16 %v1501
          %v2063 = vunpack.c.l.b16 %v1502
          %v2064 = vunpack.c.h.b16 %v1502
          %v2065 = vunpack.c.l.b16 %v1503
          %v2066 = vunpack.c.h.b16 %v1503
          %v2067 = vunpack.c.l.b16 %v1504
          %v2068 = vunpack.c.h.b16 %v1504
          %v2069 = vunpack.c.l.b16 %v1505
          %v2070 = vunpack.c.h.b16 %v1505
          %v2071 = vunpack.c.l.b16 %v1506
          %v2072 = vunpack.c.h.b16 %v1506
          %v2073 = vunpack.c.l.b16 %v1507
          %v2074 = vunpack.c.h.b16 %v1507
          %v2075 = vunpack.c.l.b16 %v1508
          %v2076 = vunpack.c.h.b16 %v1508
          %v2077 = vunpack.c.l.b16 %v1509
          %v2078 = vunpack.c.h.b16 %v1509
          %v2079 = vunpack.c.l.b16 %v1510
          %v2080 = vunpack.c.h.b16 %v1510
          %v2081 = vunpack.c.l.b16 %v1511
          %v2082 = vunpack.c.h.b16 %v1511
          %v2083 = vunpack.c.l.b16 %v1512
          %v2084 = vunpack.c.h.b16 %v1512
          %v2085 = vunpack.c.l.b16 %v1513
          %v2086 = vunpack.c.h.b16 %v1513
          %v2087 = vunpack.c.l.b16 %v1514
          %v2088 = vunpack.c.h.b16 %v1514
          %v2089 = vunpack.c.l.b16 %v1515
          %v2090 = vunpack.c.h.b16 %v1515
          %v2091 = vunpack.c.l.b16 %v1516
          %v2092 = vunpack.c.h.b16 %v1516
          %v2093 = vunpack.c.l.b16 %v1517
          %v2094 = vunpack.c.h.b16 %v1517
          %v2095 = vunpack.c.l.b16 %v1518
          %v2096 = vunpack.c.h.b16 %v1518
          %v2097 = vunpack.c.l.b16 %v1519
          %v2098 = vunpack.c.h.b16 %v1519
          %v2099 = vunpack.c.l.b16 %v1520
          %v2100 = vunpack.c.h.b16 %v1520
          %v2101 = vunpack.c.l.b16 %v1521
          %v2102 = vunpack.c.h.b16 %v1521
          %v2103 = vunpack.c.l.b16 %v1522
          %v2104 = vunpack.c.h.b16 %v1522
          %v2105 = vunpack.c.l.b16 %v1523
          %v2106 = vunpack.c.h.b16 %v1523
          %v2107 = vunpack.c.l.b16 %v1524
          %v2108 = vunpack.c.h.b16 %v1524
          %v2109 = vunpack.c.l.b16 %v1525
          %v2110 = vunpack.c.h.b16 %v1525
          %v2111 = vunpack.c.l.b16 %v1526
          %v2112 = vunpack.c.h.b16 %v1526
          %v2113 = vunpack.c.l.b16 %v1527
          %v2114 = vunpack.c.h.b16 %v1527
          %v2115 = vunpack.c.l.b16 %v1528
          %v2116 = vunpack.c.h.b16 %v1528
          %v2117 = vunpack.c.l.b16 %v1529
          %v2118 = vunpack.c.h.b16 %v1529
          %v2119 = vunpack.c.l.b16 %v1530
          %v2120 = vunpack.c.h.b16 %v1530
          %v2121 = vunpack.c.l.b16 %v1531
          %v2122 = vunpack.c.h.b16 %v1531
          %v2123 = vunpack.c.l.b16 %v1532
          %v2124 = vunpack.c.h.b16 %v1532
          %v2125 = vunpack.c.l.b16 %v1533
          %v2126 = vunpack.c.h.b16 %v1533
          %v2127 = vunpack.c.l.b16 %v1534
          %v2128 = vunpack.c.h.b16 %v1534
          %v2129 = vunpack.c.l.b16 %v1535
          %v2130 = vunpack.c.h.b16 %v1535
          %v2131 = vunpack.c.l.b16 %v1536
          %v2132 = vunpack.c.h.b16 %v1536
          %v2133 = vunpack.c.l.b16 %v1537
          %v2134 = vunpack.c.h.b16 %v1537
          %v2135 = vunpack.c.l.b16 %v1538
          %v2136 = vunpack.c.h.b16 %v1538
          %v2137 = vunpack.c.l.b16 %v1539
          %v2138 = vunpack.c.h.b16 %v1539
          %v2139 = vunpack.c.l.b16 %v1540
          %v2140 = vunpack.c.h.b16 %v1540
          %v2141 = vunpack.c.l.b16 %v1541
          %v2142 = vunpack.c.h.b16 %v1541
          %v2143 = vunpack.c.l.b16 %v1542
          %v2144 = vunpack.c.h.b16 %v1542
          %v2145 = vunpack.c.l.b16 %v1543
          %v2146 = vunpack.c.h.b16 %v1543
          %v2147 = vunpack.c.l.b16 %v1544
          %v2148 = vunpack.c.h.b16 %v1544
          %v2149 = vunpack.c.l.b16 %v1545
          %v2150 = vunpack.c.h.b16 %v1545
          %v2151 = vunpack.c.l.b16 %v1546
          %v2152 = vunpack.c.h.b16 %v1546
          %v2153 = vunpack.c.l.b16 %v1547
          %v2154 = vunpack.c.h.b16 %v1547
          %v2155 = vunpack.c.l.b16 %v1548
          %v2156 = vunpack.c.h.b16 %v1548
          %v2157 = vunpack.c.l.b16 %v1549
          %v2158 = vunpack.c.h.b16 %v1549
          %v2159 = vunpack.c.l.b16 %v1550
          %v2160 = vunpack.c.h.b16 %v1550
          %v2161 = vunpack.c.l.b16 %v1551
          %v2162 = vunpack.c.h.b16 %v1551
          %v2163 = vunpack.c.l.b16 %v1552
          %v2164 = vunpack.c.h.b16 %v1552
          %v2165 = vunpack.c.l.b16 %v1553
          %v2166 = vunpack.c.h.b16 %v1553
          %v2167 = vunpack.c.l.b16 %v1554
          %v2168 = vunpack.c.h.b16 %v1554
          %v2169 = vunpack.c.l.b16 %v1555
          %v2170 = vunpack.c.h.b16 %v1555
          %v2171 = vunpack.c.l.b16 %v1556
          %v2172 = vunpack.c.h.b16 %v1556
          %v2173 = vunpack.c.l.b16 %v1557
          %v2174 = vunpack.c.h.b16 %v1557
          %v2175 = vunpack.c.l.b16 %v1558
          %v2176 = vunpack.c.h.b16 %v1558
          %v2177 = vunpack.c.l.b16 %v1559
          %v2178 = vunpack.c.h.b16 %v1559
          %v2179 = vunpack.c.l.b16 %v1560
          %v2180 = vunpack.c.h.b16 %v1560
          %v2181 = vunpack.c.l.b16 %v1561
          %v2182 = vunpack.c.h.b16 %v1561
          %v2183 = vunpack.c.l.b16 %v1562
          %v2184 = vunpack.c.h.b16 %v1562
          %v2185 = vunpack.c.l.b16 %v1563
          %v2186 = vunpack.c.h.b16 %v1563
          %v2187 = vunpack.c.l.b16 %v1564
          %v2188 = vunpack.c.h.b16 %v1564
          %v2189 = vunpack.c.l.b16 %v1565
          %v2190 = vunpack.c.h.b16 %v1565
          %v2191 = vunpack.c.l.b16 %v1566
          %v2192 = vunpack.c.h.b16 %v1566
          %v2193 = vunpack.c.l.b16 %v1567
          %v2194 = vunpack.c.h.b16 %v1567
          %v2195 = vunpack.c.l.b16 %v1568
          %v2196 = vunpack.c.h.b16 %v1568
          %v2197 = vunpack.c.l.b16 %v1569
          %v2198 = vunpack.c.h.b16 %v1569
          %v2199 = vunpack.c.l.b16 %v1570
          %v2200 = vunpack.c.h.b16 %v1570
          %v2201 = vunpack.c.l.b16 %v1571
          %v2202 = vunpack.c.h.b16 %v1571
          %v2203 = vunpack.c.l.b16 %v1572
          %v2204 = vunpack.c.h.b16 %v1572
          %v2205 = vunpack.c.l.b16 %v1573
          %v2206 = vunpack.c.h.b16 %v1573
          %v2207 = vunpack.c.l.b16 %v1574
          %v2208 = vunpack.c.h.b16 %v1574
          %v2209 = vunpack.c.l.b16 %v1575
          %v2210 = vunpack.c.h.b16 %v1575
          %v2211 = vunpack.c.l.b16 %v1576
          %v2212 = vunpack.c.h.b16 %v1576
          %v2213 = vunpack.c.l.b16 %v1577
          %v2214 = vunpack.c.h.b16 %v1577
          %v2215 = vunpack.c.l.b16 %v1578
          %v2216 = vunpack.c.h.b16 %v1578
          %v2217 = vunpack.c.l.b16 %v1579
          %v2218 = vunpack.c.h.b16 %v1579
          %v2219 = vunpack.c.l.b16 %v1580
          %v2220 = vunpack.c.h.b16 %v1580
          %v2221 = vunpack.c.l.b16 %v1581
          %v2222 = vunpack.c.h.b16 %v1581
          %v2223 = vunpack.c.l.b16 %v1582
          %v2224 = vunpack.c.h.b16 %v1582
          %v2225 = vunpack.c.l.b16 %v1583
          %v2226 = vunpack.c.h.b16 %v1583
          %v2227 = vunpack.c.l.b16 %v1584
          %v2228 = vunpack.c.h.b16 %v1584
          %v2229 = vunpack.c.l.b16 %v1585
          %v2230 = vunpack.c.h.b16 %v1585
          %v2231 = vunpack.c.l.b16 %v1586
          %v2232 = vunpack.c.h.b16 %v1586
          %v2233 = vunpack.c.l.b16 %v1587
          %v2234 = vunpack.c.h.b16 %v1587
          %v2235 = vunpack.c.l.b16 %v1588
          %v2236 = vunpack.c.h.b16 %v1588
          %v2237 = vunpack.c.l.b16 %v1589
          %v2238 = vunpack.c.h.b16 %v1589
          %v2239 = vunpack.c.l.b16 %v1590
          %v2240 = vunpack.c.h.b16 %v1590
          %v2241 = vunpack.c.l.b16 %v1591
          %v2242 = vunpack.c.h.b16 %v1591
          %v2243 = vunpack.c.l.b16 %v1592
          %v2244 = vunpack.c.h.b16 %v1592
          %v2245 = vunpack.c.l.b16 %v1593
          %v2246 = vunpack.c.h.b16 %v1593
          %v2247 = vunpack.c.l.b16 %v1594
          %v2248 = vunpack.c.h.b16 %v1594
          %v2249 = vunpack.c.l.b16 %v1595
          %v2250 = vunpack.c.h.b16 %v1595
          %v2251 = vunpack.c.l.b16 %v1596
          %v2252 = vunpack.c.h.b16 %v1596
          %v2253 = vunpack.c.l.b16 %v1597
          %v2254 = vunpack.c.h.b16 %v1597
          %v2255 = vunpack.c.l.b16 %v1598
          %v2256 = vunpack.c.h.b16 %v1598
          %v2257 = vunpack.c.l.b16 %v1599
          %v2258 = vunpack.c.h.b16 %v1599
          %v2259 = vunpack.c.l.b16 %v1600
          %v2260 = vunpack.c.h.b16 %v1600
          %v2261 = vunpack.c.l.b16 %v1601
          %v2262 = vunpack.c.h.b16 %v1601
          %v2263 = vunpack.c.l.b16 %v1602
          %v2264 = vunpack.c.h.b16 %v1602
          %v2265 = vunpack.c.l.b16 %v1603
          %v2266 = vunpack.c.h.b16 %v1603
          %v2267 = vunpack.c.l.b16 %v1604
          %v2268 = vunpack.c.h.b16 %v1604
          %v2269 = vunpack.c.l.b16 %v1605
          %v2270 = vunpack.c.h.b16 %v1605
          %v2271 = vunpack.c.l.b16 %v1606
          %v2272 = vunpack.c.h.b16 %v1606
          %v2273 = vunpack.c.l.b16 %v1607
          %v2274 = vunpack.c.h.b16 %v1607
          %v2275 = vunpack.c.l.b16 %v1608
          %v2276 = vunpack.c.h.b16 %v1608
          %v2277 = vunpack.c.l.b16 %v1609
          %v2278 = vunpack.c.h.b16 %v1609
          %v2279 = vunpack.c.l.b16 %v1610
          %v2280 = vunpack.c.h.b16 %v1610
          %v2281 = vunpack.c.l.b16 %v1611
          %v2282 = vunpack.c.h.b16 %v1611
          %v2283 = vunpack.c.l.b16 %v1612
          %v2284 = vunpack.c.h.b16 %v1612
          %v2285 = vunpack.c.l.b16 %v1613
          %v2286 = vunpack.c.h.b16 %v1613
          %v2287 = vunpack.c.l.b16 %v1614
          %v2288 = vunpack.c.h.b16 %v1614
          %v2289 = vunpack.c.l.b16 %v1615
          %v2290 = vunpack.c.h.b16 %v1615
          %v2291 = vunpack.c.l.b16 %v1616
          %v2292 = vunpack.c.h.b16 %v1616
          %v2293 = vunpack.c.l.b16 %v1617
          %v2294 = vunpack.c.h.b16 %v1617
          %v2295 = vunpack.c.l.b16 %v1618
          %v2296 = vunpack.c.h.b16 %v1618
          %v2297 = vunpack.c.l.b16 %v1619
          %v2298 = vunpack.c.h.b16 %v1619
          %v2299 = vunpack.c.l.b16 %v1620
          %v2300 = vunpack.c.h.b16 %v1620
          %v2301 = vunpack.c.l.b16 %v1621
          %v2302 = vunpack.c.h.b16 %v1621
          %v2303 = vunpack.c.l.b16 %v1622
          %v2304 = vunpack.c.h.b16 %v1622
          %v2305 = vunpack.c.l.b16 %v1623
          %v2306 = vunpack.c.h.b16 %v1623
          %v2307 = vunpack.c.l.b16 %v1624
          %v2308 = vunpack.c.h.b16 %v1624
          %v2309 = vunpack.c.l.b16 %v1625
          %v2310 = vunpack.c.h.b16 %v1625
          %v2311 = vunpack.c.l.b16 %v1626
          %v2312 = vunpack.c.h.b16 %v1626
          %v2313 = vunpack.c.l.b16 %v1627
          %v2314 = vunpack.c.h.b16 %v1627
          %v2315 = vunpack.c.l.b16 %v1628
          %v2316 = vunpack.c.h.b16 %v1628
          %v2317 = vunpack.c.l.b16 %v1629
          %v2318 = vunpack.c.h.b16 %v1629
          %v2319 = vunpack.c.l.b16 %v1630
          %v2320 = vunpack.c.h.b16 %v1630
          %v2321 = vunpack.c.l.b16 %v1631
          %v2322 = vunpack.c.h.b16 %v1631
          %v2323 = vunpack.c.l.b16 %v1632
          %v2324 = vunpack.c.h.b16 %v1632
          %v2325 = vunpack.c.l.b16 %v1633
          %v2326 = vunpack.c.h.b16 %v1633
          %v2327 = vunpack.c.l.b16 %v1634
          %v2328 = vunpack.c.h.b16 %v1634
          %v2329 = vunpack.c.l.b16 %v1635
          %v2330 = vunpack.c.h.b16 %v1635
          %v2331 = vunpack.c.l.b16 %v1636
          %v2332 = vunpack.c.h.b16 %v1636
          %v2333 = vunpack.c.l.b16 %v1637
          %v2334 = vunpack.c.h.b16 %v1637
          %v2335 = vunpack.c.l.b16 %v1638
          %v2336 = vunpack.c.h.b16 %v1638
          %v2337 = vunpack.c.l.b16 %v1639
          %v2338 = vunpack.c.h.b16 %v1639
          %v2339 = vunpack.c.l.b16 %v1640
          %v2340 = vunpack.c.h.b16 %v1640
          %v2341 = vunpack.c.l.b16 %v1641
          %v2342 = vunpack.c.h.b16 %v1641
          %v2343 = vunpack.c.l.b16 %v1642
          %v2344 = vunpack.c.h.b16 %v1642
          %v2345 = vunpack.c.l.b16 %v1643
          %v2346 = vunpack.c.h.b16 %v1643
          %v2347 = vunpack.c.l.b16 %v1644
          %v2348 = vunpack.c.h.b16 %v1644
          %v2349 = vunpack.c.l.b16 %v1645
          %v2350 = vunpack.c.h.b16 %v1645
          %v2351 = vunpack.c.l.b16 %v1646
          %v2352 = vunpack.c.h.b16 %v1646
          %v2353 = vunpack.c.l.b16 %v1647
          %v2354 = vunpack.c.h.b16 %v1647
          %v2355 = vunpack.c.l.b16 %v1648
          %v2356 = vunpack.c.h.b16 %v1648
          %v2357 = vunpack.c.l.b16 %v1649
          %v2358 = vunpack.c.h.b16 %v1649
          %v2359 = vunpack.c.l.b16 %v1650
          %v2360 = vunpack.c.h.b16 %v1650
          %v2361 = vunpack.c.l.b16 %v1651
          %v2362 = vunpack.c.h.b16 %v1651
          %v2363 = vunpack.c.l.b16 %v1652
          %v2364 = vunpack.c.h.b16 %v1652
          %v2365 = vunpack.c.l.b16 %v1653
          %v2366 = vunpack.c.h.b16 %v1653
          %v2367 = vunpack.c.l.b16 %v1654
          %v2368 = vunpack.c.h.b16 %v1654
          %v2369 = vunpack.c.l.b16 %v1655
          %v2370 = vunpack.c.h.b16 %v1655
          %v2371 = vunpack.c.l.b16 %v1656
          %v2372 = vunpack.c.h.b16 %v1656
          %v2373 = vunpack.c.l.b16 %v1657
          %v2374 = vunpack.c.h.b16 %v1657
          %v2375 = vunpack.c.l.b16 %v1658
          %v2376 = vunpack.c.h.b16 %v1658
          %v2377 = vunpack.c.l.b16 %v1659
          %v2378 = vunpack.c.h.b16 %v1659
          %v2379 = vunpack.c.l.b16 %v1660
          %v2380 = vunpack.c.h.b16 %v1660
          %v2381 = vunpack.c.l.b16 %v1661
          %v2382 = vunpack.c.h.b16 %v1661
          %v2383 = vunpack.c.l.b16 %v1662
          %v2384 = vunpack.c.h.b16 %v1662
          %v2385 = vunpack.c.l.b16 %v1663
          %v2386 = vunpack.c.h.b16 %v1663
          %v2387 = vunpack.c.l.b16 %v1664
          %v2388 = vunpack.c.h.b16 %v1664
          %v2389 = vunpack.c.l.b16 %v1665
          %v2390 = vunpack.c.h.b16 %v1665
          %v2391 = vunpack.c.l.b16 %v1666
          %v2392 = vunpack.c.h.b16 %v1666
          %v2393 = vunpack.c.l.b16 %v1667
          %v2394 = vunpack.c.h.b16 %v1667
          %v2395 = vunpack.c.l.b16 %v1668
          %v2396 = vunpack.c.h.b16 %v1668
          %v2397 = vunpack.c.l.b16 %v1669
          %v2398 = vunpack.c.h.b16 %v1669
          %v2399 = vunpack.c.l.b16 %v1670
          %v2400 = vunpack.c.h.b16 %v1670
          %v2401 = vunpack.c.l.b16 %v1671
          %v2402 = vunpack.c.h.b16 %v1671
          %v2403 = vunpack.c.l.b16 %v1672
          %v2404 = vunpack.c.h.b16 %v1672
          %v2405 = vunpack.c.l.b16 %v1673
          %v2406 = vunpack.c.h.b16 %v1673
          %v2407 = vunpack.c.l.b16 %v1674
          %v2408 = vunpack.c.h.b16 %v1674
          %v2409 = vunpack.c.l.b16 %v1675
          %v2410 = vunpack.c.h.b16 %v1675
          %v2411 = vunpack.c.l.b16 %v1676
          %v2412 = vunpack.c.h.b16 %v1676
          %v2413 = vunpack.c.l.b16 %v1677
          %v2414 = vunpack.c.h.b16 %v1677
          %v2415 = vunpack.c.l.b16 %v1678
          %v2416 = vunpack.c.h.b16 %v1678
          %v2417 = vunpack.c.l.b16 %v1679
          %v2418 = vunpack.c.h.b16 %v1679
          %v2419 = vunpack.c.l.b16 %v1680
          %v2420 = vunpack.c.h.b16 %v1680
          %v2421 = vunpack.c.l.b16 %v1681
          %v2422 = vunpack.c.h.b16 %v1681
          %v2423 = vunpack.c.l.b16 %v1682
          %v2424 = vunpack.c.h.b16 %v1682
          %v2425 = vunpack.c.l.b16 %v1683
          %v2426 = vunpack.c.h.b16 %v1683
          %v2427 = vunpack.c.l.b16 %v1684
          %v2428 = vunpack.c.h.b16 %v1684
          %v2429 = vunpack.c.l.b16 %v1685
          %v2430 = vunpack.c.h.b16 %v1685
          %v2431 = vunpack.c.l.b16 %v1686
          %v2432 = vunpack.c.h.b16 %v1686
          %v2433 = vunpack.c.l.b16 %v1687
          %v2434 = vunpack.c.h.b16 %v1687
          %v2435 = vunpack.c.l.b16 %v1688
          %v2436 = vunpack.c.h.b16 %v1688
          %v2437 = vunpack.c.l.b16 %v1689
          %v2438 = vunpack.c.h.b16 %v1689
          %v2439 = vunpack.c.l.b16 %v1690
          %v2440 = vunpack.c.h.b16 %v1690
          %v2441 = vunpack.c.l.b16 %v1691
          %v2442 = vunpack.c.h.b16 %v1691
          %v2443 = vunpack.c.l.b16 %v1692
          %v2444 = vunpack.c.h.b16 %v1692
          %v2445 = vunpack.c.l.b16 %v1693
          %v2446 = vunpack.c.h.b16 %v1693
          %v2447 = vunpack.c.l.b16 %v1694
          %v2448 = vunpack.c.h.b16 %v1694
          %v2449 = vunpack.c.l.b16 %v1695
          %v2450 = vunpack.c.h.b16 %v1695
          %v2451 = vunpack.c.l.b16 %v1696
          %v2452 = vunpack.c.h.b16 %v1696
          %v2453 = vunpack.c.l.b16 %v1697
          %v2454 = vunpack.c.h.b16 %v1697
          %v2455 = vunpack.c.l.b16 %v1698
          %v2456 = vunpack.c.h.b16 %v1698
          %v2457 = vunpack.c.l.b16 %v1699
          %v2458 = vunpack.c.h.b16 %v1699
          %v2459 = vunpack.c.l.b16 %v1700
          %v2460 = vunpack.c.h.b16 %v1700
          %v2461 = vunpack.c.l.b16 %v1701
          %v2462 = vunpack.c.h.b16 %v1701
          %v2463 = vunpack.c.l.b16 %v1702
          %v2464 = vunpack.c.h.b16 %v1702
          %v2465 = vunpack.c.l.b16 %v1703
          %v2466 = vunpack.c.h.b16 %v1703
          %v2467 = vunpack.c.l.b16 %v1704
          %v2468 = vunpack.c.h.b16 %v1704
          %v2469 = vunpack.c.l.b16 %v1705
          %v2470 = vunpack.c.h.b16 %v1705
          %v2471 = vunpack.c.l.b16 %v1706
          %v2472 = vunpack.c.h.b16 %v1706
          %v2473 = vunpack.c.l.b16 %v1707
          %v2474 = vunpack.c.h.b16 %v1707
          %v2475 = vunpack.c.l.b16 %v1708
          %v2476 = vunpack.c.h.b16 %v1708
          %v2477 = vunpack.c.l.b16 %v1709
          %v2478 = vunpack.c.h.b16 %v1709
          %v2479 = vpack.c.b16 %v1971, %v1967
          %v2480 = vpack.c.b16 %v1972, %v1968
          %v2481 = vpack.c.b16 %v1973, %v1969
          %v2482 = vpack.c.b16 %v1974, %v1970
          %v2483 = vpack.c.b16 %v1979, %v1975
          %v2484 = vpack.c.b16 %v1980, %v1976
          %v2485 = vpack.c.b16 %v1981, %v1977
          %v2486 = vpack.c.b16 %v1982, %v1978
          %v2487 = vpack.c.b16 %v1987, %v1983
          %v2488 = vpack.c.b16 %v1988, %v1984
          %v2489 = vpack.c.b16 %v1989, %v1985
          %v2490 = vpack.c.b16 %v1990, %v1986
          %v2491 = vpack.c.b16 %v1995, %v1991
          %v2492 = vpack.c.b16 %v1996, %v1992
          %v2493 = vpack.c.b16 %v1997, %v1993
          %v2494 = vpack.c.b16 %v1998, %v1994
          %v2495 = vpack.c.b16 %v2003, %v1999
          %v2496 = vpack.c.b16 %v2004, %v2000
          %v2497 = vpack.c.b16 %v2005, %v2001
          %v2498 = vpack.c.b16 %v2006, %v2002
          %v2499 = vpack.c.b16 %v2011, %v2007
          %v2500 = vpack.c.b16 %v2012, %v2008
          %v2501 = vpack.c.b16 %v2013, %v2009
          %v2502 = vpack.c.b16 %v2014, %v2010
          %v2503 = vpack.c.b16 %v2019, %v2015
          %v2504 = vpack.c.b16 %v2020, %v2016
          %v2505 = vpack.c.b16 %v2021, %v2017
          %v2506 = vpack.c.b16 %v2022, %v2018
          %v2507 = vpack.c.b16 %v2027, %v2023
          %v2508 = vpack.c.b16 %v2028, %v2024
          %v2509 = vpack.c.b16 %v2029, %v2025
          %v2510 = vpack.c.b16 %v2030, %v2026
          %v2511 = vpack.c.b16 %v2035, %v2031
          %v2512 = vpack.c.b16 %v2036, %v2032
          %v2513 = vpack.c.b16 %v2037, %v2033
          %v2514 = vpack.c.b16 %v2038, %v2034
          %v2515 = vpack.c.b16 %v2043, %v2039
          %v2516 = vpack.c.b16 %v2044, %v2040
          %v2517 = vpack.c.b16 %v2045, %v2041
          %v2518 = vpack.c.b16 %v2046, %v2042
          %v2519 = vpack.c.b16 %v2051, %v2047
          %v2520 = vpack.c.b16 %v2052, %v2048
          %v2521 = vpack.c.b16 %v2053, %v2049
          %v2522 = vpack.c.b16 %v2054, %v2050
          %v2523 = vpack.c.b16 %v2059, %v2055
          %v2524 = vpack.c.b16 %v2060, %v2056
          %v2525 = vpack.c.b16 %v2061, %v2057
          %v2526 = vpack.c.b16 %v2062, %v2058
          %v2527 = vpack.c.b16 %v2067, %v2063
          %v2528 = vpack.c.b16 %v2068, %v2064
          %v2529 = vpack.c.b16 %v2069, %v2065
          %v2530 = vpack.c.b16 %v2070, %v2066
          %v2531 = vpack.c.b16 %v2075, %v2071
          %v2532 = vpack.c.b16 %v2076, %v2072
          %v2533 = vpack.c.b16 %v2077, %v2073
          %v2534 = vpack.c.b16 %v2078, %v2074
          %v2535 = vpack.c.b16 %v2083, %v2079
          %v2536 = vpack.c.b16 %v2084, %v2080
          %v2537 = vpack.c.b16 %v2085, %v2081
          %v2538 = vpack.c.b16 %v2086, %v2082
          %v2539 = vpack.c.b16 %v2091, %v2087
          %v2540 = vpack.c.b16 %v2092, %v2088
          %v2541 = vpack.c.b16 %v2093, %v2089
          %v2542 = vpack.c.b16 %v2094, %v2090
          %v2543 = vpack.c.b16 %v2099, %v2095
          %v2544 = vpack.c.b16 %v2100, %v2096
          %v2545 = vpack.c.b16 %v2101, %v2097
          %v2546 = vpack.c.b16 %v2102, %v2098
          %v2547 = vpack.c.b16 %v2107, %v2103
          %v2548 = vpack.c.b16 %v2108, %v2104
          %v2549 = vpack.c.b16 %v2109, %v2105
          %v2550 = vpack.c.b16 %v2110, %v2106
          %v2551 = vpack.c.b16 %v2115, %v2111
          %v2552 = vpack.c.b16 %v2116, %v2112
          %v2553 = vpack.c.b16 %v2117, %v2113
          %v2554 = vpack.c.b16 %v2118, %v2114
          %v2555 = vpack.c.b16 %v2123, %v2119
          %v2556 = vpack.c.b16 %v2124, %v2120
          %v2557 = vpack.c.b16 %v2125, %v2121
          %v2558 = vpack.c.b16 %v2126, %v2122
          %v2559 = vpack.c.b16 %v2131, %v2127
          %v2560 = vpack.c.b16 %v2132, %v2128
          %v2561 = vpack.c.b16 %v2133, %v2129
          %v2562 = vpack.c.b16 %v2134, %v2130
          %v2563 = vpack.c.b16 %v2139, %v2135
          %v2564 = vpack.c.b16 %v2140, %v2136
          %v2565 = vpack.c.b16 %v2141, %v2137
          %v2566 = vpack.c.b16 %v2142, %v2138
          %v2567 = vpack.c.b16 %v2147, %v2143
          %v2568 = vpack.c.b16 %v2148, %v2144
          %v2569 = vpack.c.b16 %v2149, %v2145
          %v2570 = vpack.c.b16 %v2150, %v2146
          %v2571 = vpack.c.b16 %v2155, %v2151
          %v2572 = vpack.c.b16 %v2156, %v2152
          %v2573 = vpack.c.b16 %v2157, %v2153
          %v2574 = vpack.c.b16 %v2158, %v2154
          %v2575 = vpack.c.b16 %v2163, %v2159
          %v2576 = vpack.c.b16 %v2164, %v2160
          %v2577 = vpack.c.b16 %v2165, %v2161
          %v2578 = vpack.c.b16 %v2166, %v2162
          %v2579 = vpack.c.b16 %v2171, %v2167
          %v2580 = vpack.c.b16 %v2172, %v2168
          %v2581 = vpack.c.b16 %v2173, %v2169
          %v2582 = vpack.c.b16 %v2174, %v2170
          %v2583 = vpack.c.b16 %v2179, %v2175
          %v2584 = vpack.c.b16 %v2180, %v2176
          %v2585 = vpack.c.b16 %v2181, %v2177
          %v2586 = vpack.c.b16 %v2182, %v2178
          %v2587 = vpack.c.b16 %v2187, %v2183
          %v2588 = vpack.c.b16 %v2188, %v2184
          %v2589 = vpack.c.b16 %v2189, %v2185
          %v2590 = vpack.c.b16 %v2190, %v2186
          %v2591 = vpack.c.b16 %v2195, %v2191
          %v2592 = vpack.c.b16 %v2196, %v2192
          %v2593 = vpack.c.b16 %v2197, %v2193
          %v2594 = vpack.c.b16 %v2198, %v2194
          %v2595 = vpack.c.b16 %v2203, %v2199
          %v2596 = vpack.c.b16 %v2204, %v2200
          %v2597 = vpack.c.b16 %v2205, %v2201
          %v2598 = vpack.c.b16 %v2206, %v2202
          %v2599 = vpack.c.b16 %v2211, %v2207
          %v2600 = vpack.c.b16 %v2212, %v2208
          %v2601 = vpack.c.b16 %v2213, %v2209
          %v2602 = vpack.c.b16 %v2214, %v2210
          %v2603 = vpack.c.b16 %v2219, %v2215
          %v2604 = vpack.c.b16 %v2220, %v2216
          %v2605 = vpack.c.b16 %v2221, %v2217
          %v2606 = vpack.c.b16 %v2222, %v2218
          %v2607 = vpack.c.b16 %v2227, %v2223
          %v2608 = vpack.c.b16 %v2228, %v2224
          %v2609 = vpack.c.b16 %v2229, %v2225
          %v2610 = vpack.c.b16 %v2230, %v2226
          %v2611 = vpack.c.b16 %v2235, %v2231
          %v2612 = vpack.c.b16 %v2236, %v2232
          %v2613 = vpack.c.b16 %v2237, %v2233
          %v2614 = vpack.c.b16 %v2238, %v2234
          %v2615 = vpack.c.b16 %v2243, %v2239
          %v2616 = vpack.c.b16 %v2244, %v2240
          %v2617 = vpack.c.b16 %v2245, %v2241
          %v2618 = vpack.c.b16 %v2246, %v2242
          %v2619 = vpack.c.b16 %v2251, %v2247
          %v2620 = vpack.c.b16 %v2252, %v2248
          %v2621 = vpack.c.b16 %v2253, %v2249
          %v2622 = vpack.c.b16 %v2254, %v2250
          %v2623 = vpack.c.b16 %v2259, %v2255
          %v2624 = vpack.c.b16 %v2260, %v2256
          %v2625 = vpack.c.b16 %v2261, %v2257
          %v2626 = vpack.c.b16 %v2262, %v2258
          %v2627 = vpack.c.b16 %v2267, %v2263
          %v2628 = vpack.c.b16 %v2268, %v2264
          %v2629 = vpack.c.b16 %v2269, %v2265
          %v2630 = vpack.c.b16 %v2270, %v2266
          %v2631 = vpack.c.b16 %v2275, %v2271
          %v2632 = vpack.c.b16 %v2276, %v2272
          %v2633 = vpack.c.b16 %v2277, %v2273
          %v2634 = vpack.c.b16 %v2278, %v2274
          %v2635 = vpack.c.b16 %v2283, %v2279
          %v2636 = vpack.c.b16 %v2284, %v2280
          %v2637 = vpack.c.b16 %v2285, %v2281
          %v2638 = vpack.c.b16 %v2286, %v2282
          %v2639 = vpack.c.b16 %v2291, %v2287
          %v2640 = vpack.c.b16 %v2292, %v2288
          %v2641 = vpack.c.b16 %v2293, %v2289
          %v2642 = vpack.c.b16 %v2294, %v2290
          %v2643 = vpack.c.b16 %v2299, %v2295
          %v2644 = vpack.c.b16 %v2300, %v2296
          %v2645 = vpack.c.b16 %v2301, %v2297
          %v2646 = vpack.c.b16 %v2302, %v2298
          %v2647 = vpack.c.b16 %v2307, %v2303
          %v2648 = vpack.c.b16 %v2308, %v2304
          %v2649 = vpack.c.b16 %v2309, %v2305
          %v2650 = vpack.c.b16 %v2310, %v2306
          %v2651 = vpack.c.b16 %v2315, %v2311
          %v2652 = vpack.c.b16 %v2316, %v2312
          %v2653 = vpack.c.b16 %v2317, %v2313
          %v2654 = vpack.c.b16 %v2318, %v2314
          %v2655 = vpack.c.b16 %v2323, %v2319
          %v2656 = vpack.c.b16 %v2324, %v2320
          %v2657 = vpack.c.b16 %v2325, %v2321
          %v2658 = vpack.c.b16 %v2326, %v2322
          %v2659 = vpack.c.b16 %v2331, %v2327
          %v2660 = vpack.c.b16 %v2332, %v2328
          %v2661 = vpack.c.b16 %v2333, %v2329
          %v2662 = vpack.c.b16 %v2334, %v2330
          %v2663 = vpack.c.b16 %v2339, %v2335
          %v2664 = vpack.c.b16 %v2340, %v2336
          %v2665 = vpack.c.b16 %v2341, %v2337
          %v2666 = vpack.c.b16 %v2342, %v2338
          %v2667 = vpack.c.b16 %v2347, %v2343
          %v2668 = vpack.c.b16 %v2348, %v2344
          %v2669 = vpack.c.b16 %v2349, %v2345
          %v2670 = vpack.c.b16 %v2350, %v2346
          %v2671 = vpack.c.b16 %v2355, %v2351
          %v2672 = vpack.c.b16 %v2356, %v2352
          %v2673 = vpack.c.b16 %v2357, %v2353
          %v2674 = vpack.c.b16 %v2358, %v2354
          %v2675 = vpack.c.b16 %v2363, %v2359
          %v2676 = vpack.c.b16 %v2364, %v2360
          %v2677 = vpack.c.b16 %v2365, %v2361
          %v2678 = vpack.c.b16 %v2366, %v2362
          %v2679 = vpack.c.b16 %v2371, %v2367
          %v2680 = vpack.c.b16 %v2372, %v2368
          %v2681 = vpack.c.b16 %v2373, %v2369
          %v2682 = vpack.c.b16 %v2374, %v2370
          %v2683 = vpack.c.b16 %v2379, %v2375
          %v2684 = vpack.c.b16 %v2380, %v2376
          %v2685 = vpack.c.b16 %v2381, %v2377
          %v2686 = vpack.c.b16 %v2382, %v2378
          %v2687 = vpack.c.b16 %v2387, %v2383
          %v2688 = vpack.c.b16 %v2388, %v2384
          %v2689 = vpack.c.b16 %v2389, %v2385
          %v2690 = vpack.c.b16 %v2390, %v2386
          %v2691 = vpack.c.b16 %v2395, %v2391
          %v2692 = vpack.c.b16 %v2396, %v2392
          %v2693 = vpack.c.b16 %v2397, %v2393
          %v2694 = vpack.c.b16 %v2398, %v2394
          %v2695 = vpack.c.b16 %v2403, %v2399
          %v2696 = vpack.c.b16 %v2404, %v2400
          %v2697 = vpack.c.b16 %v2405, %v2401
          %v2698 = vpack.c.b16 %v2406, %v2402
          %v2699 = vpack.c.b16 %v2411, %v2407
          %v2700 = vpack.c.b16 %v2412, %v2408
          %v2701 = vpack.c.b16 %v2413, %v2409
          %v2702 = vpack.c.b16 %v2414, %v2410
          %v2703 = vpack.c.b16 %v2419, %v2415
          %v2704 = vpack.c.b16 %v2420, %v2416
          %v2705 = vpack.c.b16 %v2421, %v2417
          %v2706 = vpack.c.b16 %v2422, %v2418
          %v2707 = vpack.c.b16 %v2427, %v2423
          %v2708 = vpack.c.b16 %v2428, %v2424
          %v2709 = vpack.c.b16 %v2429, %v2425
          %v2710 = vpack.c.b16 %v2430, %v2426
          %v2711 = vpack.c.b16 %v2435, %v2431
          %v2712 = vpack.c.b16 %v2436, %v2432
          %v2713 = vpack.c.b16 %v2437, %v2433
          %v2714 = vpack.c.b16 %v2438, %v2434
          %v2715 = vpack.c.b16 %v2443, %v2439
          %v2716 = vpack.c.b16 %v2444, %v2440
          %v2717 = vpack.c.b16 %v2445, %v2441
          %v2718 = vpack.c.b16 %v2446, %v2442
          %v2719 = vpack.c.b16 %v2451, %v2447
          %v2720 = vpack.c.b16 %v2452, %v2448
          %v2721 = vpack.c.b16 %v2453, %v2449
          %v2722 = vpack.c.b16 %v2454, %v2450
          %v2723 = vpack.c.b16 %v2459, %v2455
          %v2724 = vpack.c.b16 %v2460, %v2456
          %v2725 = vpack.c.b16 %v2461, %v2457
          %v2726 = vpack.c.b16 %v2462, %v2458
          %v2727 = vpack.c.b16 %v2467, %v2463
          %v2728 = vpack.c.b16 %v2468, %v2464
          %v2729 = vpack.c.b16 %v2469, %v2465
          %v2730 = vpack.c.b16 %v2470, %v2466
          %v2731 = vpack.c.b16 %v2475, %v2471
          %v2732 = vpack.c.b16 %v2476, %v2472
          %v2733 = vpack.c.b16 %v2477, %v2473
          %v2734 = vpack.c.b16 %v2478, %v2474
          %v2992 = vlaneseq
          %v2993 = vshrl.u32 %v2992, 7
          %v2994 = vsub.s32 0, %v2993
          %v2995 = vrot.slane %v1710, %v2994
          %v2996 = vlaneseq
          %v2997 = vshrl.u32 %v2996, 7
          %v2998 = vsub.s32 1, %v2997
          %v2999 = vrot.slane %v1710, %v2998
          %v3000 = vlaneseq
          %v3001 = vshrl.u32 %v3000, 7
          %v3002 = vsub.s32 2, %v3001
          %v3003 = vrot.slane %v1710, %v3002
          %v3004 = vlaneseq
          %v3005 = vshrl.u32 %v3004, 7
          %v3006 = vsub.s32 3, %v3005
          %v3007 = vrot.slane %v1710, %v3006
          %3012 = vmatprep.subr.bf16.mxu0 %v2480
          %3013 = vmatpush1.bf16.msra.mxu0 %v2479
          %3014 = vmatprep.subr.bf16.mxu0 %v2484
          %3015 = vmatpush1.bf16.msra.mxu0 %v2483
          %3016 = vmatprep.subr.bf16.mxu0 %v2488
          %3017 = vmatpush1.bf16.msra.mxu0 %v2487
          %3018 = vmatprep.subr.bf16.mxu0 %v2492
          %3019 = vmatpush1.bf16.msra.mxu0 %v2491
          %3020 = vmatprep.subr.bf16.mxu0 %v2496
          %3021 = vmatpush1.bf16.msra.mxu0 %v2495
          %3022 = vmatprep.subr.bf16.mxu0 %v2500
          %3023 = vmatpush1.bf16.msra.mxu0 %v2499
          %3024 = vmatprep.subr.bf16.mxu0 %v2504
          %3025 = vmatpush1.bf16.msra.mxu0 %v2503
          %3026 = vmatprep.subr.bf16.mxu0 %v2508
          %3027 = vmatpush1.bf16.msra.mxu0 %v2507
          %3028 = vmatprep.subr.bf16.mxu0 %v2512
          %3029 = vmatpush1.bf16.msra.mxu0 %v2511
          %3030 = vmatprep.subr.bf16.mxu0 %v2516
          %3031 = vmatpush1.bf16.msra.mxu0 %v2515
          %3032 = vmatprep.subr.bf16.mxu0 %v2520
          %3033 = vmatpush1.bf16.msra.mxu0 %v2519
          %3034 = vmatprep.subr.bf16.mxu0 %v2524
          %3035 = vmatpush1.bf16.msra.mxu0 %v2523
          %3036 = vmatprep.subr.bf16.mxu0 %v2528
          %3037 = vmatpush1.bf16.msra.mxu0 %v2527
          %3038 = vmatprep.subr.bf16.mxu0 %v2532
          %3039 = vmatpush1.bf16.msra.mxu0 %v2531
          %3040 = vmatprep.subr.bf16.mxu0 %v2536
          %3041 = vmatpush1.bf16.msra.mxu0 %v2535
          %3042 = vmatprep.subr.bf16.mxu0 %v2540
          %3043 = vmatpush1.bf16.msra.mxu0 %v2539
          %3044 = vmatprep.mubr.bf16.mxu0 %v1447
          %3045 = vmatmul.mubr.bf16.gmra.mrb[0].mxu0 %v1446
          %v3046 = vpop.f32.mrb[0].mxu0
          %v3047 = vadd.f32 %v2995, %v3046
          %v3048 = vpop.f32.mrb[0].mxu0
          %v3049 = vadd.f32 %v2999, %v3048
          %v3050 = vpop.f32.mrb[0].mxu0
          %v3051 = vpop.f32.mrb[0].mxu0
          %3052 = vdwg.mxu0
          %3053 = vmatprep.subr.bf16.mxu0 %v2544
          %3054 = vmatpush1.bf16.msra.mxu0 %v2543
          %3055 = vmatprep.subr.bf16.mxu0 %v2548
          %3056 = vmatpush1.bf16.msra.mxu0 %v2547
          %3057 = vmatprep.subr.bf16.mxu0 %v2552
          %3058 = vmatpush1.bf16.msra.mxu0 %v2551
          %3059 = vmatprep.subr.bf16.mxu0 %v2556
          %3060 = vmatpush1.bf16.msra.mxu0 %v2555
          %3061 = vmatprep.subr.bf16.mxu0 %v2560
          %3062 = vmatpush1.bf16.msra.mxu0 %v2559
          %3063 = vmatprep.subr.bf16.mxu0 %v2564
          %3064 = vmatpush1.bf16.msra.mxu0 %v2563
          %3065 = vmatprep.subr.bf16.mxu0 %v2568
          %3066 = vmatpush1.bf16.msra.mxu0 %v2567
          %3067 = vmatprep.subr.bf16.mxu0 %v2572
          %3068 = vmatpush1.bf16.msra.mxu0 %v2571
          %3069 = vmatprep.subr.bf16.mxu0 %v2576
          %3070 = vmatpush1.bf16.msra.mxu0 %v2575
          %3071 = vmatprep.subr.bf16.mxu0 %v2580
          %3072 = vmatpush1.bf16.msra.mxu0 %v2579
          %3073 = vmatprep.subr.bf16.mxu0 %v2584
          %3074 = vmatpush1.bf16.msra.mxu0 %v2583
          %3075 = vmatprep.subr.bf16.mxu0 %v2588
          %3076 = vmatpush1.bf16.msra.mxu0 %v2587
          %3077 = vmatprep.subr.bf16.mxu0 %v2592
          %3078 = vmatpush1.bf16.msra.mxu0 %v2591
          %3079 = vmatprep.subr.bf16.mxu0 %v2596
          %3080 = vmatpush1.bf16.msra.mxu0 %v2595
          %3081 = vmatprep.subr.bf16.mxu0 %v2600
          %3082 = vmatpush1.bf16.msra.mxu0 %v2599
          %3083 = vmatprep.subr.bf16.mxu0 %v2604
          %3084 = vmatpush1.bf16.msra.mxu0 %v2603
          %3085 = vmatprep.mubr.bf16.mxu0 %v1449
          %3086 = vmatmul.mubr.bf16.gmra.mrb[0].mxu0 %v1448
          %v3087 = vpop.f32.mrb[0].mxu0
          %v3088 = vadd.f32 %v3047, %v3087
          %v3089 = vpop.f32.mrb[0].mxu0
          %v3090 = vadd.f32 %v3049, %v3089
          %v3091 = vpop.f32.mrb[0].mxu0
          %v3092 = vpop.f32.mrb[0].mxu0
          %3093 = vdwg.mxu0
          %3094 = vmatprep.subr.bf16.mxu0 %v2608
          %3095 = vmatpush1.bf16.msra.mxu0 %v2607
          %3096 = vmatprep.subr.bf16.mxu0 %v2612
          %3097 = vmatpush1.bf16.msra.mxu0 %v2611
          %3098 = vmatprep.subr.bf16.mxu0 %v2616
          %3099 = vmatpush1.bf16.msra.mxu0 %v2615
          %3100 = vmatprep.subr.bf16.mxu0 %v2620
          %3101 = vmatpush1.bf16.msra.mxu0 %v2619
          %3102 = vmatprep.subr.bf16.mxu0 %v2624
          %3103 = vmatpush1.bf16.msra.mxu0 %v2623
          %3104 = vmatprep.subr.bf16.mxu0 %v2628
          %3105 = vmatpush1.bf16.msra.mxu0 %v2627
          %3106 = vmatprep.subr.bf16.mxu0 %v2632
          %3107 = vmatpush1.bf16.msra.mxu0 %v2631
          %3108 = vmatprep.subr.bf16.mxu0 %v2636
          %3109 = vmatpush1.bf16.msra.mxu0 %v2635
          %3110 = vmatprep.subr.bf16.mxu0 %v2640
          %3111 = vmatpush1.bf16.msra.mxu0 %v2639
          %3112 = vmatprep.subr.bf16.mxu0 %v2644
          %3113 = vmatpush1.bf16.msra.mxu0 %v2643
          %3114 = vmatprep.subr.bf16.mxu0 %v2648
          %3115 = vmatpush1.bf16.msra.mxu0 %v2647
          %3116 = vmatprep.subr.bf16.mxu0 %v2652
          %3117 = vmatpush1.bf16.msra.mxu0 %v2651
          %3118 = vmatprep.subr.bf16.mxu0 %v2656
          %3119 = vmatpush1.bf16.msra.mxu0 %v2655
          %3120 = vmatprep.subr.bf16.mxu0 %v2660
          %3121 = vmatpush1.bf16.msra.mxu0 %v2659
          %3122 = vmatprep.subr.bf16.mxu0 %v2664
          %3123 = vmatpush1.bf16.msra.mxu0 %v2663
          %3124 = vmatprep.subr.bf16.mxu0 %v2668
          %3125 = vmatpush1.bf16.msra.mxu0 %v2667
          %3126 = vmatprep.mubr.bf16.mxu0 %v1451
          %3127 = vmatmul.mubr.bf16.gmra.mrb[0].mxu0 %v1450
          %v3128 = vpop.f32.mrb[0].mxu0
          %v3129 = vadd.f32 %v3088, %v3128
          %v3130 = vpop.f32.mrb[0].mxu0
          %v3131 = vadd.f32 %v3090, %v3130
          %v3132 = vpop.f32.mrb[0].mxu0
          %v3133 = vpop.f32.mrb[0].mxu0
          %3134 = vdwg.mxu0
          %3135 = vmatprep.subr.bf16.mxu0 %v2672
          %3136 = vmatpush1.bf16.msra.mxu0 %v2671
          %3137 = vmatprep.subr.bf16.mxu0 %v2676
          %3138 = vmatpush1.bf16.msra.mxu0 %v2675
          %3139 = vmatprep.subr.bf16.mxu0 %v2680
          %3140 = vmatpush1.bf16.msra.mxu0 %v2679
          %3141 = vmatprep.subr.bf16.mxu0 %v2684
          %3142 = vmatpush1.bf16.msra.mxu0 %v2683
          %3143 = vmatprep.subr.bf16.mxu0 %v2688
          %3144 = vmatpush1.bf16.msra.mxu0 %v2687
          %3145 = vmatprep.subr.bf16.mxu0 %v2692
          %3146 = vmatpush1.bf16.msra.mxu0 %v2691
          %3147 = vmatprep.subr.bf16.mxu0 %v2696
          %3148 = vmatpush1.bf16.msra.mxu0 %v2695
          %3149 = vmatprep.subr.bf16.mxu0 %v2700
          %3150 = vmatpush1.bf16.msra.mxu0 %v2699
          %3151 = vmatprep.subr.bf16.mxu0 %v2704
          %3152 = vmatpush1.bf16.msra.mxu0 %v2703
          %3153 = vmatprep.subr.bf16.mxu0 %v2708
          %3154 = vmatpush1.bf16.msra.mxu0 %v2707
          %3155 = vmatprep.subr.bf16.mxu0 %v2712
          %3156 = vmatpush1.bf16.msra.mxu0 %v2711
          %3157 = vmatprep.subr.bf16.mxu0 %v2716
          %3158 = vmatpush1.bf16.msra.mxu0 %v2715
          %3159 = vmatprep.subr.bf16.mxu0 %v2720
          %3160 = vmatpush1.bf16.msra.mxu0 %v2719
          %3161 = vmatprep.subr.bf16.mxu0 %v2724
          %3162 = vmatpush1.bf16.msra.mxu0 %v2723
          %3163 = vmatprep.subr.bf16.mxu0 %v2728
          %3164 = vmatpush1.bf16.msra.mxu0 %v2727
          %3165 = vmatprep.subr.bf16.mxu0 %v2732
          %3166 = vmatpush1.bf16.msra.mxu0 %v2731
          %3167 = vmatprep.mubr.bf16.mxu0 %v1453
          %3168 = vmatmul.mubr.bf16.gmra.mrb[0].mxu0 %v1452
          %v3169 = vpop.f32.mrb[0].mxu0
          %v3170 = vadd.f32 %v3129, %v3169
          %v3171 = vpop.f32.mrb[0].mxu0
          %v3172 = vadd.f32 %v3131, %v3171
          %v3173 = vpop.f32.mrb[0].mxu0
          %v3174 = vpop.f32.mrb[0].mxu0
          %3175 = vdwg.mxu0
          %3176 = vmatprep.subr.bf16.mxu0 %v2482
          %3177 = vmatpush1.bf16.msra.mxu0 %v2481
          %3178 = vmatprep.subr.bf16.mxu0 %v2486
          %3179 = vmatpush1.bf16.msra.mxu0 %v2485
          %3180 = vmatprep.subr.bf16.mxu0 %v2490
          %3181 = vmatpush1.bf16.msra.mxu0 %v2489
          %3182 = vmatprep.subr.bf16.mxu0 %v2494
          %3183 = vmatpush1.bf16.msra.mxu0 %v2493
          %3184 = vmatprep.subr.bf16.mxu0 %v2498
          %3185 = vmatpush1.bf16.msra.mxu0 %v2497
          %3186 = vmatprep.subr.bf16.mxu0 %v2502
          %3187 = vmatpush1.bf16.msra.mxu0 %v2501
          %3188 = vmatprep.subr.bf16.mxu0 %v2506
          %3189 = vmatpush1.bf16.msra.mxu0 %v2505
          %3190 = vmatprep.subr.bf16.mxu0 %v2510
          %3191 = vmatpush1.bf16.msra.mxu0 %v2509
          %3192 = vmatprep.subr.bf16.mxu0 %v2514
          %3193 = vmatpush1.bf16.msra.mxu0 %v2513
          %3194 = vmatprep.subr.bf16.mxu0 %v2518
          %3195 = vmatpush1.bf16.msra.mxu0 %v2517
          %3196 = vmatprep.subr.bf16.mxu0 %v2522
          %3197 = vmatpush1.bf16.msra.mxu0 %v2521
          %3198 = vmatprep.subr.bf16.mxu0 %v2526
          %3199 = vmatpush1.bf16.msra.mxu0 %v2525
          %3200 = vmatprep.subr.bf16.mxu0 %v2530
          %3201 = vmatpush1.bf16.msra.mxu0 %v2529
          %3202 = vmatprep.subr.bf16.mxu0 %v2534
          %3203 = vmatpush1.bf16.msra.mxu0 %v2533
          %3204 = vmatprep.subr.bf16.mxu0 %v2538
          %3205 = vmatpush1.bf16.msra.mxu0 %v2537
          %3206 = vmatprep.subr.bf16.mxu0 %v2542
          %3207 = vmatpush1.bf16.msra.mxu0 %v2541
          %3208 = vmatprep.mubr.bf16.mxu0 %v1447
          %3209 = vmatmul.mubr.bf16.gmra.mrb[0].mxu0 %v1446
          %v3210 = vpop.f32.mrb[0].mxu0
          %v3211 = vadd.f32 %v3003, %v3210
          %v3212 = vpop.f32.mrb[0].mxu0
          %v3213 = vadd.f32 %v3007, %v3212
          %v3214 = vpop.f32.mrb[0].mxu0
          %v3215 = vpop.f32.mrb[0].mxu0
          %3216 = vdwg.mxu0
          %3217 = vmatprep.subr.bf16.mxu0 %v2546
          %3218 = vmatpush1.bf16.msra.mxu0 %v2545
          %3219 = vmatprep.subr.bf16.mxu0 %v2550
          %3220 = vmatpush1.bf16.msra.mxu0 %v2549
          %3221 = vmatprep.subr.bf16.mxu0 %v2554
          %3222 = vmatpush1.bf16.msra.mxu0 %v2553
          %3223 = vmatprep.subr.bf16.mxu0 %v2558
          %3224 = vmatpush1.bf16.msra.mxu0 %v2557
          %3225 = vmatprep.subr.bf16.mxu0 %v2562
          %3226 = vmatpush1.bf16.msra.mxu0 %v2561
          %3227 = vmatprep.subr.bf16.mxu0 %v2566
          %3228 = vmatpush1.bf16.msra.mxu0 %v2565
          %3229 = vmatprep.subr.bf16.mxu0 %v2570
          %3230 = vmatpush1.bf16.msra.mxu0 %v2569
          %3231 = vmatprep.subr.bf16.mxu0 %v2574
          %3232 = vmatpush1.bf16.msra.mxu0 %v2573
          %3233 = vmatprep.subr.bf16.mxu0 %v2578
          %3234 = vmatpush1.bf16.msra.mxu0 %v2577
          %3235 = vmatprep.subr.bf16.mxu0 %v2582
          %3236 = vmatpush1.bf16.msra.mxu0 %v2581
          %3237 = vmatprep.subr.bf16.mxu0 %v2586
          %3238 = vmatpush1.bf16.msra.mxu0 %v2585
          %3239 = vmatprep.subr.bf16.mxu0 %v2590
          %3240 = vmatpush1.bf16.msra.mxu0 %v2589
          %3241 = vmatprep.subr.bf16.mxu0 %v2594
          %3242 = vmatpush1.bf16.msra.mxu0 %v2593
          %3243 = vmatprep.subr.bf16.mxu0 %v2598
          %3244 = vmatpush1.bf16.msra.mxu0 %v2597
          %3245 = vmatprep.subr.bf16.mxu0 %v2602
          %3246 = vmatpush1.bf16.msra.mxu0 %v2601
          %3247 = vmatprep.subr.bf16.mxu0 %v2606
          %3248 = vmatpush1.bf16.msra.mxu0 %v2605
          %3249 = vmatprep.mubr.bf16.mxu0 %v1449
          %3250 = vmatmul.mubr.bf16.gmra.mrb[0].mxu0 %v1448
          %v3251 = vpop.f32.mrb[0].mxu0
          %v3252 = vadd.f32 %v3211, %v3251
          %v3253 = vpop.f32.mrb[0].mxu0
          %v3254 = vadd.f32 %v3213, %v3253
          %v3255 = vpop.f32.mrb[0].mxu0
          %v3256 = vpop.f32.mrb[0].mxu0
          %3257 = vdwg.mxu0
          %3258 = vmatprep.subr.bf16.mxu0 %v2610
          %3259 = vmatpush1.bf16.msra.mxu0 %v2609
          %3260 = vmatprep.subr.bf16.mxu0 %v2614
          %3261 = vmatpush1.bf16.msra.mxu0 %v2613
          %3262 = vmatprep.subr.bf16.mxu0 %v2618
          %3263 = vmatpush1.bf16.msra.mxu0 %v2617
          %3264 = vmatprep.subr.bf16.mxu0 %v2622
          %3265 = vmatpush1.bf16.msra.mxu0 %v2621
          %3266 = vmatprep.subr.bf16.mxu0 %v2626
          %3267 = vmatpush1.bf16.msra.mxu0 %v2625
          %3268 = vmatprep.subr.bf16.mxu0 %v2630
          %3269 = vmatpush1.bf16.msra.mxu0 %v2629
          %3270 = vmatprep.subr.bf16.mxu0 %v2634
          %3271 = vmatpush1.bf16.msra.mxu0 %v2633
          %3272 = vmatprep.subr.bf16.mxu0 %v2638
          %3273 = vmatpush1.bf16.msra.mxu0 %v2637
          %3274 = vmatprep.subr.bf16.mxu0 %v2642
          %3275 = vmatpush1.bf16.msra.mxu0 %v2641
          %3276 = vmatprep.subr.bf16.mxu0 %v2646
          %3277 = vmatpush1.bf16.msra.mxu0 %v2645
          %3278 = vmatprep.subr.bf16.mxu0 %v2650
          %3279 = vmatpush1.bf16.msra.mxu0 %v2649
          %3280 = vmatprep.subr.bf16.mxu0 %v2654
          %3281 = vmatpush1.bf16.msra.mxu0 %v2653
          %3282 = vmatprep.subr.bf16.mxu0 %v2658
          %3283 = vmatpush1.bf16.msra.mxu0 %v2657
          %3284 = vmatprep.subr.bf16.mxu0 %v2662
          %3285 = vmatpush1.bf16.msra.mxu0 %v2661
          %3286 = vmatprep.subr.bf16.mxu0 %v2666
          %3287 = vmatpush1.bf16.msra.mxu0 %v2665
          %3288 = vmatprep.subr.bf16.mxu0 %v2670
          %3289 = vmatpush1.bf16.msra.mxu0 %v2669
          %3290 = vmatprep.mubr.bf16.mxu0 %v1451
          %3291 = vmatmul.mubr.bf16.gmra.mrb[0].mxu0 %v1450
          %v3292 = vpop.f32.mrb[0].mxu0
          %v3293 = vadd.f32 %v3252, %v3292
          %v3294 = vpop.f32.mrb[0].mxu0
          %v3295 = vadd.f32 %v3254, %v3294
          %v3296 = vpop.f32.mrb[0].mxu0
          %v3297 = vpop.f32.mrb[0].mxu0
          %3298 = vdwg.mxu0
          %3299 = vmatprep.subr.bf16.mxu0 %v2674
          %3300 = vmatpush1.bf16.msra.mxu0 %v2673
          %3301 = vmatprep.subr.bf16.mxu0 %v2678
          %3302 = vmatpush1.bf16.msra.mxu0 %v2677
          %3303 = vmatprep.subr.bf16.mxu0 %v2682
          %3304 = vmatpush1.bf16.msra.mxu0 %v2681
          %3305 = vmatprep.subr.bf16.mxu0 %v2686
          %3306 = vmatpush1.bf16.msra.mxu0 %v2685
          %3307 = vmatprep.subr.bf16.mxu0 %v2690
          %3308 = vmatpush1.bf16.msra.mxu0 %v2689
          %3309 = vmatprep.subr.bf16.mxu0 %v2694
          %3310 = vmatpush1.bf16.msra.mxu0 %v2693
          %3311 = vmatprep.subr.bf16.mxu0 %v2698
          %3312 = vmatpush1.bf16.msra.mxu0 %v2697
          %3313 = vmatprep.subr.bf16.mxu0 %v2702
          %3314 = vmatpush1.bf16.msra.mxu0 %v2701
          %3315 = vmatprep.subr.bf16.mxu0 %v2706
          %3316 = vmatpush1.bf16.msra.mxu0 %v2705
          %3317 = vmatprep.subr.bf16.mxu0 %v2710
          %3318 = vmatpush1.bf16.msra.mxu0 %v2709
          %3319 = vmatprep.subr.bf16.mxu0 %v2714
          %3320 = vmatpush1.bf16.msra.mxu0 %v2713
          %3321 = vmatprep.subr.bf16.mxu0 %v2718
          %3322 = vmatpush1.bf16.msra.mxu0 %v2717
          %3323 = vmatprep.subr.bf16.mxu0 %v2722
          %3324 = vmatpush1.bf16.msra.mxu0 %v2721
          %3325 = vmatprep.subr.bf16.mxu0 %v2726
          %3326 = vmatpush1.bf16.msra.mxu0 %v2725
          %3327 = vmatprep.subr.bf16.mxu0 %v2730
          %3328 = vmatpush1.bf16.msra.mxu0 %v2729
          %3329 = vmatprep.subr.bf16.mxu0 %v2734
          %3330 = vmatpush1.bf16.msra.mxu0 %v2733
          %3331 = vmatprep.mubr.bf16.mxu0 %v1453
          %3332 = vmatmul.mubr.bf16.gmra.mrb[0].mxu0 %v1452
          %v3333 = vpop.f32.mrb[0].mxu0
          %v3334 = vadd.f32 %v3293, %v3333
          %v3335 = vpop.f32.mrb[0].mxu0
          %v3336 = vadd.f32 %v3295, %v3335
          %v3337 = vpop.f32.mrb[0].mxu0
          %v3338 = vpop.f32.mrb[0].mxu0
          %3339 = vdwg.mxu0
          %v3340 = vmax.f32 %v3170, 0.0
          %v3341 = vmax.f32 %v3172, 0.0
          %v3342 = vmax.f32 %v3334, 0.0
          %v3343 = vmax.f32 %v3336, 0.0
          %v3344 = vpack.c.bf16 %v3340, %v3340
          %v3345 = vpack.c.bf16 %v3341, %v3341
          %v3346 = vpack.c.bf16 %v3342, %v3342
          %v3347 = vpack.c.bf16 %v3343, %v3343
          %v3348 = vld [vmem:[#allocation8] sm:$0xff]
          %v3349 = vld [vmem:[#allocation8 + $0x8] sm:$0xff]
          %v3350 = vld [vmem:[#allocation8 + $0x10] sm:$0xff]
          %v3351 = vld [vmem:[#allocation8 + $0x18] sm:$0xff]
          %v3352 = vld [vmem:[#allocation8 + $0x20] sm:$0xff]
          %v3353 = vld [vmem:[#allocation8 + $0x28] sm:$0xff]
          %v3354 = vld [vmem:[#allocation8 + $0x30] sm:$0xff]
          %v3355 = vld [vmem:[#allocation8 + $0x38] sm:$0xff]
          %v3356 = vld [vmem:[#allocation8 + $0x40] sm:$0xff]
          %v3357 = vld [vmem:[#allocation8 + $0x48] sm:$0xff]
          %v3358 = vld [vmem:[#allocation8 + $0x50] sm:$0xff]
          %v3359 = vld [vmem:[#allocation8 + $0x58] sm:$0xff]
          %v3360 = vld [vmem:[#allocation8 + $0x60] sm:$0xff]
          %v3361 = vld [vmem:[#allocation8 + $0x68] sm:$0xff]
          %v3362 = vld [vmem:[#allocation8 + $0x70] sm:$0xff]
          %v3363 = vld [vmem:[#allocation8 + $0x78] sm:$0xff]
          %v3364 = vld [vmem:[#allocation8 + $0x80] sm:$0xff]
          %v3365 = vld [vmem:[#allocation8 + $0x88] sm:$0xff]
          %v3366 = vld [vmem:[#allocation8 + $0x90] sm:$0xff]
          %v3367 = vld [vmem:[#allocation8 + $0x98] sm:$0xff]
          %v3368 = vld [vmem:[#allocation8 + $0xa0] sm:$0xff]
          %v3369 = vld [vmem:[#allocation8 + $0xa8] sm:$0xff]
          %v3370 = vld [vmem:[#allocation8 + $0xb0] sm:$0xff]
          %v3371 = vld [vmem:[#allocation8 + $0xb8] sm:$0xff]
          %v3372 = vld [vmem:[#allocation8 + $0xc0] sm:$0xff]
          %v3373 = vld [vmem:[#allocation8 + $0xc8] sm:$0xff]
          %v3374 = vld [vmem:[#allocation8 + $0xd0] sm:$0xff]
          %v3375 = vld [vmem:[#allocation8 + $0xd8] sm:$0xff]
          %v3376 = vld [vmem:[#allocation8 + $0xe0] sm:$0xff]
          %v3377 = vld [vmem:[#allocation8 + $0xe8] sm:$0xff]
          %v3378 = vld [vmem:[#allocation8 + $0xf0] sm:$0xff]
          %v3379 = vld [vmem:[#allocation8 + $0xf8] sm:$0xff]
          %v3380 = vld [vmem:[#allocation8 + $0x100] sm:$0xff]
          %v3381 = vld [vmem:[#allocation8 + $0x108] sm:$0xff]
          %v3382 = vld [vmem:[#allocation8 + $0x110] sm:$0xff]
          %v3383 = vld [vmem:[#allocation8 + $0x118] sm:$0xff]
          %v3384 = vld [vmem:[#allocation8 + $0x120] sm:$0xff]
          %v3385 = vld [vmem:[#allocation8 + $0x128] sm:$0xff]
          %v3386 = vld [vmem:[#allocation8 + $0x130] sm:$0xff]
          %v3387 = vld [vmem:[#allocation8 + $0x138] sm:$0xff]
          %v3388 = vld [vmem:[#allocation8 + $0x140] sm:$0xff]
          %v3389 = vld [vmem:[#allocation8 + $0x148] sm:$0xff]
          %v3390 = vld [vmem:[#allocation8 + $0x150] sm:$0xff]
          %v3391 = vld [vmem:[#allocation8 + $0x158] sm:$0xff]
          %v3392 = vld [vmem:[#allocation8 + $0x160] sm:$0xff]
          %v3393 = vld [vmem:[#allocation8 + $0x168] sm:$0xff]
          %v3394 = vld [vmem:[#allocation8 + $0x170] sm:$0xff]
          %v3395 = vld [vmem:[#allocation8 + $0x178] sm:$0xff]
          %v3396 = vld [vmem:[#allocation8 + $0x180] sm:$0xff]
          %v3397 = vld [vmem:[#allocation8 + $0x188] sm:$0xff]
          %v3398 = vld [vmem:[#allocation8 + $0x190] sm:$0xff]
          %v3399 = vld [vmem:[#allocation8 + $0x198] sm:$0xff]
          %v3400 = vld [vmem:[#allocation8 + $0x1a0] sm:$0xff]
          %v3401 = vld [vmem:[#allocation8 + $0x1a8] sm:$0xff]
          %v3402 = vld [vmem:[#allocation8 + $0x1b0] sm:$0xff]
          %v3403 = vld [vmem:[#allocation8 + $0x1b8] sm:$0xff]
          %v3404 = vld [vmem:[#allocation8 + $0x1c0] sm:$0xff]
          %v3405 = vld [vmem:[#allocation8 + $0x1c8] sm:$0xff]
          %v3406 = vld [vmem:[#allocation8 + $0x1d0] sm:$0xff]
          %v3407 = vld [vmem:[#allocation8 + $0x1d8] sm:$0xff]
          %v3408 = vld [vmem:[#allocation8 + $0x1e0] sm:$0xff]
          %v3409 = vld [vmem:[#allocation8 + $0x1e8] sm:$0xff]
          %v3410 = vld [vmem:[#allocation8 + $0x1f0] sm:$0xff]
          %v3411 = vld [vmem:[#allocation8 + $0x1f8] sm:$0xff]
          %v3412 = vld [vmem:[%s10] sm:$0x3]
          %v3477 = vunpack.c.l.b16 %v3348
          %v3478 = vunpack.c.h.b16 %v3348
          %v3479 = vunpack.c.l.b16 %v3349
          %v3480 = vunpack.c.h.b16 %v3349
          %v3481 = vunpack.c.l.b16 %v3350
          %v3482 = vunpack.c.h.b16 %v3350
          %v3483 = vunpack.c.l.b16 %v3351
          %v3484 = vunpack.c.h.b16 %v3351
          %v3485 = vunpack.c.l.b16 %v3352
          %v3486 = vunpack.c.h.b16 %v3352
          %v3487 = vunpack.c.l.b16 %v3353
          %v3488 = vunpack.c.h.b16 %v3353
          %v3489 = vunpack.c.l.b16 %v3354
          %v3490 = vunpack.c.h.b16 %v3354
          %v3491 = vunpack.c.l.b16 %v3355
          %v3492 = vunpack.c.h.b16 %v3355
          %v3493 = vunpack.c.l.b16 %v3356
          %v3494 = vunpack.c.h.b16 %v3356
          %v3495 = vunpack.c.l.b16 %v3357
          %v3496 = vunpack.c.h.b16 %v3357
          %v3497 = vunpack.c.l.b16 %v3358
          %v3498 = vunpack.c.h.b16 %v3358
          %v3499 = vunpack.c.l.b16 %v3359
          %v3500 = vunpack.c.h.b16 %v3359
          %v3501 = vunpack.c.l.b16 %v3360
          %v3502 = vunpack.c.h.b16 %v3360
          %v3503 = vunpack.c.l.b16 %v3361
          %v3504 = vunpack.c.h.b16 %v3361
          %v3505 = vunpack.c.l.b16 %v3362
          %v3506 = vunpack.c.h.b16 %v3362
          %v3507 = vunpack.c.l.b16 %v3363
          %v3508 = vunpack.c.h.b16 %v3363
          %v3509 = vunpack.c.l.b16 %v3364
          %v3510 = vunpack.c.h.b16 %v3364
          %v3511 = vunpack.c.l.b16 %v3365
          %v3512 = vunpack.c.h.b16 %v3365
          %v3513 = vunpack.c.l.b16 %v3366
          %v3514 = vunpack.c.h.b16 %v3366
          %v3515 = vunpack.c.l.b16 %v3367
          %v3516 = vunpack.c.h.b16 %v3367
          %v3517 = vunpack.c.l.b16 %v3368
          %v3518 = vunpack.c.h.b16 %v3368
          %v3519 = vunpack.c.l.b16 %v3369
          %v3520 = vunpack.c.h.b16 %v3369
          %v3521 = vunpack.c.l.b16 %v3370
          %v3522 = vunpack.c.h.b16 %v3370
          %v3523 = vunpack.c.l.b16 %v3371
          %v3524 = vunpack.c.h.b16 %v3371
          %v3525 = vunpack.c.l.b16 %v3372
          %v3526 = vunpack.c.h.b16 %v3372
          %v3527 = vunpack.c.l.b16 %v3373
          %v3528 = vunpack.c.h.b16 %v3373
          %v3529 = vunpack.c.l.b16 %v3374
          %v3530 = vunpack.c.h.b16 %v3374
          %v3531 = vunpack.c.l.b16 %v3375
          %v3532 = vunpack.c.h.b16 %v3375
          %v3533 = vunpack.c.l.b16 %v3376
          %v3534 = vunpack.c.h.b16 %v3376
          %v3535 = vunpack.c.l.b16 %v3377
          %v3536 = vunpack.c.h.b16 %v3377
          %v3537 = vunpack.c.l.b16 %v3378
          %v3538 = vunpack.c.h.b16 %v3378
          %v3539 = vunpack.c.l.b16 %v3379
          %v3540 = vunpack.c.h.b16 %v3379
          %v3541 = vunpack.c.l.b16 %v3380
          %v3542 = vunpack.c.h.b16 %v3380
          %v3543 = vunpack.c.l.b16 %v3381
          %v3544 = vunpack.c.h.b16 %v3381
          %v3545 = vunpack.c.l.b16 %v3382
          %v3546 = vunpack.c.h.b16 %v3382
          %v3547 = vunpack.c.l.b16 %v3383
          %v3548 = vunpack.c.h.b16 %v3383
          %v3549 = vunpack.c.l.b16 %v3384
          %v3550 = vunpack.c.h.b16 %v3384
          %v3551 = vunpack.c.l.b16 %v3385
          %v3552 = vunpack.c.h.b16 %v3385
          %v3553 = vunpack.c.l.b16 %v3386
          %v3554 = vunpack.c.h.b16 %v3386
          %v3555 = vunpack.c.l.b16 %v3387
          %v3556 = vunpack.c.h.b16 %v3387
          %v3557 = vunpack.c.l.b16 %v3388
          %v3558 = vunpack.c.h.b16 %v3388
          %v3559 = vunpack.c.l.b16 %v3389
          %v3560 = vunpack.c.h.b16 %v3389
          %v3561 = vunpack.c.l.b16 %v3390
          %v3562 = vunpack.c.h.b16 %v3390
          %v3563 = vunpack.c.l.b16 %v3391
          %v3564 = vunpack.c.h.b16 %v3391
          %v3565 = vunpack.c.l.b16 %v3392
          %v3566 = vunpack.c.h.b16 %v3392
          %v3567 = vunpack.c.l.b16 %v3393
          %v3568 = vunpack.c.h.b16 %v3393
          %v3569 = vunpack.c.l.b16 %v3394
          %v3570 = vunpack.c.h.b16 %v3394
          %v3571 = vunpack.c.l.b16 %v3395
          %v3572 = vunpack.c.h.b16 %v3395
          %v3573 = vunpack.c.l.b16 %v3396
          %v3574 = vunpack.c.h.b16 %v3396
          %v3575 = vunpack.c.l.b16 %v3397
          %v3576 = vunpack.c.h.b16 %v3397
          %v3577 = vunpack.c.l.b16 %v3398
          %v3578 = vunpack.c.h.b16 %v3398
          %v3579 = vunpack.c.l.b16 %v3399
          %v3580 = vunpack.c.h.b16 %v3399
          %v3581 = vunpack.c.l.b16 %v3400
          %v3582 = vunpack.c.h.b16 %v3400
          %v3583 = vunpack.c.l.b16 %v3401
          %v3584 = vunpack.c.h.b16 %v3401
          %v3585 = vunpack.c.l.b16 %v3402
          %v3586 = vunpack.c.h.b16 %v3402
          %v3587 = vunpack.c.l.b16 %v3403
          %v3588 = vunpack.c.h.b16 %v3403
          %v3589 = vunpack.c.l.b16 %v3404
          %v3590 = vunpack.c.h.b16 %v3404
          %v3591 = vunpack.c.l.b16 %v3405
          %v3592 = vunpack.c.h.b16 %v3405
          %v3593 = vunpack.c.l.b16 %v3406
          %v3594 = vunpack.c.h.b16 %v3406
          %v3595 = vunpack.c.l.b16 %v3407
          %v3596 = vunpack.c.h.b16 %v3407
          %v3597 = vunpack.c.l.b16 %v3408
          %v3598 = vunpack.c.h.b16 %v3408
          %v3599 = vunpack.c.l.b16 %v3409
          %v3600 = vunpack.c.h.b16 %v3409
          %v3601 = vunpack.c.l.b16 %v3410
          %v3602 = vunpack.c.h.b16 %v3410
          %v3603 = vunpack.c.l.b16 %v3411
          %v3604 = vunpack.c.h.b16 %v3411
          %v3605 = vpack.c.b16 %v3479, %v3477
          %v3606 = vpack.c.b16 %v3480, %v3478
          %v3607 = vpack.c.b16 %v3483, %v3481
          %v3608 = vpack.c.b16 %v3484, %v3482
          %v3609 = vpack.c.b16 %v3487, %v3485
          %v3610 = vpack.c.b16 %v3488, %v3486
          %v3611 = vpack.c.b16 %v3491, %v3489
          %v3612 = vpack.c.b16 %v3492, %v3490
          %v3613 = vpack.c.b16 %v3495, %v3493
          %v3614 = vpack.c.b16 %v3496, %v3494
          %v3615 = vpack.c.b16 %v3499, %v3497
          %v3616 = vpack.c.b16 %v3500, %v3498
          %v3617 = vpack.c.b16 %v3503, %v3501
          %v3618 = vpack.c.b16 %v3504, %v3502
          %v3619 = vpack.c.b16 %v3507, %v3505
          %v3620 = vpack.c.b16 %v3508, %v3506
          %v3621 = vpack.c.b16 %v3511, %v3509
          %v3622 = vpack.c.b16 %v3512, %v3510
          %v3623 = vpack.c.b16 %v3515, %v3513
          %v3624 = vpack.c.b16 %v3516, %v3514
          %v3625 = vpack.c.b16 %v3519, %v3517
          %v3626 = vpack.c.b16 %v3520, %v3518
          %v3627 = vpack.c.b16 %v3523, %v3521
          %v3628 = vpack.c.b16 %v3524, %v3522
          %v3629 = vpack.c.b16 %v3527, %v3525
          %v3630 = vpack.c.b16 %v3528, %v3526
          %v3631 = vpack.c.b16 %v3531, %v3529
          %v3632 = vpack.c.b16 %v3532, %v3530
          %v3633 = vpack.c.b16 %v3535, %v3533
          %v3634 = vpack.c.b16 %v3536, %v3534
          %v3635 = vpack.c.b16 %v3539, %v3537
          %v3636 = vpack.c.b16 %v3540, %v3538
          %v3637 = vpack.c.b16 %v3543, %v3541
          %v3638 = vpack.c.b16 %v3544, %v3542
          %v3639 = vpack.c.b16 %v3547, %v3545
          %v3640 = vpack.c.b16 %v3548, %v3546
          %v3641 = vpack.c.b16 %v3551, %v3549
          %v3642 = vpack.c.b16 %v3552, %v3550
          %v3643 = vpack.c.b16 %v3555, %v3553
          %v3644 = vpack.c.b16 %v3556, %v3554
          %v3645 = vpack.c.b16 %v3559, %v3557
          %v3646 = vpack.c.b16 %v3560, %v3558
          %v3647 = vpack.c.b16 %v3563, %v3561
          %v3648 = vpack.c.b16 %v3564, %v3562
          %v3649 = vpack.c.b16 %v3567, %v3565
          %v3650 = vpack.c.b16 %v3568, %v3566
          %v3651 = vpack.c.b16 %v3571, %v3569
          %v3652 = vpack.c.b16 %v3572, %v3570
          %v3653 = vpack.c.b16 %v3575, %v3573
          %v3654 = vpack.c.b16 %v3576, %v3574
          %v3655 = vpack.c.b16 %v3579, %v3577
          %v3656 = vpack.c.b16 %v3580, %v3578
          %v3657 = vpack.c.b16 %v3583, %v3581
          %v3658 = vpack.c.b16 %v3584, %v3582
          %v3659 = vpack.c.b16 %v3587, %v3585
          %v3660 = vpack.c.b16 %v3588, %v3586
          %v3661 = vpack.c.b16 %v3591, %v3589
          %v3662 = vpack.c.b16 %v3592, %v3590
          %v3663 = vpack.c.b16 %v3595, %v3593
          %v3664 = vpack.c.b16 %v3596, %v3594
          %v3665 = vpack.c.b16 %v3599, %v3597
          %v3666 = vpack.c.b16 %v3600, %v3598
          %v3667 = vpack.c.b16 %v3603, %v3601
          %v3668 = vpack.c.b16 %v3604, %v3602
          %v3734 = vlaneseq
          %v3735 = vshrl.u32 %v3734, 7
          %v3736 = vsub.s32 0, %v3735
          %v3737 = vrot.slane %v3412, %v3736
          %v3738 = vlaneseq
          %v3739 = vshrl.u32 %v3738, 7
          %v3740 = vsub.s32 1, %v3739
          %v3741 = vrot.slane %v3412, %v3740
          %3744 = vmatprep.subr.bf16.mxu0 %v3606
          %3745 = vmatpush1.bf16.msra.mxu0 %v3605
          %3746 = vmatprep.subr.bf16.mxu0 %v3608
          %3747 = vmatpush1.bf16.msra.mxu0 %v3607
          %3748 = vmatprep.subr.bf16.mxu0 %v3610
          %3749 = vmatpush1.bf16.msra.mxu0 %v3609
          %3750 = vmatprep.subr.bf16.mxu0 %v3612
          %3751 = vmatpush1.bf16.msra.mxu0 %v3611
          %3752 = vmatprep.subr.bf16.mxu0 %v3614
          %3753 = vmatpush1.bf16.msra.mxu0 %v3613
          %3754 = vmatprep.subr.bf16.mxu0 %v3616
          %3755 = vmatpush1.bf16.msra.mxu0 %v3615
          %3756 = vmatprep.subr.bf16.mxu0 %v3618
          %3757 = vmatpush1.bf16.msra.mxu0 %v3617
          %3758 = vmatprep.subr.bf16.mxu0 %v3620
          %3759 = vmatpush1.bf16.msra.mxu0 %v3619
          %3760 = vmatprep.subr.bf16.mxu0 %v3622
          %3761 = vmatpush1.bf16.msra.mxu0 %v3621
          %3762 = vmatprep.subr.bf16.mxu0 %v3624
          %3763 = vmatpush1.bf16.msra.mxu0 %v3623
          %3764 = vmatprep.subr.bf16.mxu0 %v3626
          %3765 = vmatpush1.bf16.msra.mxu0 %v3625
          %3766 = vmatprep.subr.bf16.mxu0 %v3628
          %3767 = vmatpush1.bf16.msra.mxu0 %v3627
          %3768 = vmatprep.subr.bf16.mxu0 %v3630
          %3769 = vmatpush1.bf16.msra.mxu0 %v3629
          %3770 = vmatprep.subr.bf16.mxu0 %v3632
          %3771 = vmatpush1.bf16.msra.mxu0 %v3631
          %3772 = vmatprep.subr.bf16.mxu0 %v3634
          %3773 = vmatpush1.bf16.msra.mxu0 %v3633
          %3774 = vmatprep.subr.bf16.mxu0 %v3636
          %3775 = vmatpush1.bf16.msra.mxu0 %v3635
          %3776 = vmatprep.mubr.bf16.mxu0 %v3345
          %3777 = vmatmul.mubr.bf16.gmra.mrb[0].mxu0 %v3344
          %v3778 = vpop.f32.mrb[0].mxu0
          %v3779 = vadd.f32 %v3737, %v3778
          %v3780 = vpop.f32.mrb[0].mxu0
          %v3781 = vadd.f32 %v3741, %v3780
          %v3782 = vpop.f32.mrb[0].mxu0
          %v3783 = vpop.f32.mrb[0].mxu0
          %3784 = vdwg.mxu0
          %3785 = vmatprep.subr.bf16.mxu0 %v3638
          %3786 = vmatpush1.bf16.msra.mxu0 %v3637
          %3787 = vmatprep.subr.bf16.mxu0 %v3640
          %3788 = vmatpush1.bf16.msra.mxu0 %v3639
          %3789 = vmatprep.subr.bf16.mxu0 %v3642
          %3790 = vmatpush1.bf16.msra.mxu0 %v3641
          %3791 = vmatprep.subr.bf16.mxu0 %v3644
          %3792 = vmatpush1.bf16.msra.mxu0 %v3643
          %3793 = vmatprep.subr.bf16.mxu0 %v3646
          %3794 = vmatpush1.bf16.msra.mxu0 %v3645
          %3795 = vmatprep.subr.bf16.mxu0 %v3648
          %3796 = vmatpush1.bf16.msra.mxu0 %v3647
          %3797 = vmatprep.subr.bf16.mxu0 %v3650
          %3798 = vmatpush1.bf16.msra.mxu0 %v3649
          %3799 = vmatprep.subr.bf16.mxu0 %v3652
          %3800 = vmatpush1.bf16.msra.mxu0 %v3651
          %3801 = vmatprep.subr.bf16.mxu0 %v3654
          %3802 = vmatpush1.bf16.msra.mxu0 %v3653
          %3803 = vmatprep.subr.bf16.mxu0 %v3656
          %3804 = vmatpush1.bf16.msra.mxu0 %v3655
          %3805 = vmatprep.subr.bf16.mxu0 %v3658
          %3806 = vmatpush1.bf16.msra.mxu0 %v3657
          %3807 = vmatprep.subr.bf16.mxu0 %v3660
          %3808 = vmatpush1.bf16.msra.mxu0 %v3659
          %3809 = vmatprep.subr.bf16.mxu0 %v3662
          %3810 = vmatpush1.bf16.msra.mxu0 %v3661
          %3811 = vmatprep.subr.bf16.mxu0 %v3664
          %3812 = vmatpush1.bf16.msra.mxu0 %v3663
          %3813 = vmatprep.subr.bf16.mxu0 %v3666
          %3814 = vmatpush1.bf16.msra.mxu0 %v3665
          %3815 = vmatprep.subr.bf16.mxu0 %v3668
          %3816 = vmatpush1.bf16.msra.mxu0 %v3667
          %3817 = vmatprep.mubr.bf16.mxu0 %v3347
          %3818 = vmatmul.mubr.bf16.gmra.mrb[0].mxu0 %v3346
          %v3819 = vpop.f32.mrb[0].mxu0
          %v3820 = vadd.f32 %v3779, %v3819
          %v3821 = vpop.f32.mrb[0].mxu0
          %v3822 = vadd.f32 %v3781, %v3821
          %v3823 = vpop.f32.mrb[0].mxu0
          %v3824 = vpop.f32.mrb[0].mxu0
          %3825 = vdwg.mxu0
          %v3826 = vmax.f32 %v3820, 0.0
          %v3827 = vmax.f32 %v3822, 0.0
          %v3828 = vpack.c.bf16 %v3826, %v3826
          %v3829 = vpack.c.bf16 %v3827, %v3827
          %v3830 = vld [vmem:[%s11] sm:$0xf]
          %v3831 = vld [vmem:[%s11 + $0x4] sm:$0xf]
          %v3832 = vld [vmem:[%s11 + $0x8] sm:$0xf]
          %v3833 = vld [vmem:[%s11 + $0xc] sm:$0xf]
          %v3834 = vld [vmem:[%s11 + $0x10] sm:$0xf]
          %v3835 = vld [vmem:[%s11 + $0x14] sm:$0xf]
          %v3836 = vld [vmem:[%s11 + $0x18] sm:$0xf]
          %v3837 = vld [vmem:[%s11 + $0x1c] sm:$0xf]
          %v3838 = vld [vmem:[%s11 + $0x20] sm:$0xf]
          %v3839 = vld [vmem:[%s11 + $0x24] sm:$0xf]
          %v3840 = vld [vmem:[%s11 + $0x28] sm:$0xf]
          %v3841 = vld [vmem:[%s11 + $0x2c] sm:$0xf]
          %v3842 = vld [vmem:[%s11 + $0x30] sm:$0xf]
          %v3843 = vld [vmem:[%s11 + $0x34] sm:$0xf]
          %v3844 = vld [vmem:[%s11 + $0x38] sm:$0xf]
          %v3845 = vld [vmem:[%s11 + $0x3c] sm:$0xf]
          %v3846 = vld [vmem:[%s11 + $0x40] sm:$0xf]
          %v3847 = vld [vmem:[%s11 + $0x44] sm:$0xf]
          %v3848 = vld [vmem:[%s11 + $0x48] sm:$0xf]
          %v3849 = vld [vmem:[%s11 + $0x4c] sm:$0xf]
          %v3850 = vld [vmem:[%s11 + $0x50] sm:$0xf]
          %v3851 = vld [vmem:[%s11 + $0x54] sm:$0xf]
          %v3852 = vld [vmem:[%s11 + $0x58] sm:$0xf]
          %v3853 = vld [vmem:[%s11 + $0x5c] sm:$0xf]
          %v3854 = vld [vmem:[%s11 + $0x60] sm:$0xf]
          %v3855 = vld [vmem:[%s11 + $0x64] sm:$0xf]
          %v3856 = vld [vmem:[%s11 + $0x68] sm:$0xf]
          %v3857 = vld [vmem:[%s11 + $0x6c] sm:$0xf]
          %v3858 = vld [vmem:[%s11 + $0x70] sm:$0xf]
          %v3859 = vld [vmem:[%s11 + $0x74] sm:$0xf]
          %v3860 = vld [vmem:[%s11 + $0x78] sm:$0xf]
          %v3861 = vld [vmem:[%s11 + $0x7c] sm:$0xf]
          %v3862 = vld [vmem:[%s12] sm:$0x1]
          %v3895 = vunpack.c.l.b16 %v3830
          %v3896 = vunpack.c.l.b16 %v3831
          %v3897 = vunpack.c.l.b16 %v3832
          %v3898 = vunpack.c.l.b16 %v3833
          %v3899 = vunpack.c.l.b16 %v3834
          %v3900 = vunpack.c.l.b16 %v3835
          %v3901 = vunpack.c.l.b16 %v3836
          %v3902 = vunpack.c.l.b16 %v3837
          %v3903 = vunpack.c.l.b16 %v3838
          %v3904 = vunpack.c.l.b16 %v3839
          %v3905 = vunpack.c.l.b16 %v3840
          %v3906 = vunpack.c.l.b16 %v3841
          %v3907 = vunpack.c.l.b16 %v3842
          %v3908 = vunpack.c.l.b16 %v3843
          %v3909 = vunpack.c.l.b16 %v3844
          %v3910 = vunpack.c.l.b16 %v3845
          %v3911 = vunpack.c.l.b16 %v3846
          %v3912 = vunpack.c.l.b16 %v3847
          %v3913 = vunpack.c.l.b16 %v3848
          %v3914 = vunpack.c.l.b16 %v3849
          %v3915 = vunpack.c.l.b16 %v3850
          %v3916 = vunpack.c.l.b16 %v3851
          %v3917 = vunpack.c.l.b16 %v3852
          %v3918 = vunpack.c.l.b16 %v3853
          %v3919 = vunpack.c.l.b16 %v3854
          %v3920 = vunpack.c.l.b16 %v3855
          %v3921 = vunpack.c.l.b16 %v3856
          %v3922 = vunpack.c.l.b16 %v3857
          %v3923 = vunpack.c.l.b16 %v3858
          %v3924 = vunpack.c.l.b16 %v3859
          %v3925 = vunpack.c.l.b16 %v3860
          %v3926 = vunpack.c.l.b16 %v3861
          %v3927 = vpack.c.b16 %v3896, %v3895
          %v3928 = vpack.c.b16 %v3898, %v3897
          %v3929 = vpack.c.b16 %v3900, %v3899
          %v3930 = vpack.c.b16 %v3902, %v3901
          %v3931 = vpack.c.b16 %v3904, %v3903
          %v3932 = vpack.c.b16 %v3906, %v3905
          %v3933 = vpack.c.b16 %v3908, %v3907
          %v3934 = vpack.c.b16 %v3910, %v3909
          %v3935 = vpack.c.b16 %v3912, %v3911
          %v3936 = vpack.c.b16 %v3914, %v3913
          %v3937 = vpack.c.b16 %v3916, %v3915
          %v3938 = vpack.c.b16 %v3918, %v3917
          %v3939 = vpack.c.b16 %v3920, %v3919
          %v3940 = vpack.c.b16 %v3922, %v3921
          %v3941 = vpack.c.b16 %v3924, %v3923
          %v3942 = vpack.c.b16 %v3926, %v3925
          %3959 = vmatprep.subr.bf16.mxu0 0
          %3960 = vmatpush1.bf16.msra.mxu0 %v3927
          %3961 = vmatprep.subr.bf16.mxu0 0
          %3962 = vmatpush1.bf16.msra.mxu0 %v3928
          %3963 = vmatprep.subr.bf16.mxu0 0
          %3964 = vmatpush1.bf16.msra.mxu0 %v3929
          %3965 = vmatprep.subr.bf16.mxu0 0
          %3966 = vmatpush1.bf16.msra.mxu0 %v3930
          %3967 = vmatprep.subr.bf16.mxu0 0
          %3968 = vmatpush1.bf16.msra.mxu0 %v3931
          %3969 = vmatprep.subr.bf16.mxu0 0
          %3970 = vmatpush1.bf16.msra.mxu0 %v3932
          %3971 = vmatprep.subr.bf16.mxu0 0
          %3972 = vmatpush1.bf16.msra.mxu0 %v3933
          %3973 = vmatprep.subr.bf16.mxu0 0
          %3974 = vmatpush1.bf16.msra.mxu0 %v3934
          %3975 = vmatprep.subr.bf16.mxu0 0
          %3976 = vmatpush1.bf16.msra.mxu0 %v3935
          %3977 = vmatprep.subr.bf16.mxu0 0
          %3978 = vmatpush1.bf16.msra.mxu0 %v3936
          %3979 = vmatprep.subr.bf16.mxu0 0
          %3980 = vmatpush1.bf16.msra.mxu0 %v3937
          %3981 = vmatprep.subr.bf16.mxu0 0
          %3982 = vmatpush1.bf16.msra.mxu0 %v3938
          %3983 = vmatprep.subr.bf16.mxu0 0
          %3984 = vmatpush1.bf16.msra.mxu0 %v3939
          %3985 = vmatprep.subr.bf16.mxu0 0
          %3986 = vmatpush1.bf16.msra.mxu0 %v3940
          %3987 = vmatprep.subr.bf16.mxu0 0
          %3988 = vmatpush1.bf16.msra.mxu0 %v3941
          %3989 = vmatprep.subr.bf16.mxu0 0
          %3990 = vmatpush1.bf16.msra.mxu0 %v3942
          %3991 = vmatprep.mubr.bf16.mxu0 %v3829
          %3992 = vmatmul.mubr.bf16.gmra.mrb[0].mxu0 %v3828
          %v3993 = vpop.f32.mrb[0].mxu0
          %v3994 = vadd.f32 %v3862, %v3993
          %v3995 = vpop.f32.mrb[0].mxu0
          %v3996 = vpop.f32.mrb[0].mxu0
          %v3997 = vpop.f32.mrb[0].mxu0
          %3998 = vdwg.mxu0
          %vm3999 = vcmask 122880
          %4000 = vst.msk [vmem:[%s494] sm:$0x1] %vm3999, %v3994
        $region92: #{tpu_custom_call.1} parent=71 // pred_fallthru
          _
        %s4001 = sand.u32 %s329, 1
        %s4002 = scalar_lea.sflag [#allocation5], %s4001
        %s4003 = sand.u32 %s329, 1
        %s4004 = scalar_lea.vmem [#allocation9], %s4003
        // Predicated region
        $region93: #{tpu_custom_call.1} parent=71 // pred_check
          %p4005 = pneg %p339
        $region94: #{tpu_custom_call.1} parent=71 // pred_check_branch
          %4007 = sbr.rel (%p4005) target = $region96
        $region95: #{tpu_custom_call.1} parent=71 // pred_region
          %s4009 = ssub.s32 16, 16
          %4010 = vsyncadd %s4002, %s4009
          %s4011 = smul.addr %s33, 16
          %s4012 = scalar_lea.hbm %s13, %s4011
          %s4014 = sshll.u32 %s4004, 4
          %s4015 = int_to_ptr.vmem [resolvable:$true] %s4014
          %4017 = dma.vmem_to_hbm [thread:$0]  %s4015, 16, %s4012, %s4002
        $region96: #{tpu_custom_call.1} parent=71 // pred_fallthru
          _
      $region72: #{tpu_custom_call.1} parent=5 // pred_fallthru
        _
      %p4018 = scmp.le.s32.totalorder 2, %s24
      // Predicated region
      $region97: #{tpu_custom_call.1} parent=5 // pred_check
        %p4019 = pneg %p4018
      $region98: #{tpu_custom_call.1} parent=5 // pred_check_branch
        %4021 = sbr.rel (%p4019) target = $region100
      $region99: #{tpu_custom_call.1} parent=5 // pred_region
        %s4022 = ssub.s32 %s24, 2
        // Predicated region
        $region101: #{tpu_custom_call.1} parent=99 // pred_check
          %p4023 = pneg %p345
        $region102: #{tpu_custom_call.1} parent=99 // pred_check_branch
          %4025 = sbr.rel (%p4023) target = $region104
        $region103: #{tpu_custom_call.1} parent=99 // pred_region
          %s4026 = sand.u32 %s330, 1
          %s4027 = scalar_lea.sflag [#allocation5], %s4026
          %s4028 = sand.u32 %s330, 1
          %s4029 = scalar_lea.vmem [#allocation9], %s4028
          %4030 = dma.done %s4027, 16
        $region104: #{tpu_custom_call.1} parent=99 // pred_fallthru
          _
      $region100: #{tpu_custom_call.1} parent=5 // pred_fallthru
        _
    $region6: #{tpu_custom_call.1} parent=1 // loop_footer
      %s28 = sadd.s32 1, %s24
    $region7: #{tpu_custom_call.1} parent=1 // loop_footer_branch
      %23 = sbr.rel target = $region3
    $region8: #{tpu_custom_call.1} parent=1 // loop_exit
      _
    %4031 = vsyncpa [#allocation4], 1
    %s4032 = scalar_lea.sflag [#allocation4], 1
    %4033 = vsyncpa %s4032, 1
    %4034 = vsyncpa [#allocation7], 1
    %4035 = vsyncpa [#allocation5], 1
    %s4036 = scalar_lea.sflag [#allocation5], 1
    %4037 = vsyncpa %s4036, 1

</llo_original>
